<compile_context>
chip_gen: v7x
topology: tpu7x:2x2x1
jax: 0.10.0
libtpu: 0.0.40
codegen_flags: <defaults>
</compile_context>

<pallas_src>
import functools

import jax
import jax.numpy as jnp
from jax.experimental import pallas as pl
from jax.experimental.pallas import tpu as pltpu

N_SERIES = 8  # truncated power-series terms for logdet(I + M); pairing below is for 8


# ---------------------------------------------------------------------------
# in-kernel helpers
# ---------------------------------------------------------------------------
def _bmm(x, y):
    """Batched (TB, S, S) @ (TB, S, S) matmul on the MXU, f32 accumulation."""
    return jnp.einsum('bij,bjk->bik', x, y, preferred_element_type=jnp.float32)


def _pair(x, y):
    """Per-sample Frobenius inner product <X_b, Y_b> -> (TB, 1).

    With Y = (M^b)^T and X = M^a this equals tr(M^{a+b}) (trace pairing)."""
    return jnp.sum(jnp.sum(x * y, axis=2), axis=1, keepdims=True)


# ---------------------------------------------------------------------------
# kernel: H-space power series, trace pairing (5 batched matmuls / step)
# ---------------------------------------------------------------------------
def _kernel(x_ref, w1t_ref, b1_ref, w2t_ref, b2_ref, a_ref, at_ref, da_ref,
            out_ref, *, steps, input_dim):
    assert N_SERIES == 8, "trace-pairing plan below is laid out for 8 terms"

    x = x_ref[...].astype(jnp.float32)                        # (TB, D)
    tb = x.shape[0]

    logdet = jnp.zeros((tb, 1), jnp.float32)
    # Static unroll: steps is small and all per-step weights are VMEM-resident.
    for i in range(steps):
        w1t = w1t_ref[i]                                      # (D, H)
        b1 = b1_ref[i]                                        # (1, H)
        w2t = w2t_ref[i]                                      # (H, D)
        b2 = b2_ref[i]                                        # (1, D)
        a = a_ref[i]                                          # (H, H)  = W1 @ W2
        at = at_ref[i]                                        # (H, H)  = (W1 @ W2)^T
        da = da_ref[i]                                        # (1, H)  = diag(W1 @ W2)

        pre = jnp.dot(x, w1t, preferred_element_type=jnp.float32) + b1   # (TB, H)
        e = jnp.exp(jnp.minimum(pre, 0.0))                    # guarded, single EUP pass
        act = jnp.where(pre > 0.0, pre, e - 1.0)              # ELU
        s = jnp.where(pre > 0.0, 1.0, e)                      # ELU'
        g = jnp.dot(act, w2t, preferred_element_type=jnp.float32) + b2   # (TB, D)

        # Series matrix M = diag(s) A (tr(J^k) == tr(M^k) by cyclicity);
        # M and M^T are pure elementwise builds from the hoisted A / A^T.
        t1 = jnp.sum(s * da, axis=1, keepdims=True)           # tr(M) from hoisted diag
        m = s[:, :, None] * a[None, :, :]                     # (TB, H, H)
        mt = s[:, None, :] * at[None, :, :]                   # (TB, H, H) = M^T

        p2 = _bmm(m, m)                                       # M^2
        p3 = _bmm(p2, m)                                      # M^3
        p4 = _bmm(p2, p2)                                      # M^4
        q2 = _bmm(mt, mt)                                     # (M^T)^2
        q4 = _bmm(q2, q2)                                     # (M^T)^4

        # logdet(I + M) ~= tr(M) - tr(M^2)/2 + tr(M^3)/3 - ... - tr(M^8)/8
        ld = (t1
              - _pair(m, mt) * (1.0 / 2.0)                    # tr(M^2)
              + _pair(p2, mt) * (1.0 / 3.0)                   # tr(M^3)
              - _pair(p3, mt) * (1.0 / 4.0)                   # tr(M^4)
              + _pair(p4, mt) * (1.0 / 5.0)                   # tr(M^5)
              - _pair(p4, q2) * (1.0 / 6.0)                   # tr(M^6)
              + _pair(p3, q4) * (1.0 / 7.0)                   # tr(M^7)
              - _pair(p4, q4) * (1.0 / 8.0))                  # tr(M^8)

        logdet = logdet + ld
        x = x + g                                             # residual update

    prior_logp = -0.5 * jnp.sum(x * x + jnp.log(2.0 * jnp.pi),
                                axis=1, keepdims=True)        # GaussianDiag(0, 0)
    out_ref[...] = (logdet + prior_logp) * (1.0 / float(input_dim))


# ---------------------------------------------------------------------------
# wrapper
# ---------------------------------------------------------------------------
def _vmem_limit_bytes():
    """Per-generation scoped-VMEM limit (conservative v7x-safe fallback)."""
    cap = 64 * 1024 * 1024
    try:
        cap = int(pltpu.get_tpu_info().vmem_capacity_bytes)
    except Exception:
        pass
    return int(min(cap * 7 // 10, 96 * 1024 * 1024))


def _pick_batch_tile(d, h, steps, vmem_limit):
    """Batch tile sized against the actual VMEM budget minus resident weights."""
    # Resident weights (w1t, w2t, A, A^T, b1, b2, diagA), x2 for double-buffering.
    weight_bytes = 2 * 4 * steps * (2 * d * h + 2 * h * h + 2 * h + d + h)
    # Per-batch-row live f32: ~9 (H,H) series mats (M, M^T, P2..P4, Q2, Q4 +
    # temporaries), activations, x/g, double-buffered x block + output.
    per_row = 4 * (9 * h * h + 6 * h + 5 * d + 4)
    budget = vmem_limit - weight_bytes - (4 << 20)            # 4 MiB compiler slack
    tb = max(8, min(1024, budget // max(per_row, 1)))
    return int((tb // 8) * 8)


def invresnet1d_logp(x, w1, b1, w2, b2, *, block_b=None):
    """Normalized log-likelihood of InvResNet1d.forward. x: (B, ...); -> (B,)."""
    b = x.shape[0]
    xf = x.reshape(b, -1).astype(jnp.float32)                 # K1 = x.view(b, -1)
    d = xf.shape[1]
    steps, h, _ = w1.shape

    # Batch-independent preprocessing, hoisted into plain XLA outside the kernel.
    w1f = w1.astype(jnp.float32)                              # (steps, H, D)
    w2f = w2.astype(jnp.float32)                              # (steps, D, H)
    w1t = jnp.transpose(w1f, (0, 2, 1))                       # (steps, D, H)
    w2t = jnp.transpose(w2f, (0, 2, 1))                       # (steps, H, D)
    a = jnp.einsum('shd,sdk->shk', w1f, w2f)                  # (steps, H, H) = W1 @ W2
    at = jnp.transpose(a, (0, 2, 1))                          # (steps, H, H)
    da = jnp.diagonal(a, axis1=1, axis2=2).reshape(steps, 1, h)
    b1f = b1.astype(jnp.float32).reshape(steps, 1, h)
    b2f = b2.astype(jnp.float32).reshape(steps, 1, d)

    vmem_limit = _vmem_limit_bytes()
    if block_b is not None:
        tb = int(block_b)
    else:
        tb = _pick_batch_tile(d, h, steps, vmem_limit)
        if b > 8:
            # Ensure >= 2 grid tiles for splittable batches (v7x megacore + pipelining).
            tb = min(tb, ((b + 1) // 2 + 7) // 8 * 8)
    if b <= tb:
        tb = b
        b_pad = b
    else:
        tb = max(8, (tb // 8) * 8)
        b_pad = tb * pl.cdiv(b, tb)
    if b_pad > b:
        xf = jnp.concatenate([xf, jnp.zeros((b_pad - b, d), jnp.float32)], axis=0)

    grid = (b_pad // tb,)
    const3 = lambda i: (0, 0, 0)                              # resident weight blocks
    kernel = functools.partial(_kernel, steps=steps, input_dim=d)

    out = pl.pallas_call(
        kernel,
        out_shape=jax.ShapeDtypeStruct((b_pad, 1), jnp.float32),
        grid=grid,
        in_specs=[
            pl.BlockSpec((tb, d), lambda i: (i, 0)),          # x tile
            pl.BlockSpec((steps, d, h), const3),              # w1t
            pl.BlockSpec((steps, 1, h), const3),              # b1
            pl.BlockSpec((steps, h, d), const3),              # w2t
            pl.BlockSpec((steps, 1, d), const3),              # b2
            pl.BlockSpec((steps, h, h), const3),              # A
            pl.BlockSpec((steps, h, h), const3),              # A^T
            pl.BlockSpec((steps, 1, h), const3),              # diag(A)
        ],
        out_specs=pl.BlockSpec((tb, 1), lambda i: (i, 0)),
        compiler_params=pltpu.CompilerParams(
            dimension_semantics=("parallel",),
            vmem_limit_bytes=int(vmem_limit)),
    )(xf, w1t, b1f, w2t, b2f, a, at, da)
    return out[:b, 0]


# ---------------------------------------------------------------------------
# pure-JAX reference (naive masked power chain, for validation)
# ---------------------------------------------------------------------------
def invresnet1d_logp_ref(x, w1, b1, w2, b2):
    b = x.shape[0]
    K = x.reshape(b, -1).astype(jnp.float32)
    d = K.shape[1]
    logdet = jnp.zeros((b,), jnp.float32)
    for i in range(w1.shape[0]):
        pre = K @ w1[i].T + b1[i]
        e = jnp.exp(pre)
        hval = jnp.where(pre > 0, pre, e - 1.0)
        s = jnp.where(pre > 0, 1.0, e)
        g = hval @ w2[i].T + b2[i]
        A = w1[i] @ w2[i]
        M = s[:, :, None] * A[None, :, :]
        P = M
        ld = jnp.trace(P, axis1=1, axis2=2)
        for k in range(2, N_SERIES + 1):
            P = jnp.einsum('bij,bjk->bik', P, M)
            ld = ld + ((-1.0) ** (k + 1)) * jnp.trace(P, axis1=1, axis2=2) / k
        logdet = logdet + ld
        K = K + g
    prior = -0.5 * jnp.sum(K * K + jnp.log(2.0 * jnp.pi), axis=1)
    return (logdet + prior) / d


def init_params(key, input_depth, interm_channels, steps):
    """Deterministic i-ResNet parameters with spectral-norm scaling (< 1 Lipschitz)."""
    ks = jax.random.split(key, 4 * steps)
    w1_l, b1_l, w2_l, b2_l = [], [], [], []
    for i in range(steps):
        w1 = jax.random.normal(ks[4 * i + 0], (interm_channels, input_depth), jnp.float32)
        w2 = jax.random.normal(ks[4 * i + 1], (input_depth, interm_channels), jnp.float32)
        w1 = w1 * (0.7 / jnp.linalg.norm(w1, ord=2))
        w2 = w2 * (0.7 / jnp.linalg.norm(w2, ord=2))
        b1 = 0.01 * jax.random.normal(ks[4 * i + 2], (1, interm_channels), jnp.float32)
        b2 = 0.01 * jax.random.normal(ks[4 * i + 3], (1, input_depth), jnp.float32)
        w1_l.append(w1); b1_l.append(b1); w2_l.append(w2); b2_l.append(b2)
    return (jnp.stack(w1_l), jnp.stack(b1_l), jnp.stack(w2_l), jnp.stack(b2_l))


if __name__ == "__main__":
    key = jax.random.PRNGKey(0)
    k_x, k_p, k_x2, k_p2 = jax.random.split(key, 4)

    # Primary config: D = 4*4 = 16, H = 32, steps = 3, batch = 2.
    batch, spatial = 2, 4
    input_depth = spatial * spatial
    interm_channels = 32
    steps = 3

    x = jax.random.normal(k_x, (batch, spatial, spatial), jnp.float32)
    w1, b1, w2, b2 = init_params(k_p, input_depth, interm_channels, steps)

    out = jax.block_until_ready(invresnet1d_logp(x, w1, b1, w2, b2))
    ref = invresnet1d_logp_ref(x, w1, b1, w2, b2)
    assert out.shape == (batch,)
    assert jnp.allclose(out, ref, rtol=1e-4, atol=1e-4), (out, ref)

    # Multi-tile grid + batch-padding path (forced tiny batch tile: grid of 3).
    xg = jax.random.normal(k_x2, (20, spatial, spatial), jnp.float32)
    outg = jax.block_until_ready(invresnet1d_logp(xg, w1, b1, w2, b2, block_b=8))
    refg = invresnet1d_logp_ref(xg, w1, b1, w2, b2)
    assert outg.shape == (20,)
    assert jnp.allclose(outg, refg, rtol=1e-4, atol=1e-4), (outg, refg)

    # Small-H config (H = 8 < D = 16) through the same unified H-space kernel.
    w1s, b1s, w2s, b2s = init_params(k_p2, input_depth, 8, 2)
    outh = jax.block_until_ready(invresnet1d_logp(x, w1s, b1s, w2s, b2s))
    refh = invresnet1d_logp_ref(x, w1s, b1s, w2s, b2s)
    assert jnp.allclose(outh, refh, rtol=1e-4, atol=1e-4), (outh, refh)

    print("KERNEL_OK")
</pallas_src>

<mosaic_0001>
module attributes {stable_mosaic.version = 11 : i64} {
  func.func @_kernel(%arg0: i32, %arg1: memref<2x16xf32, #tpu.memory_space<vmem>>, %arg2: memref<3x16x32xf32, #tpu.memory_space<vmem>>, %arg3: memref<3x1x32xf32, #tpu.memory_space<vmem>>, %arg4: memref<3x32x16xf32, #tpu.memory_space<vmem>>, %arg5: memref<3x1x16xf32, #tpu.memory_space<vmem>>, %arg6: memref<3x32x32xf32, #tpu.memory_space<vmem>>, %arg7: memref<3x32x32xf32, #tpu.memory_space<vmem>>, %arg8: memref<3x1x32xf32, #tpu.memory_space<vmem>>, %arg9: memref<2x1xf32, #tpu.memory_space<vmem>>) attributes {dimension_semantics = [#tpu.dimension_semantics<parallel>], iteration_bounds = array<i64: 1>, scalar_prefetch = 0 : i64, scratch_operands = 0 : i64, tpu.core_type = #tpu.core_type<tc>, window_params = [{transform_indices = @transform_0, window_bounds = array<i64: 2, 16>}, {pipeline_mode = #tpu.pipeline_mode<synchronous>, transform_indices = @transform_1, window_bounds = array<i64: 3, 16, 32>}, {pipeline_mode = #tpu.pipeline_mode<synchronous>, transform_indices = @transform_2, window_bounds = array<i64: 3, 1, 32>}, {pipeline_mode = #tpu.pipeline_mode<synchronous>, transform_indices = @transform_3, window_bounds = array<i64: 3, 32, 16>}, {pipeline_mode = #tpu.pipeline_mode<synchronous>, transform_indices = @transform_4, window_bounds = array<i64: 3, 1, 16>}, {pipeline_mode = #tpu.pipeline_mode<synchronous>, transform_indices = @transform_5, window_bounds = array<i64: 3, 32, 32>}, {pipeline_mode = #tpu.pipeline_mode<synchronous>, transform_indices = @transform_6, window_bounds = array<i64: 3, 32, 32>}, {pipeline_mode = #tpu.pipeline_mode<synchronous>, transform_indices = @transform_7, window_bounds = array<i64: 3, 1, 32>}, {transform_indices = @transform_8, window_bounds = array<i64: 2, 1>}]} {
    %c0 = arith.constant 0 : index
    %c0_0 = arith.constant 0 : index
    %0 = vector.load %arg1[%c0, %c0_0] : memref<2x16xf32, #tpu.memory_space<vmem>>, vector<2x16xf32>
    %cst = arith.constant 0.000000e+00 : f32
    %1 = vector.broadcast %cst : f32 to vector<2x1xf32>
    %c0_1 = arith.constant 0 : index
    %c0_2 = arith.constant 0 : index
    %c0_3 = arith.constant 0 : index
    %2 = vector.load %arg2[%c0_1, %c0_2, %c0_3] : memref<3x16x32xf32, #tpu.memory_space<vmem>>, vector<1x16x32xf32>
    %3 = vector.shape_cast %2 : vector<1x16x32xf32> to vector<16x32xf32>
    %c0_4 = arith.constant 0 : index
    %c0_5 = arith.constant 0 : index
    %c0_6 = arith.constant 0 : index
    %4 = vector.load %arg3[%c0_4, %c0_5, %c0_6] : memref<3x1x32xf32, #tpu.memory_space<vmem>>, vector<1x1x32xf32>
    %5 = vector.shape_cast %4 : vector<1x1x32xf32> to vector<1x32xf32>
    %c0_7 = arith.constant 0 : index
    %c0_8 = arith.constant 0 : index
    %c0_9 = arith.constant 0 : index
    %6 = vector.load %arg4[%c0_7, %c0_8, %c0_9] : memref<3x32x16xf32, #tpu.memory_space<vmem>>, vector<1x32x16xf32>
    %7 = vector.shape_cast %6 : vector<1x32x16xf32> to vector<32x16xf32>
    %c0_10 = arith.constant 0 : index
    %c0_11 = arith.constant 0 : index
    %c0_12 = arith.constant 0 : index
    %8 = vector.load %arg5[%c0_10, %c0_11, %c0_12] : memref<3x1x16xf32, #tpu.memory_space<vmem>>, vector<1x1x16xf32>
    %9 = vector.shape_cast %8 : vector<1x1x16xf32> to vector<1x16xf32>
    %c0_13 = arith.constant 0 : index
    %c0_14 = arith.constant 0 : index
    %c0_15 = arith.constant 0 : index
    %10 = vector.load %arg6[%c0_13, %c0_14, %c0_15] : memref<3x32x32xf32, #tpu.memory_space<vmem>>, vector<1x32x32xf32>
    %11 = vector.shape_cast %10 : vector<1x32x32xf32> to vector<32x32xf32>
    %c0_16 = arith.constant 0 : index
    %c0_17 = arith.constant 0 : index
    %c0_18 = arith.constant 0 : index
    %12 = vector.load %arg7[%c0_16, %c0_17, %c0_18] : memref<3x32x32xf32, #tpu.memory_space<vmem>>, vector<1x32x32xf32>
    %13 = vector.shape_cast %12 : vector<1x32x32xf32> to vector<32x32xf32>
    %c0_19 = arith.constant 0 : index
    %c0_20 = arith.constant 0 : index
    %c0_21 = arith.constant 0 : index
    %14 = vector.load %arg8[%c0_19, %c0_20, %c0_21] : memref<3x1x32xf32, #tpu.memory_space<vmem>>, vector<1x1x32xf32>
    %15 = vector.shape_cast %14 : vector<1x1x32xf32> to vector<1x32xf32>
    %cst_22 = arith.constant dense<0.000000e+00> : vector<2x32xf32>
    %16 = tpu.matmul %0, %3, %cst_22 {dimension_numbers = #tpu.dot_dimension_numbers<[1], [0], [0], [1], [0, 0, 1, 1], [], []>} : vector<2x16xf32>, vector<16x32xf32>, vector<2x32xf32> -> vector<2x32xf32>
    %17 = vector.broadcast %5 : vector<1x32xf32> to vector<2x32xf32>
    %18 = arith.addf %16, %17 : vector<2x32xf32>
    %cst_23 = arith.constant 0.000000e+00 : f32
    %19 = vector.broadcast %cst_23 : f32 to vector<2x32xf32>
    %20 = arith.minimumf %18, %19 : vector<2x32xf32>
    %21 = math.exp %20 : vector<2x32xf32>
    %cst_24 = arith.constant 0.000000e+00 : f32
    %22 = vector.broadcast %cst_24 : f32 to vector<2x32xf32>
    %23 = arith.cmpf ogt, %18, %22 : vector<2x32xf32>
    %cst_25 = arith.constant 1.000000e+00 : f32
    %24 = vector.broadcast %cst_25 : f32 to vector<2x32xf32>
    %25 = arith.subf %21, %24 : vector<2x32xf32>
    %26 = arith.select %23, %18, %25 : vector<2x32xi1>, vector<2x32xf32>
    %cst_26 = arith.constant 0.000000e+00 : f32
    %27 = vector.broadcast %cst_26 : f32 to vector<2x32xf32>
    %28 = arith.cmpf ogt, %18, %27 : vector<2x32xf32>
    %cst_27 = arith.constant 1.000000e+00 : f32
    %29 = vector.broadcast %cst_27 : f32 to vector<2x32xf32>
    %30 = arith.select %28, %29, %21 : vector<2x32xi1>, vector<2x32xf32>
    %cst_28 = arith.constant dense<0.000000e+00> : vector<2x16xf32>
    %31 = tpu.matmul %26, %7, %cst_28 {dimension_numbers = #tpu.dot_dimension_numbers<[1], [0], [0], [1], [0, 0, 1, 1], [], []>} : vector<2x32xf32>, vector<32x16xf32>, vector<2x16xf32> -> vector<2x16xf32>
    %32 = vector.broadcast %9 : vector<1x16xf32> to vector<2x16xf32>
    %33 = arith.addf %31, %32 : vector<2x16xf32>
    %34 = vector.broadcast %15 : vector<1x32xf32> to vector<2x32xf32>
    %35 = arith.mulf %30, %34 : vector<2x32xf32>
    %cst_29 = arith.constant dense<0.000000e+00> : vector<2xf32>
    %36 = vector.multi_reduction <add>, %35, %cst_29 [1] : vector<2x32xf32> to vector<2xf32>
    %37 = vector.shape_cast %36 : vector<2xf32> to vector<2x1xf32>
    %38 = vector.shape_cast %30 : vector<2x32xf32> to vector<2x32x1xf32>
    %39 = vector.shape_cast %11 : vector<32x32xf32> to vector<1x32x32xf32>
    %40 = vector.broadcast %38 : vector<2x32x1xf32> to vector<2x32x32xf32>
    %41 = vector.broadcast %39 : vector<1x32x32xf32> to vector<2x32x32xf32>
    %42 = arith.mulf %40, %41 : vector<2x32x32xf32>
    %43 = vector.shape_cast %30 : vector<2x32xf32> to vector<2x1x32xf32>
    %44 = vector.shape_cast %13 : vector<32x32xf32> to vector<1x32x32xf32>
    %45 = vector.broadcast %43 : vector<2x1x32xf32> to vector<2x32x32xf32>
    %46 = vector.broadcast %44 : vector<1x32x32xf32> to vector<2x32x32xf32>
    %47 = arith.mulf %45, %46 : vector<2x32x32xf32>
    "tpu.trace_start"() <{level = 10 : i32, message = "bij,bjk->bik"}> : () -> ()
    %cst_30 = arith.constant dense<0.000000e+00> : vector<2x32x32xf32>
    %48 = tpu.matmul %42, %42, %cst_30 {dimension_numbers = #tpu.dot_dimension_numbers<[2], [1], [1], [2], [0, 0, 0, 1, 1, 2], [0], [0]>} : vector<2x32x32xf32>, vector<2x32x32xf32>, vector<2x32x32xf32> -> vector<2x32x32xf32>
    %cst_31 = arith.constant dense<0.000000e+00> : vector<2x32x32xf32>
    %49 = tpu.matmul %48, %42, %cst_31 {dimension_numbers = #tpu.dot_dimension_numbers<[2], [1], [1], [2], [0, 0, 0, 1, 1, 2], [0], [0]>} : vector<2x32x32xf32>, vector<2x32x32xf32>, vector<2x32x32xf32> -> vector<2x32x32xf32>
    %cst_32 = arith.constant dense<0.000000e+00> : vector<2x32x32xf32>
    %50 = tpu.matmul %48, %48, %cst_32 {dimension_numbers = #tpu.dot_dimension_numbers<[2], [1], [1], [2], [0, 0, 0, 1, 1, 2], [0], [0]>} : vector<2x32x32xf32>, vector<2x32x32xf32>, vector<2x32x32xf32> -> vector<2x32x32xf32>
    %cst_33 = arith.constant dense<0.000000e+00> : vector<2x32x32xf32>
    %51 = tpu.matmul %47, %47, %cst_33 {dimension_numbers = #tpu.dot_dimension_numbers<[2], [1], [1], [2], [0, 0, 0, 1, 1, 2], [0], [0]>} : vector<2x32x32xf32>, vector<2x32x32xf32>, vector<2x32x32xf32> -> vector<2x32x32xf32>
    %cst_34 = arith.constant dense<0.000000e+00> : vector<2x32x32xf32>
    %52 = tpu.matmul %51, %51, %cst_34 {dimension_numbers = #tpu.dot_dimension_numbers<[2], [1], [1], [2], [0, 0, 0, 1, 1, 2], [0], [0]>} : vector<2x32x32xf32>, vector<2x32x32xf32>, vector<2x32x32xf32> -> vector<2x32x32xf32>
    "tpu.trace_stop"() : () -> ()
    %53 = arith.mulf %42, %47 : vector<2x32x32xf32>
    %cst_35 = arith.constant dense<0.000000e+00> : vector<2x32xf32>
    %54 = vector.multi_reduction <add>, %53, %cst_35 [2] : vector<2x32x32xf32> to vector<2x32xf32>
    %cst_36 = arith.constant dense<0.000000e+00> : vector<2xf32>
    %55 = vector.multi_reduction <add>, %54, %cst_36 [1] : vector<2x32xf32> to vector<2xf32>
    %56 = vector.shape_cast %55 : vector<2xf32> to vector<2x1xf32>
    %cst_37 = arith.constant 5.000000e-01 : f32
    %57 = vector.broadcast %cst_37 : f32 to vector<2x1xf32>
    %58 = arith.mulf %56, %57 : vector<2x1xf32>
    %59 = arith.subf %37, %58 : vector<2x1xf32>
    %60 = arith.mulf %48, %47 : vector<2x32x32xf32>
    %cst_38 = arith.constant dense<0.000000e+00> : vector<2x32xf32>
    %61 = vector.multi_reduction <add>, %60, %cst_38 [2] : vector<2x32x32xf32> to vector<2x32xf32>
    %cst_39 = arith.constant dense<0.000000e+00> : vector<2xf32>
    %62 = vector.multi_reduction <add>, %61, %cst_39 [1] : vector<2x32xf32> to vector<2xf32>
    %63 = vector.shape_cast %62 : vector<2xf32> to vector<2x1xf32>
    %cst_40 = arith.constant 0.333333343 : f32
    %64 = vector.broadcast %cst_40 : f32 to vector<2x1xf32>
    %65 = arith.mulf %63, %64 : vector<2x1xf32>
    %66 = arith.addf %59, %65 : vector<2x1xf32>
    %67 = arith.mulf %49, %47 : vector<2x32x32xf32>
    %cst_41 = arith.constant dense<0.000000e+00> : vector<2x32xf32>
    %68 = vector.multi_reduction <add>, %67, %cst_41 [2] : vector<2x32x32xf32> to vector<2x32xf32>
    %cst_42 = arith.constant dense<0.000000e+00> : vector<2xf32>
    %69 = vector.multi_reduction <add>, %68, %cst_42 [1] : vector<2x32xf32> to vector<2xf32>
    %70 = vector.shape_cast %69 : vector<2xf32> to vector<2x1xf32>
    %cst_43 = arith.constant 2.500000e-01 : f32
    %71 = vector.broadcast %cst_43 : f32 to vector<2x1xf32>
    %72 = arith.mulf %70, %71 : vector<2x1xf32>
    %73 = arith.subf %66, %72 : vector<2x1xf32>
    %74 = arith.mulf %50, %47 : vector<2x32x32xf32>
    %cst_44 = arith.constant dense<0.000000e+00> : vector<2x32xf32>
    %75 = vector.multi_reduction <add>, %74, %cst_44 [2] : vector<2x32x32xf32> to vector<2x32xf32>
    %cst_45 = arith.constant dense<0.000000e+00> : vector<2xf32>
    %76 = vector.multi_reduction <add>, %75, %cst_45 [1] : vector<2x32xf32> to vector<2xf32>
    %77 = vector.shape_cast %76 : vector<2xf32> to vector<2x1xf32>
    %cst_46 = arith.constant 2.000000e-01 : f32
    %78 = vector.broadcast %cst_46 : f32 to vector<2x1xf32>
    %79 = arith.mulf %77, %78 : vector<2x1xf32>
    %80 = arith.addf %73, %79 : vector<2x1xf32>
    %81 = arith.mulf %50, %51 : vector<2x32x32xf32>
    %cst_47 = arith.constant dense<0.000000e+00> : vector<2x32xf32>
    %82 = vector.multi_reduction <add>, %81, %cst_47 [2] : vector<2x32x32xf32> to vector<2x32xf32>
    %cst_48 = arith.constant dense<0.000000e+00> : vector<2xf32>
    %83 = vector.multi_reduction <add>, %82, %cst_48 [1] : vector<2x32xf32> to vector<2xf32>
    %84 = vector.shape_cast %83 : vector<2xf32> to vector<2x1xf32>
    %cst_49 = arith.constant 0.166666672 : f32
    %85 = vector.broadcast %cst_49 : f32 to vector<2x1xf32>
    %86 = arith.mulf %84, %85 : vector<2x1xf32>
    %87 = arith.subf %80, %86 : vector<2x1xf32>
    %88 = arith.mulf %49, %52 : vector<2x32x32xf32>
    %cst_50 = arith.constant dense<0.000000e+00> : vector<2x32xf32>
    %89 = vector.multi_reduction <add>, %88, %cst_50 [2] : vector<2x32x32xf32> to vector<2x32xf32>
    %cst_51 = arith.constant dense<0.000000e+00> : vector<2xf32>
    %90 = vector.multi_reduction <add>, %89, %cst_51 [1] : vector<2x32xf32> to vector<2xf32>
    %91 = vector.shape_cast %90 : vector<2xf32> to vector<2x1xf32>
    %cst_52 = arith.constant 0.142857149 : f32
    %92 = vector.broadcast %cst_52 : f32 to vector<2x1xf32>
    %93 = arith.mulf %91, %92 : vector<2x1xf32>
    %94 = arith.addf %87, %93 : vector<2x1xf32>
    %95 = arith.mulf %50, %52 : vector<2x32x32xf32>
    %cst_53 = arith.constant dense<0.000000e+00> : vector<2x32xf32>
    %96 = vector.multi_reduction <add>, %95, %cst_53 [2] : vector<2x32x32xf32> to vector<2x32xf32>
    %cst_54 = arith.constant dense<0.000000e+00> : vector<2xf32>
    %97 = vector.multi_reduction <add>, %96, %cst_54 [1] : vector<2x32xf32> to vector<2xf32>
    %98 = vector.shape_cast %97 : vector<2xf32> to vector<2x1xf32>
    %cst_55 = arith.constant 1.250000e-01 : f32
    %99 = vector.broadcast %cst_55 : f32 to vector<2x1xf32>
    %100 = arith.mulf %98, %99 : vector<2x1xf32>
    %101 = arith.subf %94, %100 : vector<2x1xf32>
    %102 = arith.addf %1, %101 : vector<2x1xf32>
    %103 = arith.addf %0, %33 : vector<2x16xf32>
    %c1 = arith.constant 1 : index
    %c0_56 = arith.constant 0 : index
    %c0_57 = arith.constant 0 : index
    %104 = vector.load %arg2[%c1, %c0_56, %c0_57] : memref<3x16x32xf32, #tpu.memory_space<vmem>>, vector<1x16x32xf32>
    %105 = vector.shape_cast %104 : vector<1x16x32xf32> to vector<16x32xf32>
    %c1_58 = arith.constant 1 : index
    %c0_59 = arith.constant 0 : index
    %c0_60 = arith.constant 0 : index
    %106 = vector.load %arg3[%c1_58, %c0_59, %c0_60] : memref<3x1x32xf32, #tpu.memory_space<vmem>>, vector<1x1x32xf32>
    %107 = vector.shape_cast %106 : vector<1x1x32xf32> to vector<1x32xf32>
    %c1_61 = arith.constant 1 : index
    %c0_62 = arith.constant 0 : index
    %c0_63 = arith.constant 0 : index
    %108 = vector.load %arg4[%c1_61, %c0_62, %c0_63] : memref<3x32x16xf32, #tpu.memory_space<vmem>>, vector<1x32x16xf32>
    %109 = vector.shape_cast %108 : vector<1x32x16xf32> to vector<32x16xf32>
    %c1_64 = arith.constant 1 : index
    %c0_65 = arith.constant 0 : index
    %c0_66 = arith.constant 0 : index
    %110 = vector.load %arg5[%c1_64, %c0_65, %c0_66] : memref<3x1x16xf32, #tpu.memory_space<vmem>>, vector<1x1x16xf32>
    %111 = vector.shape_cast %110 : vector<1x1x16xf32> to vector<1x16xf32>
    %c1_67 = arith.constant 1 : index
    %c0_68 = arith.constant 0 : index
    %c0_69 = arith.constant 0 : index
    %112 = vector.load %arg6[%c1_67, %c0_68, %c0_69] : memref<3x32x32xf32, #tpu.memory_space<vmem>>, vector<1x32x32xf32>
    %113 = vector.shape_cast %112 : vector<1x32x32xf32> to vector<32x32xf32>
    %c1_70 = arith.constant 1 : index
    %c0_71 = arith.constant 0 : index
    %c0_72 = arith.constant 0 : index
    %114 = vector.load %arg7[%c1_70, %c0_71, %c0_72] : memref<3x32x32xf32, #tpu.memory_space<vmem>>, vector<1x32x32xf32>
    %115 = vector.shape_cast %114 : vector<1x32x32xf32> to vector<32x32xf32>
    %c1_73 = arith.constant 1 : index
    %c0_74 = arith.constant 0 : index
    %c0_75 = arith.constant 0 : index
    %116 = vector.load %arg8[%c1_73, %c0_74, %c0_75] : memref<3x1x32xf32, #tpu.memory_space<vmem>>, vector<1x1x32xf32>
    %117 = vector.shape_cast %116 : vector<1x1x32xf32> to vector<1x32xf32>
    %cst_76 = arith.constant dense<0.000000e+00> : vector<2x32xf32>
    %118 = tpu.matmul %103, %105, %cst_76 {dimension_numbers = #tpu.dot_dimension_numbers<[1], [0], [0], [1], [0, 0, 1, 1], [], []>} : vector<2x16xf32>, vector<16x32xf32>, vector<2x32xf32> -> vector<2x32xf32>
    %119 = vector.broadcast %107 : vector<1x32xf32> to vector<2x32xf32>
    %120 = arith.addf %118, %119 : vector<2x32xf32>
    %cst_77 = arith.constant 0.000000e+00 : f32
    %121 = vector.broadcast %cst_77 : f32 to vector<2x32xf32>
    %122 = arith.minimumf %120, %121 : vector<2x32xf32>
    %123 = math.exp %122 : vector<2x32xf32>
    %cst_78 = arith.constant 0.000000e+00 : f32
    %124 = vector.broadcast %cst_78 : f32 to vector<2x32xf32>
    %125 = arith.cmpf ogt, %120, %124 : vector<2x32xf32>
    %cst_79 = arith.constant 1.000000e+00 : f32
    %126 = vector.broadcast %cst_79 : f32 to vector<2x32xf32>
    %127 = arith.subf %123, %126 : vector<2x32xf32>
    %128 = arith.select %125, %120, %127 : vector<2x32xi1>, vector<2x32xf32>
    %cst_80 = arith.constant 0.000000e+00 : f32
    %129 = vector.broadcast %cst_80 : f32 to vector<2x32xf32>
    %130 = arith.cmpf ogt, %120, %129 : vector<2x32xf32>
    %cst_81 = arith.constant 1.000000e+00 : f32
    %131 = vector.broadcast %cst_81 : f32 to vector<2x32xf32>
    %132 = arith.select %130, %131, %123 : vector<2x32xi1>, vector<2x32xf32>
    %cst_82 = arith.constant dense<0.000000e+00> : vector<2x16xf32>
    %133 = tpu.matmul %128, %109, %cst_82 {dimension_numbers = #tpu.dot_dimension_numbers<[1], [0], [0], [1], [0, 0, 1, 1], [], []>} : vector<2x32xf32>, vector<32x16xf32>, vector<2x16xf32> -> vector<2x16xf32>
    %134 = vector.broadcast %111 : vector<1x16xf32> to vector<2x16xf32>
    %135 = arith.addf %133, %134 : vector<2x16xf32>
    %136 = vector.broadcast %117 : vector<1x32xf32> to vector<2x32xf32>
    %137 = arith.mulf %132, %136 : vector<2x32xf32>
    %cst_83 = arith.constant dense<0.000000e+00> : vector<2xf32>
    %138 = vector.multi_reduction <add>, %137, %cst_83 [1] : vector<2x32xf32> to vector<2xf32>
    %139 = vector.shape_cast %138 : vector<2xf32> to vector<2x1xf32>
    %140 = vector.shape_cast %132 : vector<2x32xf32> to vector<2x32x1xf32>
    %141 = vector.shape_cast %113 : vector<32x32xf32> to vector<1x32x32xf32>
    %142 = vector.broadcast %140 : vector<2x32x1xf32> to vector<2x32x32xf32>
    %143 = vector.broadcast %141 : vector<1x32x32xf32> to vector<2x32x32xf32>
    %144 = arith.mulf %142, %143 : vector<2x32x32xf32>
    %145 = vector.shape_cast %132 : vector<2x32xf32> to vector<2x1x32xf32>
    %146 = vector.shape_cast %115 : vector<32x32xf32> to vector<1x32x32xf32>
    %147 = vector.broadcast %145 : vector<2x1x32xf32> to vector<2x32x32xf32>
    %148 = vector.broadcast %146 : vector<1x32x32xf32> to vector<2x32x32xf32>
    %149 = arith.mulf %147, %148 : vector<2x32x32xf32>
    "tpu.trace_start"() <{level = 10 : i32, message = "bij,bjk->bik"}> : () -> ()
    %cst_84 = arith.constant dense<0.000000e+00> : vector<2x32x32xf32>
    %150 = tpu.matmul %144, %144, %cst_84 {dimension_numbers = #tpu.dot_dimension_numbers<[2], [1], [1], [2], [0, 0, 0, 1, 1, 2], [0], [0]>} : vector<2x32x32xf32>, vector<2x32x32xf32>, vector<2x32x32xf32> -> vector<2x32x32xf32>
    %cst_85 = arith.constant dense<0.000000e+00> : vector<2x32x32xf32>
    %151 = tpu.matmul %150, %144, %cst_85 {dimension_numbers = #tpu.dot_dimension_numbers<[2], [1], [1], [2], [0, 0, 0, 1, 1, 2], [0], [0]>} : vector<2x32x32xf32>, vector<2x32x32xf32>, vector<2x32x32xf32> -> vector<2x32x32xf32>
    %cst_86 = arith.constant dense<0.000000e+00> : vector<2x32x32xf32>
    %152 = tpu.matmul %150, %150, %cst_86 {dimension_numbers = #tpu.dot_dimension_numbers<[2], [1], [1], [2], [0, 0, 0, 1, 1, 2], [0], [0]>} : vector<2x32x32xf32>, vector<2x32x32xf32>, vector<2x32x32xf32> -> vector<2x32x32xf32>
    %cst_87 = arith.constant dense<0.000000e+00> : vector<2x32x32xf32>
    %153 = tpu.matmul %149, %149, %cst_87 {dimension_numbers = #tpu.dot_dimension_numbers<[2], [1], [1], [2], [0, 0, 0, 1, 1, 2], [0], [0]>} : vector<2x32x32xf32>, vector<2x32x32xf32>, vector<2x32x32xf32> -> vector<2x32x32xf32>
    %cst_88 = arith.constant dense<0.000000e+00> : vector<2x32x32xf32>
    %154 = tpu.matmul %153, %153, %cst_88 {dimension_numbers = #tpu.dot_dimension_numbers<[2], [1], [1], [2], [0, 0, 0, 1, 1, 2], [0], [0]>} : vector<2x32x32xf32>, vector<2x32x32xf32>, vector<2x32x32xf32> -> vector<2x32x32xf32>
    "tpu.trace_stop"() : () -> ()
    %155 = arith.mulf %144, %149 : vector<2x32x32xf32>
    %cst_89 = arith.constant dense<0.000000e+00> : vector<2x32xf32>
    %156 = vector.multi_reduction <add>, %155, %cst_89 [2] : vector<2x32x32xf32> to vector<2x32xf32>
    %cst_90 = arith.constant dense<0.000000e+00> : vector<2xf32>
    %157 = vector.multi_reduction <add>, %156, %cst_90 [1] : vector<2x32xf32> to vector<2xf32>
    %158 = vector.shape_cast %157 : vector<2xf32> to vector<2x1xf32>
    %cst_91 = arith.constant 5.000000e-01 : f32
    %159 = vector.broadcast %cst_91 : f32 to vector<2x1xf32>
    %160 = arith.mulf %158, %159 : vector<2x1xf32>
    %161 = arith.subf %139, %160 : vector<2x1xf32>
    %162 = arith.mulf %150, %149 : vector<2x32x32xf32>
    %cst_92 = arith.constant dense<0.000000e+00> : vector<2x32xf32>
    %163 = vector.multi_reduction <add>, %162, %cst_92 [2] : vector<2x32x32xf32> to vector<2x32xf32>
    %cst_93 = arith.constant dense<0.000000e+00> : vector<2xf32>
    %164 = vector.multi_reduction <add>, %163, %cst_93 [1] : vector<2x32xf32> to vector<2xf32>
    %165 = vector.shape_cast %164 : vector<2xf32> to vector<2x1xf32>
    %cst_94 = arith.constant 0.333333343 : f32
    %166 = vector.broadcast %cst_94 : f32 to vector<2x1xf32>
    %167 = arith.mulf %165, %166 : vector<2x1xf32>
    %168 = arith.addf %161, %167 : vector<2x1xf32>
    %169 = arith.mulf %151, %149 : vector<2x32x32xf32>
    %cst_95 = arith.constant dense<0.000000e+00> : vector<2x32xf32>
    %170 = vector.multi_reduction <add>, %169, %cst_95 [2] : vector<2x32x32xf32> to vector<2x32xf32>
    %cst_96 = arith.constant dense<0.000000e+00> : vector<2xf32>
    %171 = vector.multi_reduction <add>, %170, %cst_96 [1] : vector<2x32xf32> to vector<2xf32>
    %172 = vector.shape_cast %171 : vector<2xf32> to vector<2x1xf32>
    %cst_97 = arith.constant 2.500000e-01 : f32
    %173 = vector.broadcast %cst_97 : f32 to vector<2x1xf32>
    %174 = arith.mulf %172, %173 : vector<2x1xf32>
    %175 = arith.subf %168, %174 : vector<2x1xf32>
    %176 = arith.mulf %152, %149 : vector<2x32x32xf32>
    %cst_98 = arith.constant dense<0.000000e+00> : vector<2x32xf32>
    %177 = vector.multi_reduction <add>, %176, %cst_98 [2] : vector<2x32x32xf32> to vector<2x32xf32>
    %cst_99 = arith.constant dense<0.000000e+00> : vector<2xf32>
    %178 = vector.multi_reduction <add>, %177, %cst_99 [1] : vector<2x32xf32> to vector<2xf32>
    %179 = vector.shape_cast %178 : vector<2xf32> to vector<2x1xf32>
    %cst_100 = arith.constant 2.000000e-01 : f32
    %180 = vector.broadcast %cst_100 : f32 to vector<2x1xf32>
    %181 = arith.mulf %179, %180 : vector<2x1xf32>
    %182 = arith.addf %175, %181 : vector<2x1xf32>
    %183 = arith.mulf %152, %153 : vector<2x32x32xf32>
    %cst_101 = arith.constant dense<0.000000e+00> : vector<2x32xf32>
    %184 = vector.multi_reduction <add>, %183, %cst_101 [2] : vector<2x32x32xf32> to vector<2x32xf32>
    %cst_102 = arith.constant dense<0.000000e+00> : vector<2xf32>
    %185 = vector.multi_reduction <add>, %184, %cst_102 [1] : vector<2x32xf32> to vector<2xf32>
    %186 = vector.shape_cast %185 : vector<2xf32> to vector<2x1xf32>
    %cst_103 = arith.constant 0.166666672 : f32
    %187 = vector.broadcast %cst_103 : f32 to vector<2x1xf32>
    %188 = arith.mulf %186, %187 : vector<2x1xf32>
    %189 = arith.subf %182, %188 : vector<2x1xf32>
    %190 = arith.mulf %151, %154 : vector<2x32x32xf32>
    %cst_104 = arith.constant dense<0.000000e+00> : vector<2x32xf32>
    %191 = vector.multi_reduction <add>, %190, %cst_104 [2] : vector<2x32x32xf32> to vector<2x32xf32>
    %cst_105 = arith.constant dense<0.000000e+00> : vector<2xf32>
    %192 = vector.multi_reduction <add>, %191, %cst_105 [1] : vector<2x32xf32> to vector<2xf32>
    %193 = vector.shape_cast %192 : vector<2xf32> to vector<2x1xf32>
    %cst_106 = arith.constant 0.142857149 : f32
    %194 = vector.broadcast %cst_106 : f32 to vector<2x1xf32>
    %195 = arith.mulf %193, %194 : vector<2x1xf32>
    %196 = arith.addf %189, %195 : vector<2x1xf32>
    %197 = arith.mulf %152, %154 : vector<2x32x32xf32>
    %cst_107 = arith.constant dense<0.000000e+00> : vector<2x32xf32>
    %198 = vector.multi_reduction <add>, %197, %cst_107 [2] : vector<2x32x32xf32> to vector<2x32xf32>
    %cst_108 = arith.constant dense<0.000000e+00> : vector<2xf32>
    %199 = vector.multi_reduction <add>, %198, %cst_108 [1] : vector<2x32xf32> to vector<2xf32>
    %200 = vector.shape_cast %199 : vector<2xf32> to vector<2x1xf32>
    %cst_109 = arith.constant 1.250000e-01 : f32
    %201 = vector.broadcast %cst_109 : f32 to vector<2x1xf32>
    %202 = arith.mulf %200, %201 : vector<2x1xf32>
    %203 = arith.subf %196, %202 : vector<2x1xf32>
    %204 = arith.addf %102, %203 : vector<2x1xf32>
    %205 = arith.addf %103, %135 : vector<2x16xf32>
    %c2 = arith.constant 2 : index
    %c0_110 = arith.constant 0 : index
    %c0_111 = arith.constant 0 : index
    %206 = vector.load %arg2[%c2, %c0_110, %c0_111] : memref<3x16x32xf32, #tpu.memory_space<vmem>>, vector<1x16x32xf32>
    %207 = vector.shape_cast %206 : vector<1x16x32xf32> to vector<16x32xf32>
    %c2_112 = arith.constant 2 : index
    %c0_113 = arith.constant 0 : index
    %c0_114 = arith.constant 0 : index
    %208 = vector.load %arg3[%c2_112, %c0_113, %c0_114] : memref<3x1x32xf32, #tpu.memory_space<vmem>>, vector<1x1x32xf32>
    %209 = vector.shape_cast %208 : vector<1x1x32xf32> to vector<1x32xf32>
    %c2_115 = arith.constant 2 : index
    %c0_116 = arith.constant 0 : index
    %c0_117 = arith.constant 0 : index
    %210 = vector.load %arg4[%c2_115, %c0_116, %c0_117] : memref<3x32x16xf32, #tpu.memory_space<vmem>>, vector<1x32x16xf32>
    %211 = vector.shape_cast %210 : vector<1x32x16xf32> to vector<32x16xf32>
    %c2_118 = arith.constant 2 : index
    %c0_119 = arith.constant 0 : index
    %c0_120 = arith.constant 0 : index
    %212 = vector.load %arg5[%c2_118, %c0_119, %c0_120] : memref<3x1x16xf32, #tpu.memory_space<vmem>>, vector<1x1x16xf32>
    %213 = vector.shape_cast %212 : vector<1x1x16xf32> to vector<1x16xf32>
    %c2_121 = arith.constant 2 : index
    %c0_122 = arith.constant 0 : index
    %c0_123 = arith.constant 0 : index
    %214 = vector.load %arg6[%c2_121, %c0_122, %c0_123] : memref<3x32x32xf32, #tpu.memory_space<vmem>>, vector<1x32x32xf32>
    %215 = vector.shape_cast %214 : vector<1x32x32xf32> to vector<32x32xf32>
    %c2_124 = arith.constant 2 : index
    %c0_125 = arith.constant 0 : index
    %c0_126 = arith.constant 0 : index
    %216 = vector.load %arg7[%c2_124, %c0_125, %c0_126] : memref<3x32x32xf32, #tpu.memory_space<vmem>>, vector<1x32x32xf32>
    %217 = vector.shape_cast %216 : vector<1x32x32xf32> to vector<32x32xf32>
    %c2_127 = arith.constant 2 : index
    %c0_128 = arith.constant 0 : index
    %c0_129 = arith.constant 0 : index
    %218 = vector.load %arg8[%c2_127, %c0_128, %c0_129] : memref<3x1x32xf32, #tpu.memory_space<vmem>>, vector<1x1x32xf32>
    %219 = vector.shape_cast %218 : vector<1x1x32xf32> to vector<1x32xf32>
    %cst_130 = arith.constant dense<0.000000e+00> : vector<2x32xf32>
    %220 = tpu.matmul %205, %207, %cst_130 {dimension_numbers = #tpu.dot_dimension_numbers<[1], [0], [0], [1], [0, 0, 1, 1], [], []>} : vector<2x16xf32>, vector<16x32xf32>, vector<2x32xf32> -> vector<2x32xf32>
    %221 = vector.broadcast %209 : vector<1x32xf32> to vector<2x32xf32>
    %222 = arith.addf %220, %221 : vector<2x32xf32>
    %cst_131 = arith.constant 0.000000e+00 : f32
    %223 = vector.broadcast %cst_131 : f32 to vector<2x32xf32>
    %224 = arith.minimumf %222, %223 : vector<2x32xf32>
    %225 = math.exp %224 : vector<2x32xf32>
    %cst_132 = arith.constant 0.000000e+00 : f32
    %226 = vector.broadcast %cst_132 : f32 to vector<2x32xf32>
    %227 = arith.cmpf ogt, %222, %226 : vector<2x32xf32>
    %cst_133 = arith.constant 1.000000e+00 : f32
    %228 = vector.broadcast %cst_133 : f32 to vector<2x32xf32>
    %229 = arith.subf %225, %228 : vector<2x32xf32>
    %230 = arith.select %227, %222, %229 : vector<2x32xi1>, vector<2x32xf32>
    %cst_134 = arith.constant 0.000000e+00 : f32
    %231 = vector.broadcast %cst_134 : f32 to vector<2x32xf32>
    %232 = arith.cmpf ogt, %222, %231 : vector<2x32xf32>
    %cst_135 = arith.constant 1.000000e+00 : f32
    %233 = vector.broadcast %cst_135 : f32 to vector<2x32xf32>
    %234 = arith.select %232, %233, %225 : vector<2x32xi1>, vector<2x32xf32>
    %cst_136 = arith.constant dense<0.000000e+00> : vector<2x16xf32>
    %235 = tpu.matmul %230, %211, %cst_136 {dimension_numbers = #tpu.dot_dimension_numbers<[1], [0], [0], [1], [0, 0, 1, 1], [], []>} : vector<2x32xf32>, vector<32x16xf32>, vector<2x16xf32> -> vector<2x16xf32>
    %236 = vector.broadcast %213 : vector<1x16xf32> to vector<2x16xf32>
    %237 = arith.addf %235, %236 : vector<2x16xf32>
    %238 = vector.broadcast %219 : vector<1x32xf32> to vector<2x32xf32>
    %239 = arith.mulf %234, %238 : vector<2x32xf32>
    %cst_137 = arith.constant dense<0.000000e+00> : vector<2xf32>
    %240 = vector.multi_reduction <add>, %239, %cst_137 [1] : vector<2x32xf32> to vector<2xf32>
    %241 = vector.shape_cast %240 : vector<2xf32> to vector<2x1xf32>
    %242 = vector.shape_cast %234 : vector<2x32xf32> to vector<2x32x1xf32>
    %243 = vector.shape_cast %215 : vector<32x32xf32> to vector<1x32x32xf32>
    %244 = vector.broadcast %242 : vector<2x32x1xf32> to vector<2x32x32xf32>
    %245 = vector.broadcast %243 : vector<1x32x32xf32> to vector<2x32x32xf32>
    %246 = arith.mulf %244, %245 : vector<2x32x32xf32>
    %247 = vector.shape_cast %234 : vector<2x32xf32> to vector<2x1x32xf32>
    %248 = vector.shape_cast %217 : vector<32x32xf32> to vector<1x32x32xf32>
    %249 = vector.broadcast %247 : vector<2x1x32xf32> to vector<2x32x32xf32>
    %250 = vector.broadcast %248 : vector<1x32x32xf32> to vector<2x32x32xf32>
    %251 = arith.mulf %249, %250 : vector<2x32x32xf32>
    "tpu.trace_start"() <{level = 10 : i32, message = "bij,bjk->bik"}> : () -> ()
    %cst_138 = arith.constant dense<0.000000e+00> : vector<2x32x32xf32>
    %252 = tpu.matmul %246, %246, %cst_138 {dimension_numbers = #tpu.dot_dimension_numbers<[2], [1], [1], [2], [0, 0, 0, 1, 1, 2], [0], [0]>} : vector<2x32x32xf32>, vector<2x32x32xf32>, vector<2x32x32xf32> -> vector<2x32x32xf32>
    %cst_139 = arith.constant dense<0.000000e+00> : vector<2x32x32xf32>
    %253 = tpu.matmul %252, %246, %cst_139 {dimension_numbers = #tpu.dot_dimension_numbers<[2], [1], [1], [2], [0, 0, 0, 1, 1, 2], [0], [0]>} : vector<2x32x32xf32>, vector<2x32x32xf32>, vector<2x32x32xf32> -> vector<2x32x32xf32>
    %cst_140 = arith.constant dense<0.000000e+00> : vector<2x32x32xf32>
    %254 = tpu.matmul %252, %252, %cst_140 {dimension_numbers = #tpu.dot_dimension_numbers<[2], [1], [1], [2], [0, 0, 0, 1, 1, 2], [0], [0]>} : vector<2x32x32xf32>, vector<2x32x32xf32>, vector<2x32x32xf32> -> vector<2x32x32xf32>
    %cst_141 = arith.constant dense<0.000000e+00> : vector<2x32x32xf32>
    %255 = tpu.matmul %251, %251, %cst_141 {dimension_numbers = #tpu.dot_dimension_numbers<[2], [1], [1], [2], [0, 0, 0, 1, 1, 2], [0], [0]>} : vector<2x32x32xf32>, vector<2x32x32xf32>, vector<2x32x32xf32> -> vector<2x32x32xf32>
    %cst_142 = arith.constant dense<0.000000e+00> : vector<2x32x32xf32>
    %256 = tpu.matmul %255, %255, %cst_142 {dimension_numbers = #tpu.dot_dimension_numbers<[2], [1], [1], [2], [0, 0, 0, 1, 1, 2], [0], [0]>} : vector<2x32x32xf32>, vector<2x32x32xf32>, vector<2x32x32xf32> -> vector<2x32x32xf32>
    "tpu.trace_stop"() : () -> ()
    %257 = arith.mulf %246, %251 : vector<2x32x32xf32>
    %cst_143 = arith.constant dense<0.000000e+00> : vector<2x32xf32>
    %258 = vector.multi_reduction <add>, %257, %cst_143 [2] : vector<2x32x32xf32> to vector<2x32xf32>
    %cst_144 = arith.constant dense<0.000000e+00> : vector<2xf32>
    %259 = vector.multi_reduction <add>, %258, %cst_144 [1] : vector<2x32xf32> to vector<2xf32>
    %260 = vector.shape_cast %259 : vector<2xf32> to vector<2x1xf32>
    %cst_145 = arith.constant 5.000000e-01 : f32
    %261 = vector.broadcast %cst_145 : f32 to vector<2x1xf32>
    %262 = arith.mulf %260, %261 : vector<2x1xf32>
    %263 = arith.subf %241, %262 : vector<2x1xf32>
    %264 = arith.mulf %252, %251 : vector<2x32x32xf32>
    %cst_146 = arith.constant dense<0.000000e+00> : vector<2x32xf32>
    %265 = vector.multi_reduction <add>, %264, %cst_146 [2] : vector<2x32x32xf32> to vector<2x32xf32>
    %cst_147 = arith.constant dense<0.000000e+00> : vector<2xf32>
    %266 = vector.multi_reduction <add>, %265, %cst_147 [1] : vector<2x32xf32> to vector<2xf32>
    %267 = vector.shape_cast %266 : vector<2xf32> to vector<2x1xf32>
    %cst_148 = arith.constant 0.333333343 : f32
    %268 = vector.broadcast %cst_148 : f32 to vector<2x1xf32>
    %269 = arith.mulf %267, %268 : vector<2x1xf32>
    %270 = arith.addf %263, %269 : vector<2x1xf32>
    %271 = arith.mulf %253, %251 : vector<2x32x32xf32>
    %cst_149 = arith.constant dense<0.000000e+00> : vector<2x32xf32>
    %272 = vector.multi_reduction <add>, %271, %cst_149 [2] : vector<2x32x32xf32> to vector<2x32xf32>
    %cst_150 = arith.constant dense<0.000000e+00> : vector<2xf32>
    %273 = vector.multi_reduction <add>, %272, %cst_150 [1] : vector<2x32xf32> to vector<2xf32>
    %274 = vector.shape_cast %273 : vector<2xf32> to vector<2x1xf32>
    %cst_151 = arith.constant 2.500000e-01 : f32
    %275 = vector.broadcast %cst_151 : f32 to vector<2x1xf32>
    %276 = arith.mulf %274, %275 : vector<2x1xf32>
    %277 = arith.subf %270, %276 : vector<2x1xf32>
    %278 = arith.mulf %254, %251 : vector<2x32x32xf32>
    %cst_152 = arith.constant dense<0.000000e+00> : vector<2x32xf32>
    %279 = vector.multi_reduction <add>, %278, %cst_152 [2] : vector<2x32x32xf32> to vector<2x32xf32>
    %cst_153 = arith.constant dense<0.000000e+00> : vector<2xf32>
    %280 = vector.multi_reduction <add>, %279, %cst_153 [1] : vector<2x32xf32> to vector<2xf32>
    %281 = vector.shape_cast %280 : vector<2xf32> to vector<2x1xf32>
    %cst_154 = arith.constant 2.000000e-01 : f32
    %282 = vector.broadcast %cst_154 : f32 to vector<2x1xf32>
    %283 = arith.mulf %281, %282 : vector<2x1xf32>
    %284 = arith.addf %277, %283 : vector<2x1xf32>
    %285 = arith.mulf %254, %255 : vector<2x32x32xf32>
    %cst_155 = arith.constant dense<0.000000e+00> : vector<2x32xf32>
    %286 = vector.multi_reduction <add>, %285, %cst_155 [2] : vector<2x32x32xf32> to vector<2x32xf32>
    %cst_156 = arith.constant dense<0.000000e+00> : vector<2xf32>
    %287 = vector.multi_reduction <add>, %286, %cst_156 [1] : vector<2x32xf32> to vector<2xf32>
    %288 = vector.shape_cast %287 : vector<2xf32> to vector<2x1xf32>
    %cst_157 = arith.constant 0.166666672 : f32
    %289 = vector.broadcast %cst_157 : f32 to vector<2x1xf32>
    %290 = arith.mulf %288, %289 : vector<2x1xf32>
    %291 = arith.subf %284, %290 : vector<2x1xf32>
    %292 = arith.mulf %253, %256 : vector<2x32x32xf32>
    %cst_158 = arith.constant dense<0.000000e+00> : vector<2x32xf32>
    %293 = vector.multi_reduction <add>, %292, %cst_158 [2] : vector<2x32x32xf32> to vector<2x32xf32>
    %cst_159 = arith.constant dense<0.000000e+00> : vector<2xf32>
    %294 = vector.multi_reduction <add>, %293, %cst_159 [1] : vector<2x32xf32> to vector<2xf32>
    %295 = vector.shape_cast %294 : vector<2xf32> to vector<2x1xf32>
    %cst_160 = arith.constant 0.142857149 : f32
    %296 = vector.broadcast %cst_160 : f32 to vector<2x1xf32>
    %297 = arith.mulf %295, %296 : vector<2x1xf32>
    %298 = arith.addf %291, %297 : vector<2x1xf32>
    %299 = arith.mulf %254, %256 : vector<2x32x32xf32>
    %cst_161 = arith.constant dense<0.000000e+00> : vector<2x32xf32>
    %300 = vector.multi_reduction <add>, %299, %cst_161 [2] : vector<2x32x32xf32> to vector<2x32xf32>
    %cst_162 = arith.constant dense<0.000000e+00> : vector<2xf32>
    %301 = vector.multi_reduction <add>, %300, %cst_162 [1] : vector<2x32xf32> to vector<2xf32>
    %302 = vector.shape_cast %301 : vector<2xf32> to vector<2x1xf32>
    %cst_163 = arith.constant 1.250000e-01 : f32
    %303 = vector.broadcast %cst_163 : f32 to vector<2x1xf32>
    %304 = arith.mulf %302, %303 : vector<2x1xf32>
    %305 = arith.subf %298, %304 : vector<2x1xf32>
    %306 = arith.addf %204, %305 : vector<2x1xf32>
    %307 = arith.addf %205, %237 : vector<2x16xf32>
    %308 = arith.mulf %307, %307 : vector<2x16xf32>
    %cst_164 = arith.constant 6.28318548 : f32
    %309 = math.log %cst_164 : f32
    %310 = vector.broadcast %309 : f32 to vector<2x16xf32>
    %311 = arith.addf %308, %310 : vector<2x16xf32>
    %cst_165 = arith.constant dense<0.000000e+00> : vector<2xf32>
    %312 = vector.multi_reduction <add>, %311, %cst_165 [1] : vector<2x16xf32> to vector<2xf32>
    %313 = vector.shape_cast %312 : vector<2xf32> to vector<2x1xf32>
    %cst_166 = arith.constant -5.000000e-01 : f32
    %314 = vector.broadcast %cst_166 : f32 to vector<2x1xf32>
    %315 = arith.mulf %314, %313 : vector<2x1xf32>
    %316 = arith.addf %306, %315 : vector<2x1xf32>
    %cst_167 = arith.constant 6.250000e-02 : f32
    %317 = vector.broadcast %cst_167 : f32 to vector<2x1xf32>
    %318 = arith.mulf %316, %317 : vector<2x1xf32>
    %c0_168 = arith.constant 0 : index
    %c0_169 = arith.constant 0 : index
    %319 = vector.load %arg9[%c0_168, %c0_169] : memref<2x1xf32, #tpu.memory_space<vmem>>, vector<2x1xf32>
    tpu.vector_store %arg9[%c0_168, %c0_169], %318 {strides = array<i32>} : memref<2x1xf32, #tpu.memory_space<vmem>>, vector<2x1xf32>,
    return
  }
  func.func @transform_0(%arg0: i32) -> (i32, i32) {
    %c0_i32 = arith.constant 0 : i32
    %c0_i32_0 = arith.constant 0 : i32
    return %arg0, %c0_i32 : i32, i32
  }
  func.func @transform_1(%arg0: i32) -> (i32, i32, i32) {
    %c0_i32 = arith.constant 0 : i32
    %c0_i32_0 = arith.constant 0 : i32
    %c0_i32_1 = arith.constant 0 : i32
    %c0_i32_2 = arith.constant 0 : i32
    return %c0_i32, %c0_i32_0, %c0_i32_1 : i32, i32, i32
  }
  func.func @transform_2(%arg0: i32) -> (i32, i32, i32) {
    %c0_i32 = arith.constant 0 : i32
    %c0_i32_0 = arith.constant 0 : i32
    %c0_i32_1 = arith.constant 0 : i32
    %c0_i32_2 = arith.constant 0 : i32
    return %c0_i32, %c0_i32_0, %c0_i32_1 : i32, i32, i32
  }
  func.func @transform_3(%arg0: i32) -> (i32, i32, i32) {
    %c0_i32 = arith.constant 0 : i32
    %c0_i32_0 = arith.constant 0 : i32
    %c0_i32_1 = arith.constant 0 : i32
    %c0_i32_2 = arith.constant 0 : i32
    return %c0_i32, %c0_i32_0, %c0_i32_1 : i32, i32, i32
  }
  func.func @transform_4(%arg0: i32) -> (i32, i32, i32) {
    %c0_i32 = arith.constant 0 : i32
    %c0_i32_0 = arith.constant 0 : i32
    %c0_i32_1 = arith.constant 0 : i32
    %c0_i32_2 = arith.constant 0 : i32
    return %c0_i32, %c0_i32_0, %c0_i32_1 : i32, i32, i32
  }
  func.func @transform_5(%arg0: i32) -> (i32, i32, i32) {
    %c0_i32 = arith.constant 0 : i32
    %c0_i32_0 = arith.constant 0 : i32
    %c0_i32_1 = arith.constant 0 : i32
    %c0_i32_2 = arith.constant 0 : i32
    return %c0_i32, %c0_i32_0, %c0_i32_1 : i32, i32, i32
  }
  func.func @transform_6(%arg0: i32) -> (i32, i32, i32) {
    %c0_i32 = arith.constant 0 : i32
    %c0_i32_0 = arith.constant 0 : i32
    %c0_i32_1 = arith.constant 0 : i32
    %c0_i32_2 = arith.constant 0 : i32
    return %c0_i32, %c0_i32_0, %c0_i32_1 : i32, i32, i32
  }
  func.func @transform_7(%arg0: i32) -> (i32, i32, i32) {
    %c0_i32 = arith.constant 0 : i32
    %c0_i32_0 = arith.constant 0 : i32
    %c0_i32_1 = arith.constant 0 : i32
    %c0_i32_2 = arith.constant 0 : i32
    return %c0_i32, %c0_i32_0, %c0_i32_1 : i32, i32, i32
  }
  func.func @transform_8(%arg0: i32) -> (i32, i32) {
    %c0_i32 = arith.constant 0 : i32
    %c0_i32_0 = arith.constant 0 : i32
    return %arg0, %c0_i32 : i32, i32
  }
}

</mosaic_0001>

<llo_original>
// kernel: tpu_custom_call.1
$region0: #{tpu_custom_call.1}
  #allocation0 [shape = 'u32[]', space=smem, size = 0x4, offset = 0x4, fixed_abs, tag = 'smem constant byte address 0x4 - core index']
  #allocation1 [shape = 'u32[144,128]{1,0:T(1,128)}', space=vmem, size = 0x12000, scoped, tag = 'internal scratch']
  %s0 = inlined_call_operand.vmem [shape: f32[2,16], index: 0, kind: input, shape index: {}]
  %s1 = inlined_call_operand.vmem [shape: f32[3,16,32], index: 1, kind: input, shape index: {}]
  %s2 = inlined_call_operand.vmem [shape: f32[3,1,32], index: 2, kind: input, shape index: {}]
  %s3 = inlined_call_operand.vmem [shape: f32[3,32,16], index: 3, kind: input, shape index: {}]
  %s4 = inlined_call_operand.vmem [shape: f32[3,1,16], index: 4, kind: input, shape index: {}]
  %s5 = inlined_call_operand.vmem [shape: f32[3,32,32], index: 5, kind: input, shape index: {}]
  %s6 = inlined_call_operand.hbm [shape: f32[3,32,32], index: 6, kind: input, shape index: {}]
  %s7 = inlined_call_operand.vmem [shape: f32[3,1,32], index: 7, kind: input, shape index: {}]
  %s8 = inlined_call_operand.vmem [shape: f32[2,1], index: 8, kind: output, shape index: {}]
  %s9 = sld [smem:[#allocation0]]
  $region46: #{tpu_custom_call.1} parent=0
    _
  %s11 = ssub.s32 1, %s9
  %s12 = scalar_select 0, %s11, %s9
  $region1: #{tpu_custom_call.1} parent=0
    #allocation2 [shape = 'u8[49152]{0}', space=vmem, size = 0xc000, scoped, tag = 'input window, operand 6, single buffered']
    #allocation3 [shape = 's32[1]{0}', space=sflag, size = 0x4, scoped, tag = 'scoped memory for tpu_custom_call.1']
    %13 = vsyncpa [#allocation3], 0
    // Predicated region
    $region2: #{tpu_custom_call.1} parent=1 // pred_check
      _
    $region3: #{tpu_custom_call.1} parent=1 // pred_check_branch
      %15 = sbr.rel (0) target = $region5
    $region4: #{tpu_custom_call.1} parent=1 // pred_region
      _
    $region5: #{tpu_custom_call.1} parent=1 // pred_fallthru
      _
    // Predicated region
    $region6: #{tpu_custom_call.1} parent=1 // pred_check
      _
    $region7: #{tpu_custom_call.1} parent=1 // pred_check_branch
      %17 = sbr.rel (0) target = $region9
    $region8: #{tpu_custom_call.1} parent=1 // pred_region
      _
    $region9: #{tpu_custom_call.1} parent=1 // pred_fallthru
      _
    // Predicated region
    $region10: #{tpu_custom_call.1} parent=1 // pred_check
      _
    $region11: #{tpu_custom_call.1} parent=1 // pred_check_branch
      %19 = sbr.rel (0) target = $region13
    $region12: #{tpu_custom_call.1} parent=1 // pred_region
      _
    $region13: #{tpu_custom_call.1} parent=1 // pred_fallthru
      _
    // Predicated region
    $region14: #{tpu_custom_call.1} parent=1 // pred_check
      _
    $region15: #{tpu_custom_call.1} parent=1 // pred_check_branch
      %21 = sbr.rel (0) target = $region17
    $region16: #{tpu_custom_call.1} parent=1 // pred_region
      _
    $region17: #{tpu_custom_call.1} parent=1 // pred_fallthru
      _
    // Predicated region
    $region18: #{tpu_custom_call.1} parent=1 // pred_check
      _
    $region19: #{tpu_custom_call.1} parent=1 // pred_check_branch
      %23 = sbr.rel (0) target = $region21
    $region20: #{tpu_custom_call.1} parent=1 // pred_region
      _
    $region21: #{tpu_custom_call.1} parent=1 // pred_fallthru
      _
    // Predicated region
    $region22: #{tpu_custom_call.1} parent=1 // pred_check
      _
    $region23: #{tpu_custom_call.1} parent=1 // pred_check_branch
      %25 = sbr.rel (0) target = $region25
    $region24: #{tpu_custom_call.1} parent=1 // pred_region
      _
    $region25: #{tpu_custom_call.1} parent=1 // pred_fallthru
      _
    // Predicated region
    $region26: #{tpu_custom_call.1} parent=1 // pred_check
      _
    $region27: #{tpu_custom_call.1} parent=1 // pred_check_branch
      %27 = sbr.rel (0) target = $region29
    $region28: #{tpu_custom_call.1} parent=1 // pred_region
      %s29 = ssub.s32 1536, 1536
      %30 = vsyncadd [#allocation3], %s29
      %s31 = sshll.u32 [#allocation2], 4
      %s32 = int_to_ptr.vmem [resolvable:$true] %s31
      %37 = dma.hbm_to_vmem [thread:$0]  %s6, 1536, %s32, [#allocation3], 128, 128, 8
    $region29: #{tpu_custom_call.1} parent=1 // pred_fallthru
      _
    // Predicated region
    $region30: #{tpu_custom_call.1} parent=1 // pred_check
      _
    $region31: #{tpu_custom_call.1} parent=1 // pred_check_branch
      %39 = sbr.rel (0) target = $region33
    $region32: #{tpu_custom_call.1} parent=1 // pred_region
      _
    $region33: #{tpu_custom_call.1} parent=1 // pred_fallthru
      _
    // Predicated region
    $region34: #{tpu_custom_call.1} parent=1 // pred_check
      _
    $region35: #{tpu_custom_call.1} parent=1 // pred_check_branch
      %41 = sbr.rel (0) target = $region37
    $region36: #{tpu_custom_call.1} parent=1 // pred_region
      %42 = dma.done [#allocation3], 1536
    $region37: #{tpu_custom_call.1} parent=1 // pred_fallthru
      _
    %v43 = vld [vmem:[%s0] sm:$0x3]
    %v44 = vld [vmem:[%s1] sm:$0xff]
    %v45 = vld [vmem:[%s1 + $0x8] sm:$0xff]
    %v46 = vld [vmem:[%s2] sm:$0x1]
    %v47 = vld [vmem:[%s3] sm:$0xff]
    %v48 = vld [vmem:[%s3 + $0x8] sm:$0xff]
    %v49 = vld [vmem:[%s3 + $0x10] sm:$0xff]
    %v50 = vld [vmem:[%s3 + $0x18] sm:$0xff]
    %v51 = vld [vmem:[%s4] sm:$0x1]
    %v52 = vld [vmem:[%s5] sm:$0xff]
    %v53 = vld [vmem:[%s5 + $0x8] sm:$0xff]
    %v54 = vld [vmem:[%s5 + $0x10] sm:$0xff]
    %v55 = vld [vmem:[%s5 + $0x18] sm:$0xff]
    %v56 = vld [vmem:[#allocation2] sm:$0xff]
    %v57 = vld [vmem:[#allocation2 + $0x8] sm:$0xff]
    %v58 = vld [vmem:[#allocation2 + $0x10] sm:$0xff]
    %v59 = vld [vmem:[#allocation2 + $0x18] sm:$0xff]
    %v60 = vld [vmem:[%s7] sm:$0x1]
    %v62 = vlaneseq
    %v63 = vshrl.u32 %v62, 7
    %v64 = vsub.s32 0, %v63
    %v65 = vrot.slane %v46, %v64
    %vm67 = vcmask 130048
    %v69 = vsel %vm67, %v43, 0
    %71 = vmatprep.subr.mxu0 0.0
    %72 = vmatpush1.msra.mxu0 %v44
    %73 = vmatprep.subr.mxu0 0.0
    %74 = vmatpush1.msra.mxu0 %v45
    %75 = vmatprep.subr.mxu0 0.0
    %76 = vmatpush1.msra.mxu0 0.0
    %77 = vmatprep.subr.mxu0 0.0
    %78 = vmatpush1.msra.mxu0 0.0
    %79 = vmatprep.subr.mxu0 0.0
    %80 = vmatpush1.msra.mxu0 0.0
    %81 = vmatprep.subr.mxu0 0.0
    %82 = vmatpush1.msra.mxu0 0.0
    %83 = vmatprep.subr.mxu0 0.0
    %84 = vmatpush1.msra.mxu0 0.0
    %85 = vmatprep.subr.mxu0 0.0
    %86 = vmatpush1.msra.mxu0 0.0
    %87 = vmatprep.subr.mxu0 0.0
    %88 = vmatpush1.msra.mxu0 0.0
    %89 = vmatprep.subr.mxu0 0.0
    %90 = vmatpush1.msra.mxu0 0.0
    %91 = vmatprep.subr.mxu0 0.0
    %92 = vmatpush1.msra.mxu0 0.0
    %93 = vmatprep.subr.mxu0 0.0
    %94 = vmatpush1.msra.mxu0 0.0
    %95 = vmatprep.subr.mxu0 0.0
    %96 = vmatpush1.msra.mxu0 0.0
    %97 = vmatprep.subr.mxu0 0.0
    %98 = vmatpush1.msra.mxu0 0.0
    %99 = vmatprep.subr.mxu0 0.0
    %100 = vmatpush1.msra.mxu0 0.0
    %101 = vmatprep.subr.mxu0 0.0
    %102 = vmatpush1.msra.mxu0 0.0
    %103 = vmatprep.subr.mxu0 0.0
    %104 = vmatpush1.msra.mxu0 0.0
    %105 = vmatprep.subr.mxu0 0.0
    %106 = vmatpush1.msra.mxu0 0.0
    %107 = vmatprep.subr.mxu0 0.0
    %108 = vmatpush1.msra.mxu0 0.0
    %109 = vmatprep.subr.mxu0 0.0
    %110 = vmatpush1.msra.mxu0 0.0
    %111 = vmatprep.subr.mxu0 0.0
    %112 = vmatpush1.msra.mxu0 0.0
    %113 = vmatprep.subr.mxu0 0.0
    %114 = vmatpush1.msra.mxu0 0.0
    %115 = vmatprep.subr.mxu0 0.0
    %116 = vmatpush1.msra.mxu0 0.0
    %117 = vmatprep.subr.mxu0 0.0
    %118 = vmatpush1.msra.mxu0 0.0
    %119 = vmatprep.subr.mxu0 0.0
    %120 = vmatpush1.msra.mxu0 0.0
    %121 = vmatprep.subr.mxu0 0.0
    %122 = vmatpush1.msra.mxu0 0.0
    %123 = vmatprep.subr.mxu0 0.0
    %124 = vmatpush1.msra.mxu0 0.0
    %125 = vmatprep.subr.mxu0 0.0
    %126 = vmatpush1.msra.mxu0 0.0
    %127 = vmatprep.subr.mxu0 0.0
    %128 = vmatpush1.msra.mxu0 0.0
    %129 = vmatprep.subr.mxu0 0.0
    %130 = vmatpush1.msra.mxu0 0.0
    %131 = vmatprep.subr.mxu0 0.0
    %132 = vmatpush1.msra.mxu0 0.0
    %133 = vmatprep.subr.mxu0 0.0
    %134 = vmatpush1.msra.mxu0 0.0
    %135 = vmatprep.mubr.f32.mxu0 0.0
    %136 = vmatmul.mubr.f32.gmra.mrb[0].mxu0 %v69
    %v137 = vpop.f32.mrb[0].mxu0
    %v138 = vadd.f32 %v65, %v137
    %v139 = vpop.f32.mrb[0].mxu0
    %140 = vdwg.mxu0
    %v141 = vmin.f32 %v138, 0.0
    %v142 = vmul.f32 %v141, 1.442695
    %v143 = vpow.pop %v142
    %vm144 = vcmp.gt.f32.partialorder %v138, 0.0
    %v145 = vsub.f32 %v143, 1.0
    %v146 = vsel %vm144, %v138, %v145
    %v147 = vsel %vm144, 1.0, %v143
    %v149 = vlaneseq
    %v150 = vshrl.u32 %v149, 7
    %v151 = vsub.s32 0, %v150
    %v152 = vrot.slane %v51, %v151
    %vm154 = vcmask 261120
    %v156 = vsel %vm154, %v146, 0
    %158 = vmatprep.subr.mxu0 0.0
    %159 = vmatpush1.msra.mxu0 %v47
    %160 = vmatprep.subr.mxu0 0.0
    %161 = vmatpush1.msra.mxu0 %v48
    %162 = vmatprep.subr.mxu0 0.0
    %163 = vmatpush1.msra.mxu0 %v49
    %164 = vmatprep.subr.mxu0 0.0
    %165 = vmatpush1.msra.mxu0 %v50
    %166 = vmatprep.subr.mxu0 0.0
    %167 = vmatpush1.msra.mxu0 0.0
    %168 = vmatprep.subr.mxu0 0.0
    %169 = vmatpush1.msra.mxu0 0.0
    %170 = vmatprep.subr.mxu0 0.0
    %171 = vmatpush1.msra.mxu0 0.0
    %172 = vmatprep.subr.mxu0 0.0
    %173 = vmatpush1.msra.mxu0 0.0
    %174 = vmatprep.subr.mxu0 0.0
    %175 = vmatpush1.msra.mxu0 0.0
    %176 = vmatprep.subr.mxu0 0.0
    %177 = vmatpush1.msra.mxu0 0.0
    %178 = vmatprep.subr.mxu0 0.0
    %179 = vmatpush1.msra.mxu0 0.0
    %180 = vmatprep.subr.mxu0 0.0
    %181 = vmatpush1.msra.mxu0 0.0
    %182 = vmatprep.subr.mxu0 0.0
    %183 = vmatpush1.msra.mxu0 0.0
    %184 = vmatprep.subr.mxu0 0.0
    %185 = vmatpush1.msra.mxu0 0.0
    %186 = vmatprep.subr.mxu0 0.0
    %187 = vmatpush1.msra.mxu0 0.0
    %188 = vmatprep.subr.mxu0 0.0
    %189 = vmatpush1.msra.mxu0 0.0
    %190 = vmatprep.subr.mxu0 0.0
    %191 = vmatpush1.msra.mxu0 0.0
    %192 = vmatprep.subr.mxu0 0.0
    %193 = vmatpush1.msra.mxu0 0.0
    %194 = vmatprep.subr.mxu0 0.0
    %195 = vmatpush1.msra.mxu0 0.0
    %196 = vmatprep.subr.mxu0 0.0
    %197 = vmatpush1.msra.mxu0 0.0
    %198 = vmatprep.subr.mxu0 0.0
    %199 = vmatpush1.msra.mxu0 0.0
    %200 = vmatprep.subr.mxu0 0.0
    %201 = vmatpush1.msra.mxu0 0.0
    %202 = vmatprep.subr.mxu0 0.0
    %203 = vmatpush1.msra.mxu0 0.0
    %204 = vmatprep.subr.mxu0 0.0
    %205 = vmatpush1.msra.mxu0 0.0
    %206 = vmatprep.subr.mxu0 0.0
    %207 = vmatpush1.msra.mxu0 0.0
    %208 = vmatprep.subr.mxu0 0.0
    %209 = vmatpush1.msra.mxu0 0.0
    %210 = vmatprep.subr.mxu0 0.0
    %211 = vmatpush1.msra.mxu0 0.0
    %212 = vmatprep.subr.mxu0 0.0
    %213 = vmatpush1.msra.mxu0 0.0
    %214 = vmatprep.subr.mxu0 0.0
    %215 = vmatpush1.msra.mxu0 0.0
    %216 = vmatprep.subr.mxu0 0.0
    %217 = vmatpush1.msra.mxu0 0.0
    %218 = vmatprep.subr.mxu0 0.0
    %219 = vmatpush1.msra.mxu0 0.0
    %220 = vmatprep.subr.mxu0 0.0
    %221 = vmatpush1.msra.mxu0 0.0
    %222 = vmatprep.mubr.f32.mxu0 0.0
    %223 = vmatmul.mubr.f32.gmra.mrb[0].mxu0 %v156
    %v224 = vpop.f32.mrb[0].mxu0
    %v225 = vadd.f32 %v152, %v224
    %v226 = vpop.f32.mrb[0].mxu0
    %227 = vdwg.mxu0
    %v229 = vlaneseq
    %v230 = vshrl.u32 %v229, 7
    %v231 = vsub.s32 0, %v230
    %v232 = vrot.slane %v60, %v231
    %v234 = vmul.f32 %v147, %v232
    %vm235 = vcmask 254976
    %v236 = vsel %vm235, %v234, 0.0
    %237 = vadd.xlane.f32.xlu0 %v236
    %v238 = vpop.xlane.xlu0 %237
    %v239 = vlaneseq
    %v240 = vshrl.u32 %v239, 7
    %v241 = vsub.s32 0, %v240
    %v242 = vrot.slane %v147, %v241
    %244 = vbcast.lane.b32.xlu0 %v242, 256
    %v245 = vpop.permute.xlu0 %244
    %s247 = sor.u32 256, 8
    %248 = vbcast.lane.b32.xlu0 %v242, %s247
    %v249 = vpop.permute.xlu0 %248
    %s251 = sor.u32 256, 16
    %252 = vbcast.lane.b32.xlu0 %v242, %s251
    %v253 = vpop.permute.xlu0 %252
    %s255 = sor.u32 256, 24
    %256 = vbcast.lane.b32.xlu0 %v242, %s255
    %v257 = vpop.permute.xlu0 %256
    %v258 = vlaneseq
    %v259 = vshrl.u32 %v258, 7
    %v260 = vsub.s32 1, %v259
    %v261 = vrot.slane %v147, %v260
    %263 = vbcast.lane.b32.xlu0 %v261, 256
    %v264 = vpop.permute.xlu0 %263
    %s266 = sor.u32 256, 8
    %267 = vbcast.lane.b32.xlu0 %v261, %s266
    %v268 = vpop.permute.xlu0 %267
    %s270 = sor.u32 256, 16
    %271 = vbcast.lane.b32.xlu0 %v261, %s270
    %v272 = vpop.permute.xlu0 %271
    %s274 = sor.u32 256, 24
    %275 = vbcast.lane.b32.xlu0 %v261, %s274
    %v276 = vpop.permute.xlu0 %275
    %v277 = vmul.f32 %v245, %v52
    %v278 = vmul.f32 %v249, %v53
    %v279 = vmul.f32 %v253, %v54
    %v280 = vmul.f32 %v257, %v55
    %v281 = vmul.f32 %v264, %v52
    %v282 = vmul.f32 %v268, %v53
    %v283 = vmul.f32 %v272, %v54
    %v284 = vmul.f32 %v276, %v55
    %v287 = vunpack.c.l.s4 1966171168
    %v288 = vunpack.c.0.s8 %v287
    %v289 = vlaneseq
    %v290 = vshrl.u32 %v289, 7
    %v291 = vsub.s32 %v288, %v290
    %v292 = vrot.slane %v147, %v291
    %v293 = vcombine.high %v292, %v292
    %v295 = vunpack.c.l.s4 1966171168
    %v296 = vunpack.c.0.s8 %v295
    %v297 = vlaneseq
    %v298 = vshrl.u32 %v297, 7
    %v299 = vsub.s32 %v296, %v298
    %v300 = vrot.slane %v292, %v299
    %v302 = vunpack.c.l.s4 1966171168
    %v303 = vunpack.c.0.s8 %v302
    %v304 = vlaneseq
    %v305 = vshrl.u32 %v304, 7
    %v306 = vsub.s32 %v303, %v305
    %v307 = vrot.slane %v293, %v306
    %v308 = vlaneseq
    %v309 = vshrl.u32 %v308, 7
    %v310 = vsub.s32 0, %v309
    %v311 = vrot.slane %v300, %v310
    %v312 = vlaneseq
    %v313 = vshrl.u32 %v312, 7
    %v314 = vsub.s32 0, %v313
    %v315 = vrot.slane %v307, %v314
    %v318 = vmul.f32 %v311, %v56
    %v319 = vmul.f32 %v311, %v57
    %v320 = vmul.f32 %v311, %v58
    %v321 = vmul.f32 %v311, %v59
    %v322 = vmul.f32 %v315, %v56
    %v323 = vmul.f32 %v315, %v57
    %v324 = vmul.f32 %v315, %v58
    %v325 = vmul.f32 %v315, %v59
    %v327 = vsel %vm154, %v277, 0
    %v330 = vsel %vm154, %v278, 0
    %v333 = vsel %vm154, %v279, 0
    %v336 = vsel %vm154, %v280, 0
    %338 = vmatprep.subr.mxu0 0.0
    %339 = vmatpush1.msra.mxu0 %v277
    %340 = vmatprep.subr.mxu0 0.0
    %341 = vmatpush1.msra.mxu0 %v278
    %342 = vmatprep.subr.mxu0 0.0
    %343 = vmatpush1.msra.mxu0 %v279
    %344 = vmatprep.subr.mxu0 0.0
    %345 = vmatpush1.msra.mxu0 %v280
    %346 = vmatprep.subr.mxu0 0.0
    %347 = vmatpush1.msra.mxu0 0.0
    %348 = vmatprep.subr.mxu0 0.0
    %349 = vmatpush1.msra.mxu0 0.0
    %350 = vmatprep.subr.mxu0 0.0
    %351 = vmatpush1.msra.mxu0 0.0
    %352 = vmatprep.subr.mxu0 0.0
    %353 = vmatpush1.msra.mxu0 0.0
    %354 = vmatprep.subr.mxu0 0.0
    %355 = vmatpush1.msra.mxu0 0.0
    %356 = vmatprep.subr.mxu0 0.0
    %357 = vmatpush1.msra.mxu0 0.0
    %358 = vmatprep.subr.mxu0 0.0
    %359 = vmatpush1.msra.mxu0 0.0
    %360 = vmatprep.subr.mxu0 0.0
    %361 = vmatpush1.msra.mxu0 0.0
    %362 = vmatprep.subr.mxu0 0.0
    %363 = vmatpush1.msra.mxu0 0.0
    %364 = vmatprep.subr.mxu0 0.0
    %365 = vmatpush1.msra.mxu0 0.0
    %366 = vmatprep.subr.mxu0 0.0
    %367 = vmatpush1.msra.mxu0 0.0
    %368 = vmatprep.subr.mxu0 0.0
    %369 = vmatpush1.msra.mxu0 0.0
    %370 = vmatprep.subr.mxu0 0.0
    %371 = vmatpush1.msra.mxu0 0.0
    %372 = vmatprep.subr.mxu0 0.0
    %373 = vmatpush1.msra.mxu0 0.0
    %374 = vmatprep.subr.mxu0 0.0
    %375 = vmatpush1.msra.mxu0 0.0
    %376 = vmatprep.subr.mxu0 0.0
    %377 = vmatpush1.msra.mxu0 0.0
    %378 = vmatprep.subr.mxu0 0.0
    %379 = vmatpush1.msra.mxu0 0.0
    %380 = vmatprep.subr.mxu0 0.0
    %381 = vmatpush1.msra.mxu0 0.0
    %382 = vmatprep.subr.mxu0 0.0
    %383 = vmatpush1.msra.mxu0 0.0
    %384 = vmatprep.subr.mxu0 0.0
    %385 = vmatpush1.msra.mxu0 0.0
    %386 = vmatprep.subr.mxu0 0.0
    %387 = vmatpush1.msra.mxu0 0.0
    %388 = vmatprep.subr.mxu0 0.0
    %389 = vmatpush1.msra.mxu0 0.0
    %390 = vmatprep.subr.mxu0 0.0
    %391 = vmatpush1.msra.mxu0 0.0
    %392 = vmatprep.subr.mxu0 0.0
    %393 = vmatpush1.msra.mxu0 0.0
    %394 = vmatprep.subr.mxu0 0.0
    %395 = vmatpush1.msra.mxu0 0.0
    %396 = vmatprep.subr.mxu0 0.0
    %397 = vmatpush1.msra.mxu0 0.0
    %398 = vmatprep.subr.mxu0 0.0
    %399 = vmatpush1.msra.mxu0 0.0
    %400 = vmatprep.subr.mxu0 0.0
    %401 = vmatpush1.msra.mxu0 0.0
    %402 = vmatprep.mubr.f32.mxu0 0.0
    %403 = vmatmul.mubr.f32.gmra.mrb[0].mxu0 %v327
    %v404 = vpop.f32.mrb[0].mxu0
    %v405 = vadd.f32 0.0, %v404
    %v406 = vpop.f32.mrb[0].mxu0
    %407 = vmatprep.mubr.f32.mxu0 0.0
    %408 = vmatmul.mubr.f32.gmra.mrb[0].mxu0 %v330
    %v409 = vpop.f32.mrb[0].mxu0
    %v410 = vadd.f32 0.0, %v409
    %v411 = vpop.f32.mrb[0].mxu0
    %412 = vmatprep.mubr.f32.mxu0 0.0
    %413 = vmatmul.mubr.f32.gmra.mrb[0].mxu0 %v333
    %v414 = vpop.f32.mrb[0].mxu0
    %v415 = vadd.f32 0.0, %v414
    %v416 = vpop.f32.mrb[0].mxu0
    %417 = vmatprep.mubr.f32.mxu0 0.0
    %418 = vmatmul.mubr.f32.gmra.mrb[0].mxu0 %v336
    %v419 = vpop.f32.mrb[0].mxu0
    %v420 = vadd.f32 0.0, %v419
    %v421 = vpop.f32.mrb[0].mxu0
    %422 = vdwg.mxu0
    %v424 = vsel %vm154, %v281, 0
    %v427 = vsel %vm154, %v282, 0
    %v430 = vsel %vm154, %v283, 0
    %v433 = vsel %vm154, %v284, 0
    %435 = vmatprep.subr.mxu0 0.0
    %436 = vmatpush1.msra.mxu0 %v281
    %437 = vmatprep.subr.mxu0 0.0
    %438 = vmatpush1.msra.mxu0 %v282
    %439 = vmatprep.subr.mxu0 0.0
    %440 = vmatpush1.msra.mxu0 %v283
    %441 = vmatprep.subr.mxu0 0.0
    %442 = vmatpush1.msra.mxu0 %v284
    %443 = vmatprep.subr.mxu0 0.0
    %444 = vmatpush1.msra.mxu0 0.0
    %445 = vmatprep.subr.mxu0 0.0
    %446 = vmatpush1.msra.mxu0 0.0
    %447 = vmatprep.subr.mxu0 0.0
    %448 = vmatpush1.msra.mxu0 0.0
    %449 = vmatprep.subr.mxu0 0.0
    %450 = vmatpush1.msra.mxu0 0.0
    %451 = vmatprep.subr.mxu0 0.0
    %452 = vmatpush1.msra.mxu0 0.0
    %453 = vmatprep.subr.mxu0 0.0
    %454 = vmatpush1.msra.mxu0 0.0
    %455 = vmatprep.subr.mxu0 0.0
    %456 = vmatpush1.msra.mxu0 0.0
    %457 = vmatprep.subr.mxu0 0.0
    %458 = vmatpush1.msra.mxu0 0.0
    %459 = vmatprep.subr.mxu0 0.0
    %460 = vmatpush1.msra.mxu0 0.0
    %461 = vmatprep.subr.mxu0 0.0
    %462 = vmatpush1.msra.mxu0 0.0
    %463 = vmatprep.subr.mxu0 0.0
    %464 = vmatpush1.msra.mxu0 0.0
    %465 = vmatprep.subr.mxu0 0.0
    %466 = vmatpush1.msra.mxu0 0.0
    %467 = vmatprep.subr.mxu0 0.0
    %468 = vmatpush1.msra.mxu0 0.0
    %469 = vmatprep.subr.mxu0 0.0
    %470 = vmatpush1.msra.mxu0 0.0
    %471 = vmatprep.subr.mxu0 0.0
    %472 = vmatpush1.msra.mxu0 0.0
    %473 = vmatprep.subr.mxu0 0.0
    %474 = vmatpush1.msra.mxu0 0.0
    %475 = vmatprep.subr.mxu0 0.0
    %476 = vmatpush1.msra.mxu0 0.0
    %477 = vmatprep.subr.mxu0 0.0
    %478 = vmatpush1.msra.mxu0 0.0
    %479 = vmatprep.subr.mxu0 0.0
    %480 = vmatpush1.msra.mxu0 0.0
    %481 = vmatprep.subr.mxu0 0.0
    %482 = vmatpush1.msra.mxu0 0.0
    %483 = vmatprep.subr.mxu0 0.0
    %484 = vmatpush1.msra.mxu0 0.0
    %485 = vmatprep.subr.mxu0 0.0
    %486 = vmatpush1.msra.mxu0 0.0
    %487 = vmatprep.subr.mxu0 0.0
    %488 = vmatpush1.msra.mxu0 0.0
    %489 = vmatprep.subr.mxu0 0.0
    %490 = vmatpush1.msra.mxu0 0.0
    %491 = vmatprep.subr.mxu0 0.0
    %492 = vmatpush1.msra.mxu0 0.0
    %493 = vmatprep.subr.mxu0 0.0
    %494 = vmatpush1.msra.mxu0 0.0
    %495 = vmatprep.subr.mxu0 0.0
    %496 = vmatpush1.msra.mxu0 0.0
    %497 = vmatprep.subr.mxu0 0.0
    %498 = vmatpush1.msra.mxu0 0.0
    %499 = vmatprep.mubr.f32.mxu0 0.0
    %500 = vmatmul.mubr.f32.gmra.mrb[0].mxu0 %v424
    %v501 = vpop.f32.mrb[0].mxu0
    %v502 = vadd.f32 0.0, %v501
    %v503 = vpop.f32.mrb[0].mxu0
    %504 = vmatprep.mubr.f32.mxu0 0.0
    %505 = vmatmul.mubr.f32.gmra.mrb[0].mxu0 %v427
    %v506 = vpop.f32.mrb[0].mxu0
    %v507 = vadd.f32 0.0, %v506
    %v508 = vpop.f32.mrb[0].mxu0
    %509 = vmatprep.mubr.f32.mxu0 0.0
    %510 = vmatmul.mubr.f32.gmra.mrb[0].mxu0 %v430
    %v511 = vpop.f32.mrb[0].mxu0
    %v512 = vadd.f32 0.0, %v511
    %v513 = vpop.f32.mrb[0].mxu0
    %514 = vmatprep.mubr.f32.mxu0 0.0
    %515 = vmatmul.mubr.f32.gmra.mrb[0].mxu0 %v433
    %v516 = vpop.f32.mrb[0].mxu0
    %v517 = vadd.f32 0.0, %v516
    %v518 = vpop.f32.mrb[0].mxu0
    %519 = vdwg.mxu0
    %v521 = vsel %vm154, %v405, 0
    %v524 = vsel %vm154, %v410, 0
    %v527 = vsel %vm154, %v415, 0
    %v530 = vsel %vm154, %v420, 0
    %532 = vmatprep.subr.mxu0 0.0
    %533 = vmatpush1.msra.mxu0 %v277
    %534 = vmatprep.subr.mxu0 0.0
    %535 = vmatpush1.msra.mxu0 %v278
    %536 = vmatprep.subr.mxu0 0.0
    %537 = vmatpush1.msra.mxu0 %v279
    %538 = vmatprep.subr.mxu0 0.0
    %539 = vmatpush1.msra.mxu0 %v280
    %540 = vmatprep.subr.mxu0 0.0
    %541 = vmatpush1.msra.mxu0 0.0
    %542 = vmatprep.subr.mxu0 0.0
    %543 = vmatpush1.msra.mxu0 0.0
    %544 = vmatprep.subr.mxu0 0.0
    %545 = vmatpush1.msra.mxu0 0.0
    %546 = vmatprep.subr.mxu0 0.0
    %547 = vmatpush1.msra.mxu0 0.0
    %548 = vmatprep.subr.mxu0 0.0
    %549 = vmatpush1.msra.mxu0 0.0
    %550 = vmatprep.subr.mxu0 0.0
    %551 = vmatpush1.msra.mxu0 0.0
    %552 = vmatprep.subr.mxu0 0.0
    %553 = vmatpush1.msra.mxu0 0.0
    %554 = vmatprep.subr.mxu0 0.0
    %555 = vmatpush1.msra.mxu0 0.0
    %556 = vmatprep.subr.mxu0 0.0
    %557 = vmatpush1.msra.mxu0 0.0
    %558 = vmatprep.subr.mxu0 0.0
    %559 = vmatpush1.msra.mxu0 0.0
    %560 = vmatprep.subr.mxu0 0.0
    %561 = vmatpush1.msra.mxu0 0.0
    %562 = vmatprep.subr.mxu0 0.0
    %563 = vmatpush1.msra.mxu0 0.0
    %564 = vmatprep.subr.mxu0 0.0
    %565 = vmatpush1.msra.mxu0 0.0
    %566 = vmatprep.subr.mxu0 0.0
    %567 = vmatpush1.msra.mxu0 0.0
    %568 = vmatprep.subr.mxu0 0.0
    %569 = vmatpush1.msra.mxu0 0.0
    %570 = vmatprep.subr.mxu0 0.0
    %571 = vmatpush1.msra.mxu0 0.0
    %572 = vmatprep.subr.mxu0 0.0
    %573 = vmatpush1.msra.mxu0 0.0
    %574 = vmatprep.subr.mxu0 0.0
    %575 = vmatpush1.msra.mxu0 0.0
    %576 = vmatprep.subr.mxu0 0.0
    %577 = vmatpush1.msra.mxu0 0.0
    %578 = vmatprep.subr.mxu0 0.0
    %579 = vmatpush1.msra.mxu0 0.0
    %580 = vmatprep.subr.mxu0 0.0
    %581 = vmatpush1.msra.mxu0 0.0
    %582 = vmatprep.subr.mxu0 0.0
    %583 = vmatpush1.msra.mxu0 0.0
    %584 = vmatprep.subr.mxu0 0.0
    %585 = vmatpush1.msra.mxu0 0.0
    %586 = vmatprep.subr.mxu0 0.0
    %587 = vmatpush1.msra.mxu0 0.0
    %588 = vmatprep.subr.mxu0 0.0
    %589 = vmatpush1.msra.mxu0 0.0
    %590 = vmatprep.subr.mxu0 0.0
    %591 = vmatpush1.msra.mxu0 0.0
    %592 = vmatprep.subr.mxu0 0.0
    %593 = vmatpush1.msra.mxu0 0.0
    %594 = vmatprep.subr.mxu0 0.0
    %595 = vmatpush1.msra.mxu0 0.0
    %596 = vmatprep.mubr.f32.mxu0 0.0
    %597 = vmatmul.mubr.f32.gmra.mrb[0].mxu0 %v521
    %v598 = vpop.f32.mrb[0].mxu0
    %v599 = vadd.f32 0.0, %v598
    %v600 = vpop.f32.mrb[0].mxu0
    %601 = vmatprep.mubr.f32.mxu0 0.0
    %602 = vmatmul.mubr.f32.gmra.mrb[0].mxu0 %v524
    %v603 = vpop.f32.mrb[0].mxu0
    %v604 = vadd.f32 0.0, %v603
    %v605 = vpop.f32.mrb[0].mxu0
    %606 = vmatprep.mubr.f32.mxu0 0.0
    %607 = vmatmul.mubr.f32.gmra.mrb[0].mxu0 %v527
    %v608 = vpop.f32.mrb[0].mxu0
    %v609 = vadd.f32 0.0, %v608
    %v610 = vpop.f32.mrb[0].mxu0
    %611 = vmatprep.mubr.f32.mxu0 0.0
    %612 = vmatmul.mubr.f32.gmra.mrb[0].mxu0 %v530
    %v613 = vpop.f32.mrb[0].mxu0
    %v614 = vadd.f32 0.0, %v613
    %v615 = vpop.f32.mrb[0].mxu0
    %616 = vdwg.mxu0
    %v618 = vsel %vm154, %v502, 0
    %v621 = vsel %vm154, %v507, 0
    %v624 = vsel %vm154, %v512, 0
    %v627 = vsel %vm154, %v517, 0
    %629 = vmatprep.subr.mxu0 0.0
    %630 = vmatpush1.msra.mxu0 %v281
    %631 = vmatprep.subr.mxu0 0.0
    %632 = vmatpush1.msra.mxu0 %v282
    %633 = vmatprep.subr.mxu0 0.0
    %634 = vmatpush1.msra.mxu0 %v283
    %635 = vmatprep.subr.mxu0 0.0
    %636 = vmatpush1.msra.mxu0 %v284
    %637 = vmatprep.subr.mxu0 0.0
    %638 = vmatpush1.msra.mxu0 0.0
    %639 = vmatprep.subr.mxu0 0.0
    %640 = vmatpush1.msra.mxu0 0.0
    %641 = vmatprep.subr.mxu0 0.0
    %642 = vmatpush1.msra.mxu0 0.0
    %643 = vmatprep.subr.mxu0 0.0
    %644 = vmatpush1.msra.mxu0 0.0
    %645 = vmatprep.subr.mxu0 0.0
    %646 = vmatpush1.msra.mxu0 0.0
    %647 = vmatprep.subr.mxu0 0.0
    %648 = vmatpush1.msra.mxu0 0.0
    %649 = vmatprep.subr.mxu0 0.0
    %650 = vmatpush1.msra.mxu0 0.0
    %651 = vmatprep.subr.mxu0 0.0
    %652 = vmatpush1.msra.mxu0 0.0
    %653 = vmatprep.subr.mxu0 0.0
    %654 = vmatpush1.msra.mxu0 0.0
    %655 = vmatprep.subr.mxu0 0.0
    %656 = vmatpush1.msra.mxu0 0.0
    %657 = vmatprep.subr.mxu0 0.0
    %658 = vmatpush1.msra.mxu0 0.0
    %659 = vmatprep.subr.mxu0 0.0
    %660 = vmatpush1.msra.mxu0 0.0
    %661 = vmatprep.subr.mxu0 0.0
    %662 = vmatpush1.msra.mxu0 0.0
    %663 = vmatprep.subr.mxu0 0.0
    %664 = vmatpush1.msra.mxu0 0.0
    %665 = vmatprep.subr.mxu0 0.0
    %666 = vmatpush1.msra.mxu0 0.0
    %667 = vmatprep.subr.mxu0 0.0
    %668 = vmatpush1.msra.mxu0 0.0
    %669 = vmatprep.subr.mxu0 0.0
    %670 = vmatpush1.msra.mxu0 0.0
    %671 = vmatprep.subr.mxu0 0.0
    %672 = vmatpush1.msra.mxu0 0.0
    %673 = vmatprep.subr.mxu0 0.0
    %674 = vmatpush1.msra.mxu0 0.0
    %675 = vmatprep.subr.mxu0 0.0
    %676 = vmatpush1.msra.mxu0 0.0
    %677 = vmatprep.subr.mxu0 0.0
    %678 = vmatpush1.msra.mxu0 0.0
    %679 = vmatprep.subr.mxu0 0.0
    %680 = vmatpush1.msra.mxu0 0.0
    %681 = vmatprep.subr.mxu0 0.0
    %682 = vmatpush1.msra.mxu0 0.0
    %683 = vmatprep.subr.mxu0 0.0
    %684 = vmatpush1.msra.mxu0 0.0
    %685 = vmatprep.subr.mxu0 0.0
    %686 = vmatpush1.msra.mxu0 0.0
    %687 = vmatprep.subr.mxu0 0.0
    %688 = vmatpush1.msra.mxu0 0.0
    %689 = vmatprep.subr.mxu0 0.0
    %690 = vmatpush1.msra.mxu0 0.0
    %691 = vmatprep.subr.mxu0 0.0
    %692 = vmatpush1.msra.mxu0 0.0
    %693 = vmatprep.mubr.f32.mxu0 0.0
    %694 = vmatmul.mubr.f32.gmra.mrb[0].mxu0 %v618
    %v695 = vpop.f32.mrb[0].mxu0
    %v696 = vadd.f32 0.0, %v695
    %v697 = vpop.f32.mrb[0].mxu0
    %698 = vmatprep.mubr.f32.mxu0 0.0
    %699 = vmatmul.mubr.f32.gmra.mrb[0].mxu0 %v621
    %v700 = vpop.f32.mrb[0].mxu0
    %v701 = vadd.f32 0.0, %v700
    %v702 = vpop.f32.mrb[0].mxu0
    %703 = vmatprep.mubr.f32.mxu0 0.0
    %704 = vmatmul.mubr.f32.gmra.mrb[0].mxu0 %v624
    %v705 = vpop.f32.mrb[0].mxu0
    %v706 = vadd.f32 0.0, %v705
    %v707 = vpop.f32.mrb[0].mxu0
    %708 = vmatprep.mubr.f32.mxu0 0.0
    %709 = vmatmul.mubr.f32.gmra.mrb[0].mxu0 %v627
    %v710 = vpop.f32.mrb[0].mxu0
    %v711 = vadd.f32 0.0, %v710
    %v712 = vpop.f32.mrb[0].mxu0
    %713 = vdwg.mxu0
    %714 = vmatprep.subr.mxu0 0.0
    %715 = vmatpush1.msra.mxu0 %v405
    %716 = vmatprep.subr.mxu0 0.0
    %717 = vmatpush1.msra.mxu0 %v410
    %718 = vmatprep.subr.mxu0 0.0
    %719 = vmatpush1.msra.mxu0 %v415
    %720 = vmatprep.subr.mxu0 0.0
    %721 = vmatpush1.msra.mxu0 %v420
    %722 = vmatprep.subr.mxu0 0.0
    %723 = vmatpush1.msra.mxu0 0.0
    %724 = vmatprep.subr.mxu0 0.0
    %725 = vmatpush1.msra.mxu0 0.0
    %726 = vmatprep.subr.mxu0 0.0
    %727 = vmatpush1.msra.mxu0 0.0
    %728 = vmatprep.subr.mxu0 0.0
    %729 = vmatpush1.msra.mxu0 0.0
    %730 = vmatprep.subr.mxu0 0.0
    %731 = vmatpush1.msra.mxu0 0.0
    %732 = vmatprep.subr.mxu0 0.0
    %733 = vmatpush1.msra.mxu0 0.0
    %734 = vmatprep.subr.mxu0 0.0
    %735 = vmatpush1.msra.mxu0 0.0
    %736 = vmatprep.subr.mxu0 0.0
    %737 = vmatpush1.msra.mxu0 0.0
    %738 = vmatprep.subr.mxu0 0.0
    %739 = vmatpush1.msra.mxu0 0.0
    %740 = vmatprep.subr.mxu0 0.0
    %741 = vmatpush1.msra.mxu0 0.0
    %742 = vmatprep.subr.mxu0 0.0
    %743 = vmatpush1.msra.mxu0 0.0
    %744 = vmatprep.subr.mxu0 0.0
    %745 = vmatpush1.msra.mxu0 0.0
    %746 = vmatprep.subr.mxu0 0.0
    %747 = vmatpush1.msra.mxu0 0.0
    %748 = vmatprep.subr.mxu0 0.0
    %749 = vmatpush1.msra.mxu0 0.0
    %750 = vmatprep.subr.mxu0 0.0
    %751 = vmatpush1.msra.mxu0 0.0
    %752 = vmatprep.subr.mxu0 0.0
    %753 = vmatpush1.msra.mxu0 0.0
    %754 = vmatprep.subr.mxu0 0.0
    %755 = vmatpush1.msra.mxu0 0.0
    %756 = vmatprep.subr.mxu0 0.0
    %757 = vmatpush1.msra.mxu0 0.0
    %758 = vmatprep.subr.mxu0 0.0
    %759 = vmatpush1.msra.mxu0 0.0
    %760 = vmatprep.subr.mxu0 0.0
    %761 = vmatpush1.msra.mxu0 0.0
    %762 = vmatprep.subr.mxu0 0.0
    %763 = vmatpush1.msra.mxu0 0.0
    %764 = vmatprep.subr.mxu0 0.0
    %765 = vmatpush1.msra.mxu0 0.0
    %766 = vmatprep.subr.mxu0 0.0
    %767 = vmatpush1.msra.mxu0 0.0
    %768 = vmatprep.subr.mxu0 0.0
    %769 = vmatpush1.msra.mxu0 0.0
    %770 = vmatprep.subr.mxu0 0.0
    %771 = vmatpush1.msra.mxu0 0.0
    %772 = vmatprep.subr.mxu0 0.0
    %773 = vmatpush1.msra.mxu0 0.0
    %774 = vmatprep.subr.mxu0 0.0
    %775 = vmatpush1.msra.mxu0 0.0
    %776 = vmatprep.subr.mxu0 0.0
    %777 = vmatpush1.msra.mxu0 0.0
    %778 = vmatprep.mubr.f32.mxu0 0.0
    %779 = vmatmul.mubr.f32.gmra.mrb[0].mxu0 %v521
    %v780 = vpop.f32.mrb[0].mxu0
    %v781 = vadd.f32 0.0, %v780
    %v782 = vpop.f32.mrb[0].mxu0
    %783 = vmatprep.mubr.f32.mxu0 0.0
    %784 = vmatmul.mubr.f32.gmra.mrb[0].mxu0 %v524
    %v785 = vpop.f32.mrb[0].mxu0
    %v786 = vadd.f32 0.0, %v785
    %v787 = vpop.f32.mrb[0].mxu0
    %788 = vmatprep.mubr.f32.mxu0 0.0
    %789 = vmatmul.mubr.f32.gmra.mrb[0].mxu0 %v527
    %v790 = vpop.f32.mrb[0].mxu0
    %v791 = vadd.f32 0.0, %v790
    %v792 = vpop.f32.mrb[0].mxu0
    %793 = vmatprep.mubr.f32.mxu0 0.0
    %794 = vmatmul.mubr.f32.gmra.mrb[0].mxu0 %v530
    %v795 = vpop.f32.mrb[0].mxu0
    %v796 = vadd.f32 0.0, %v795
    %v797 = vpop.f32.mrb[0].mxu0
    %798 = vdwg.mxu0
    %799 = vmatprep.subr.mxu0 0.0
    %800 = vmatpush1.msra.mxu0 %v502
    %801 = vmatprep.subr.mxu0 0.0
    %802 = vmatpush1.msra.mxu0 %v507
    %803 = vmatprep.subr.mxu0 0.0
    %804 = vmatpush1.msra.mxu0 %v512
    %805 = vmatprep.subr.mxu0 0.0
    %806 = vmatpush1.msra.mxu0 %v517
    %807 = vmatprep.subr.mxu0 0.0
    %808 = vmatpush1.msra.mxu0 0.0
    %809 = vmatprep.subr.mxu0 0.0
    %810 = vmatpush1.msra.mxu0 0.0
    %811 = vmatprep.subr.mxu0 0.0
    %812 = vmatpush1.msra.mxu0 0.0
    %813 = vmatprep.subr.mxu0 0.0
    %814 = vmatpush1.msra.mxu0 0.0
    %815 = vmatprep.subr.mxu0 0.0
    %816 = vmatpush1.msra.mxu0 0.0
    %817 = vmatprep.subr.mxu0 0.0
    %818 = vmatpush1.msra.mxu0 0.0
    %819 = vmatprep.subr.mxu0 0.0
    %820 = vmatpush1.msra.mxu0 0.0
    %821 = vmatprep.subr.mxu0 0.0
    %822 = vmatpush1.msra.mxu0 0.0
    %823 = vmatprep.subr.mxu0 0.0
    %824 = vmatpush1.msra.mxu0 0.0
    %825 = vmatprep.subr.mxu0 0.0
    %826 = vmatpush1.msra.mxu0 0.0
    %827 = vmatprep.subr.mxu0 0.0
    %828 = vmatpush1.msra.mxu0 0.0
    %829 = vmatprep.subr.mxu0 0.0
    %830 = vmatpush1.msra.mxu0 0.0
    %831 = vmatprep.subr.mxu0 0.0
    %832 = vmatpush1.msra.mxu0 0.0
    %833 = vmatprep.subr.mxu0 0.0
    %834 = vmatpush1.msra.mxu0 0.0
    %835 = vmatprep.subr.mxu0 0.0
    %836 = vmatpush1.msra.mxu0 0.0
    %837 = vmatprep.subr.mxu0 0.0
    %838 = vmatpush1.msra.mxu0 0.0
    %839 = vmatprep.subr.mxu0 0.0
    %840 = vmatpush1.msra.mxu0 0.0
    %841 = vmatprep.subr.mxu0 0.0
    %842 = vmatpush1.msra.mxu0 0.0
    %843 = vmatprep.subr.mxu0 0.0
    %844 = vmatpush1.msra.mxu0 0.0
    %845 = vmatprep.subr.mxu0 0.0
    %846 = vmatpush1.msra.mxu0 0.0
    %847 = vmatprep.subr.mxu0 0.0
    %848 = vmatpush1.msra.mxu0 0.0
    %849 = vmatprep.subr.mxu0 0.0
    %850 = vmatpush1.msra.mxu0 0.0
    %851 = vmatprep.subr.mxu0 0.0
    %852 = vmatpush1.msra.mxu0 0.0
    %853 = vmatprep.subr.mxu0 0.0
    %854 = vmatpush1.msra.mxu0 0.0
    %855 = vmatprep.subr.mxu0 0.0
    %856 = vmatpush1.msra.mxu0 0.0
    %857 = vmatprep.subr.mxu0 0.0
    %858 = vmatpush1.msra.mxu0 0.0
    %859 = vmatprep.subr.mxu0 0.0
    %860 = vmatpush1.msra.mxu0 0.0
    %861 = vmatprep.subr.mxu0 0.0
    %862 = vmatpush1.msra.mxu0 0.0
    %863 = vmatprep.mubr.f32.mxu0 0.0
    %864 = vmatmul.mubr.f32.gmra.mrb[0].mxu0 %v618
    %v865 = vpop.f32.mrb[0].mxu0
    %v866 = vadd.f32 0.0, %v865
    %v867 = vpop.f32.mrb[0].mxu0
    %868 = vmatprep.mubr.f32.mxu0 0.0
    %869 = vmatmul.mubr.f32.gmra.mrb[0].mxu0 %v621
    %v870 = vpop.f32.mrb[0].mxu0
    %v871 = vadd.f32 0.0, %v870
    %v872 = vpop.f32.mrb[0].mxu0
    %873 = vmatprep.mubr.f32.mxu0 0.0
    %874 = vmatmul.mubr.f32.gmra.mrb[0].mxu0 %v624
    %v875 = vpop.f32.mrb[0].mxu0
    %v876 = vadd.f32 0.0, %v875
    %v877 = vpop.f32.mrb[0].mxu0
    %878 = vmatprep.mubr.f32.mxu0 0.0
    %879 = vmatmul.mubr.f32.gmra.mrb[0].mxu0 %v627
    %v880 = vpop.f32.mrb[0].mxu0
    %v881 = vadd.f32 0.0, %v880
    %v882 = vpop.f32.mrb[0].mxu0
    %883 = vdwg.mxu0
    %v885 = vsel %vm154, %v318, 0
    %v888 = vsel %vm154, %v319, 0
    %v891 = vsel %vm154, %v320, 0
    %v894 = vsel %vm154, %v321, 0
    %896 = vmatprep.subr.mxu0 0.0
    %897 = vmatpush1.msra.mxu0 %v318
    %898 = vmatprep.subr.mxu0 0.0
    %899 = vmatpush1.msra.mxu0 %v319
    %900 = vmatprep.subr.mxu0 0.0
    %901 = vmatpush1.msra.mxu0 %v320
    %902 = vmatprep.subr.mxu0 0.0
    %903 = vmatpush1.msra.mxu0 %v321
    %904 = vmatprep.subr.mxu0 0.0
    %905 = vmatpush1.msra.mxu0 0.0
    %906 = vmatprep.subr.mxu0 0.0
    %907 = vmatpush1.msra.mxu0 0.0
    %908 = vmatprep.subr.mxu0 0.0
    %909 = vmatpush1.msra.mxu0 0.0
    %910 = vmatprep.subr.mxu0 0.0
    %911 = vmatpush1.msra.mxu0 0.0
    %912 = vmatprep.subr.mxu0 0.0
    %913 = vmatpush1.msra.mxu0 0.0
    %914 = vmatprep.subr.mxu0 0.0
    %915 = vmatpush1.msra.mxu0 0.0
    %916 = vmatprep.subr.mxu0 0.0
    %917 = vmatpush1.msra.mxu0 0.0
    %918 = vmatprep.subr.mxu0 0.0
    %919 = vmatpush1.msra.mxu0 0.0
    %920 = vmatprep.subr.mxu0 0.0
    %921 = vmatpush1.msra.mxu0 0.0
    %922 = vmatprep.subr.mxu0 0.0
    %923 = vmatpush1.msra.mxu0 0.0
    %924 = vmatprep.subr.mxu0 0.0
    %925 = vmatpush1.msra.mxu0 0.0
    %926 = vmatprep.subr.mxu0 0.0
    %927 = vmatpush1.msra.mxu0 0.0
    %928 = vmatprep.subr.mxu0 0.0
    %929 = vmatpush1.msra.mxu0 0.0
    %930 = vmatprep.subr.mxu0 0.0
    %931 = vmatpush1.msra.mxu0 0.0
    %932 = vmatprep.subr.mxu0 0.0
    %933 = vmatpush1.msra.mxu0 0.0
    %934 = vmatprep.subr.mxu0 0.0
    %935 = vmatpush1.msra.mxu0 0.0
    %936 = vmatprep.subr.mxu0 0.0
    %937 = vmatpush1.msra.mxu0 0.0
    %938 = vmatprep.subr.mxu0 0.0
    %939 = vmatpush1.msra.mxu0 0.0
    %940 = vmatprep.subr.mxu0 0.0
    %941 = vmatpush1.msra.mxu0 0.0
    %942 = vmatprep.subr.mxu0 0.0
    %943 = vmatpush1.msra.mxu0 0.0
    %944 = vmatprep.subr.mxu0 0.0
    %945 = vmatpush1.msra.mxu0 0.0
    %946 = vmatprep.subr.mxu0 0.0
    %947 = vmatpush1.msra.mxu0 0.0
    %948 = vmatprep.subr.mxu0 0.0
    %949 = vmatpush1.msra.mxu0 0.0
    %950 = vmatprep.subr.mxu0 0.0
    %951 = vmatpush1.msra.mxu0 0.0
    %952 = vmatprep.subr.mxu0 0.0
    %953 = vmatpush1.msra.mxu0 0.0
    %954 = vmatprep.subr.mxu0 0.0
    %955 = vmatpush1.msra.mxu0 0.0
    %956 = vmatprep.subr.mxu0 0.0
    %957 = vmatpush1.msra.mxu0 0.0
    %958 = vmatprep.subr.mxu0 0.0
    %959 = vmatpush1.msra.mxu0 0.0
    %960 = vmatprep.mubr.f32.mxu0 0.0
    %961 = vmatmul.mubr.f32.gmra.mrb[0].mxu0 %v885
    %v962 = vpop.f32.mrb[0].mxu0
    %v963 = vadd.f32 0.0, %v962
    %v964 = vpop.f32.mrb[0].mxu0
    %965 = vmatprep.mubr.f32.mxu0 0.0
    %966 = vmatmul.mubr.f32.gmra.mrb[0].mxu0 %v888
    %v967 = vpop.f32.mrb[0].mxu0
    %v968 = vadd.f32 0.0, %v967
    %v969 = vpop.f32.mrb[0].mxu0
    %970 = vmatprep.mubr.f32.mxu0 0.0
    %971 = vmatmul.mubr.f32.gmra.mrb[0].mxu0 %v891
    %v972 = vpop.f32.mrb[0].mxu0
    %v973 = vadd.f32 0.0, %v972
    %v974 = vpop.f32.mrb[0].mxu0
    %975 = vmatprep.mubr.f32.mxu0 0.0
    %976 = vmatmul.mubr.f32.gmra.mrb[0].mxu0 %v894
    %v977 = vpop.f32.mrb[0].mxu0
    %v978 = vadd.f32 0.0, %v977
    %v979 = vpop.f32.mrb[0].mxu0
    %980 = vdwg.mxu0
    %v982 = vsel %vm154, %v322, 0
    %v985 = vsel %vm154, %v323, 0
    %v988 = vsel %vm154, %v324, 0
    %v991 = vsel %vm154, %v325, 0
    %993 = vmatprep.subr.mxu0 0.0
    %994 = vmatpush1.msra.mxu0 %v322
    %995 = vmatprep.subr.mxu0 0.0
    %996 = vmatpush1.msra.mxu0 %v323
    %997 = vmatprep.subr.mxu0 0.0
    %998 = vmatpush1.msra.mxu0 %v324
    %999 = vmatprep.subr.mxu0 0.0
    %1000 = vmatpush1.msra.mxu0 %v325
    %1001 = vmatprep.subr.mxu0 0.0
    %1002 = vmatpush1.msra.mxu0 0.0
    %1003 = vmatprep.subr.mxu0 0.0
    %1004 = vmatpush1.msra.mxu0 0.0
    %1005 = vmatprep.subr.mxu0 0.0
    %1006 = vmatpush1.msra.mxu0 0.0
    %1007 = vmatprep.subr.mxu0 0.0
    %1008 = vmatpush1.msra.mxu0 0.0
    %1009 = vmatprep.subr.mxu0 0.0
    %1010 = vmatpush1.msra.mxu0 0.0
    %1011 = vmatprep.subr.mxu0 0.0
    %1012 = vmatpush1.msra.mxu0 0.0
    %1013 = vmatprep.subr.mxu0 0.0
    %1014 = vmatpush1.msra.mxu0 0.0
    %1015 = vmatprep.subr.mxu0 0.0
    %1016 = vmatpush1.msra.mxu0 0.0
    %1017 = vmatprep.subr.mxu0 0.0
    %1018 = vmatpush1.msra.mxu0 0.0
    %1019 = vmatprep.subr.mxu0 0.0
    %1020 = vmatpush1.msra.mxu0 0.0
    %1021 = vmatprep.subr.mxu0 0.0
    %1022 = vmatpush1.msra.mxu0 0.0
    %1023 = vmatprep.subr.mxu0 0.0
    %1024 = vmatpush1.msra.mxu0 0.0
    %1025 = vmatprep.subr.mxu0 0.0
    %1026 = vmatpush1.msra.mxu0 0.0
    %1027 = vmatprep.subr.mxu0 0.0
    %1028 = vmatpush1.msra.mxu0 0.0
    %1029 = vmatprep.subr.mxu0 0.0
    %1030 = vmatpush1.msra.mxu0 0.0
    %1031 = vmatprep.subr.mxu0 0.0
    %1032 = vmatpush1.msra.mxu0 0.0
    %1033 = vmatprep.subr.mxu0 0.0
    %1034 = vmatpush1.msra.mxu0 0.0
    %1035 = vmatprep.subr.mxu0 0.0
    %1036 = vmatpush1.msra.mxu0 0.0
    %1037 = vmatprep.subr.mxu0 0.0
    %1038 = vmatpush1.msra.mxu0 0.0
    %1039 = vmatprep.subr.mxu0 0.0
    %1040 = vmatpush1.msra.mxu0 0.0
    %1041 = vmatprep.subr.mxu0 0.0
    %1042 = vmatpush1.msra.mxu0 0.0
    %1043 = vmatprep.subr.mxu0 0.0
    %1044 = vmatpush1.msra.mxu0 0.0
    %1045 = vmatprep.subr.mxu0 0.0
    %1046 = vmatpush1.msra.mxu0 0.0
    %1047 = vmatprep.subr.mxu0 0.0
    %1048 = vmatpush1.msra.mxu0 0.0
    %1049 = vmatprep.subr.mxu0 0.0
    %1050 = vmatpush1.msra.mxu0 0.0
    %1051 = vmatprep.subr.mxu0 0.0
    %1052 = vmatpush1.msra.mxu0 0.0
    %1053 = vmatprep.subr.mxu0 0.0
    %1054 = vmatpush1.msra.mxu0 0.0
    %1055 = vmatprep.subr.mxu0 0.0
    %1056 = vmatpush1.msra.mxu0 0.0
    %1057 = vmatprep.mubr.f32.mxu0 0.0
    %1058 = vmatmul.mubr.f32.gmra.mrb[0].mxu0 %v982
    %v1059 = vpop.f32.mrb[0].mxu0
    %v1060 = vadd.f32 0.0, %v1059
    %v1061 = vpop.f32.mrb[0].mxu0
    %1062 = vmatprep.mubr.f32.mxu0 0.0
    %1063 = vmatmul.mubr.f32.gmra.mrb[0].mxu0 %v985
    %v1064 = vpop.f32.mrb[0].mxu0
    %v1065 = vadd.f32 0.0, %v1064
    %v1066 = vpop.f32.mrb[0].mxu0
    %1067 = vmatprep.mubr.f32.mxu0 0.0
    %1068 = vmatmul.mubr.f32.gmra.mrb[0].mxu0 %v988
    %v1069 = vpop.f32.mrb[0].mxu0
    %v1070 = vadd.f32 0.0, %v1069
    %v1071 = vpop.f32.mrb[0].mxu0
    %1072 = vmatprep.mubr.f32.mxu0 0.0
    %1073 = vmatmul.mubr.f32.gmra.mrb[0].mxu0 %v991
    %v1074 = vpop.f32.mrb[0].mxu0
    %v1075 = vadd.f32 0.0, %v1074
    %v1076 = vpop.f32.mrb[0].mxu0
    %1077 = vdwg.mxu0
    %v1079 = vsel %vm154, %v963, 0
    %v1082 = vsel %vm154, %v968, 0
    %v1085 = vsel %vm154, %v973, 0
    %v1088 = vsel %vm154, %v978, 0
    %1090 = vmatprep.subr.mxu0 0.0
    %1091 = vmatpush1.msra.mxu0 %v963
    %1092 = vmatprep.subr.mxu0 0.0
    %1093 = vmatpush1.msra.mxu0 %v968
    %1094 = vmatprep.subr.mxu0 0.0
    %1095 = vmatpush1.msra.mxu0 %v973
    %1096 = vmatprep.subr.mxu0 0.0
    %1097 = vmatpush1.msra.mxu0 %v978
    %1098 = vmatprep.subr.mxu0 0.0
    %1099 = vmatpush1.msra.mxu0 0.0
    %1100 = vmatprep.subr.mxu0 0.0
    %1101 = vmatpush1.msra.mxu0 0.0
    %1102 = vmatprep.subr.mxu0 0.0
    %1103 = vmatpush1.msra.mxu0 0.0
    %1104 = vmatprep.subr.mxu0 0.0
    %1105 = vmatpush1.msra.mxu0 0.0
    %1106 = vmatprep.subr.mxu0 0.0
    %1107 = vmatpush1.msra.mxu0 0.0
    %1108 = vmatprep.subr.mxu0 0.0
    %1109 = vmatpush1.msra.mxu0 0.0
    %1110 = vmatprep.subr.mxu0 0.0
    %1111 = vmatpush1.msra.mxu0 0.0
    %1112 = vmatprep.subr.mxu0 0.0
    %1113 = vmatpush1.msra.mxu0 0.0
    %1114 = vmatprep.subr.mxu0 0.0
    %1115 = vmatpush1.msra.mxu0 0.0
    %1116 = vmatprep.subr.mxu0 0.0
    %1117 = vmatpush1.msra.mxu0 0.0
    %1118 = vmatprep.subr.mxu0 0.0
    %1119 = vmatpush1.msra.mxu0 0.0
    %1120 = vmatprep.subr.mxu0 0.0
    %1121 = vmatpush1.msra.mxu0 0.0
    %1122 = vmatprep.subr.mxu0 0.0
    %1123 = vmatpush1.msra.mxu0 0.0
    %1124 = vmatprep.subr.mxu0 0.0
    %1125 = vmatpush1.msra.mxu0 0.0
    %1126 = vmatprep.subr.mxu0 0.0
    %1127 = vmatpush1.msra.mxu0 0.0
    %1128 = vmatprep.subr.mxu0 0.0
    %1129 = vmatpush1.msra.mxu0 0.0
    %1130 = vmatprep.subr.mxu0 0.0
    %1131 = vmatpush1.msra.mxu0 0.0
    %1132 = vmatprep.subr.mxu0 0.0
    %1133 = vmatpush1.msra.mxu0 0.0
    %1134 = vmatprep.subr.mxu0 0.0
    %1135 = vmatpush1.msra.mxu0 0.0
    %1136 = vmatprep.subr.mxu0 0.0
    %1137 = vmatpush1.msra.mxu0 0.0
    %1138 = vmatprep.subr.mxu0 0.0
    %1139 = vmatpush1.msra.mxu0 0.0
    %1140 = vmatprep.subr.mxu0 0.0
    %1141 = vmatpush1.msra.mxu0 0.0
    %1142 = vmatprep.subr.mxu0 0.0
    %1143 = vmatpush1.msra.mxu0 0.0
    %1144 = vmatprep.subr.mxu0 0.0
    %1145 = vmatpush1.msra.mxu0 0.0
    %1146 = vmatprep.subr.mxu0 0.0
    %1147 = vmatpush1.msra.mxu0 0.0
    %1148 = vmatprep.subr.mxu0 0.0
    %1149 = vmatpush1.msra.mxu0 0.0
    %1150 = vmatprep.subr.mxu0 0.0
    %1151 = vmatpush1.msra.mxu0 0.0
    %1152 = vmatprep.subr.mxu0 0.0
    %1153 = vmatpush1.msra.mxu0 0.0
    %1154 = vmatprep.mubr.f32.mxu0 0.0
    %1155 = vmatmul.mubr.f32.gmra.mrb[0].mxu0 %v1079
    %v1156 = vpop.f32.mrb[0].mxu0
    %v1157 = vadd.f32 0.0, %v1156
    %v1158 = vpop.f32.mrb[0].mxu0
    %1159 = vmatprep.mubr.f32.mxu0 0.0
    %1160 = vmatmul.mubr.f32.gmra.mrb[0].mxu0 %v1082
    %v1161 = vpop.f32.mrb[0].mxu0
    %v1162 = vadd.f32 0.0, %v1161
    %v1163 = vpop.f32.mrb[0].mxu0
    %1164 = vmatprep.mubr.f32.mxu0 0.0
    %1165 = vmatmul.mubr.f32.gmra.mrb[0].mxu0 %v1085
    %v1166 = vpop.f32.mrb[0].mxu0
    %v1167 = vadd.f32 0.0, %v1166
    %v1168 = vpop.f32.mrb[0].mxu0
    %1169 = vmatprep.mubr.f32.mxu0 0.0
    %1170 = vmatmul.mubr.f32.gmra.mrb[0].mxu0 %v1088
    %v1171 = vpop.f32.mrb[0].mxu0
    %v1172 = vadd.f32 0.0, %v1171
    %v1173 = vpop.f32.mrb[0].mxu0
    %1174 = vdwg.mxu0
    %v1176 = vsel %vm154, %v1060, 0
    %v1179 = vsel %vm154, %v1065, 0
    %v1182 = vsel %vm154, %v1070, 0
    %v1185 = vsel %vm154, %v1075, 0
    %1187 = vmatprep.subr.mxu0 0.0
    %1188 = vmatpush1.msra.mxu0 %v1060
    %1189 = vmatprep.subr.mxu0 0.0
    %1190 = vmatpush1.msra.mxu0 %v1065
    %1191 = vmatprep.subr.mxu0 0.0
    %1192 = vmatpush1.msra.mxu0 %v1070
    %1193 = vmatprep.subr.mxu0 0.0
    %1194 = vmatpush1.msra.mxu0 %v1075
    %1195 = vmatprep.subr.mxu0 0.0
    %1196 = vmatpush1.msra.mxu0 0.0
    %1197 = vmatprep.subr.mxu0 0.0
    %1198 = vmatpush1.msra.mxu0 0.0
    %1199 = vmatprep.subr.mxu0 0.0
    %1200 = vmatpush1.msra.mxu0 0.0
    %1201 = vmatprep.subr.mxu0 0.0
    %1202 = vmatpush1.msra.mxu0 0.0
    %1203 = vmatprep.subr.mxu0 0.0
    %1204 = vmatpush1.msra.mxu0 0.0
    %1205 = vmatprep.subr.mxu0 0.0
    %1206 = vmatpush1.msra.mxu0 0.0
    %1207 = vmatprep.subr.mxu0 0.0
    %1208 = vmatpush1.msra.mxu0 0.0
    %1209 = vmatprep.subr.mxu0 0.0
    %1210 = vmatpush1.msra.mxu0 0.0
    %1211 = vmatprep.subr.mxu0 0.0
    %1212 = vmatpush1.msra.mxu0 0.0
    %1213 = vmatprep.subr.mxu0 0.0
    %1214 = vmatpush1.msra.mxu0 0.0
    %1215 = vmatprep.subr.mxu0 0.0
    %1216 = vmatpush1.msra.mxu0 0.0
    %1217 = vmatprep.subr.mxu0 0.0
    %1218 = vmatpush1.msra.mxu0 0.0
    %1219 = vmatprep.subr.mxu0 0.0
    %1220 = vmatpush1.msra.mxu0 0.0
    %1221 = vmatprep.subr.mxu0 0.0
    %1222 = vmatpush1.msra.mxu0 0.0
    %1223 = vmatprep.subr.mxu0 0.0
    %1224 = vmatpush1.msra.mxu0 0.0
    %1225 = vmatprep.subr.mxu0 0.0
    %1226 = vmatpush1.msra.mxu0 0.0
    %1227 = vmatprep.subr.mxu0 0.0
    %1228 = vmatpush1.msra.mxu0 0.0
    %1229 = vmatprep.subr.mxu0 0.0
    %1230 = vmatpush1.msra.mxu0 0.0
    %1231 = vmatprep.subr.mxu0 0.0
    %1232 = vmatpush1.msra.mxu0 0.0
    %1233 = vmatprep.subr.mxu0 0.0
    %1234 = vmatpush1.msra.mxu0 0.0
    %1235 = vmatprep.subr.mxu0 0.0
    %1236 = vmatpush1.msra.mxu0 0.0
    %1237 = vmatprep.subr.mxu0 0.0
    %1238 = vmatpush1.msra.mxu0 0.0
    %1239 = vmatprep.subr.mxu0 0.0
    %1240 = vmatpush1.msra.mxu0 0.0
    %1241 = vmatprep.subr.mxu0 0.0
    %1242 = vmatpush1.msra.mxu0 0.0
    %1243 = vmatprep.subr.mxu0 0.0
    %1244 = vmatpush1.msra.mxu0 0.0
    %1245 = vmatprep.subr.mxu0 0.0
    %1246 = vmatpush1.msra.mxu0 0.0
    %1247 = vmatprep.subr.mxu0 0.0
    %1248 = vmatpush1.msra.mxu0 0.0
    %1249 = vmatprep.subr.mxu0 0.0
    %1250 = vmatpush1.msra.mxu0 0.0
    %1251 = vmatprep.mubr.f32.mxu0 0.0
    %1252 = vmatmul.mubr.f32.gmra.mrb[0].mxu0 %v1176
    %v1253 = vpop.f32.mrb[0].mxu0
    %v1254 = vadd.f32 0.0, %v1253
    %v1255 = vpop.f32.mrb[0].mxu0
    %1256 = vmatprep.mubr.f32.mxu0 0.0
    %1257 = vmatmul.mubr.f32.gmra.mrb[0].mxu0 %v1179
    %v1258 = vpop.f32.mrb[0].mxu0
    %v1259 = vadd.f32 0.0, %v1258
    %v1260 = vpop.f32.mrb[0].mxu0
    %1261 = vmatprep.mubr.f32.mxu0 0.0
    %1262 = vmatmul.mubr.f32.gmra.mrb[0].mxu0 %v1182
    %v1263 = vpop.f32.mrb[0].mxu0
    %v1264 = vadd.f32 0.0, %v1263
    %v1265 = vpop.f32.mrb[0].mxu0
    %1266 = vmatprep.mubr.f32.mxu0 0.0
    %1267 = vmatmul.mubr.f32.gmra.mrb[0].mxu0 %v1185
    %v1268 = vpop.f32.mrb[0].mxu0
    %v1269 = vadd.f32 0.0, %v1268
    %v1270 = vpop.f32.mrb[0].mxu0
    %1271 = vdwg.mxu0
    %v1272 = vmul.f32 %v277, %v318
    %v1273 = vmul.f32 %v278, %v319
    %v1274 = vmul.f32 %v279, %v320
    %v1275 = vmul.f32 %v280, %v321
    %v1276 = vmul.f32 %v281, %v322
    %v1277 = vmul.f32 %v282, %v323
    %v1278 = vmul.f32 %v283, %v324
    %v1279 = vmul.f32 %v284, %v325
    %v1280 = vsel %vm154, %v1272, 0.0
    %1281 = vadd.xlane.f32.xlu0 %v1280
    %v1282 = vpop.xlane.xlu0 %1281
    %v1283 = vsel %vm154, %v1273, 0.0
    %1284 = vadd.xlane.f32.xlu0 %v1283
    %v1285 = vpop.xlane.xlu0 %1284
    %v1286 = vsel %vm154, %v1274, 0.0
    %1287 = vadd.xlane.f32.xlu0 %v1286
    %v1288 = vpop.xlane.xlu0 %1287
    %v1289 = vsel %vm154, %v1275, 0.0
    %1290 = vadd.xlane.f32.xlu0 %v1289
    %v1291 = vpop.xlane.xlu0 %1290
    %v1292 = vsel %vm154, %v1276, 0.0
    %1293 = vadd.xlane.f32.xlu0 %v1292
    %v1294 = vpop.xlane.xlu0 %1293
    %v1295 = vsel %vm154, %v1277, 0.0
    %1296 = vadd.xlane.f32.xlu0 %v1295
    %v1297 = vpop.xlane.xlu0 %1296
    %v1298 = vsel %vm154, %v1278, 0.0
    %1299 = vadd.xlane.f32.xlu0 %v1298
    %v1300 = vpop.xlane.xlu0 %1299
    %v1301 = vsel %vm154, %v1279, 0.0
    %1302 = vadd.xlane.f32.xlu0 %v1301
    %v1303 = vpop.xlane.xlu0 %1302
    %v1312 = vlaneseq
    %v1313 = vand.u32 %v1312, 127
    %v1314 = vlaneseq
    %v1315 = vshrl.u32 %v1314, 7
    %v1316 = vsub.s32 %v1313, %v1315
    %v1317 = vrot.slane %v1282, %v1316
    %v1318 = vadd.s32 %v1313, 4294967288
    %v1319 = vlaneseq
    %v1320 = vshrl.u32 %v1319, 7
    %v1321 = vsub.s32 %v1318, %v1320
    %v1322 = vrot.slane %v1285, %v1321
    %vm1323 = vcmask 130112
    %v1324 = vsel %vm1323, %v1322, %v1317
    %v1325 = vadd.s32 %v1313, 4294967280
    %v1326 = vlaneseq
    %v1327 = vshrl.u32 %v1326, 7
    %v1328 = vsub.s32 %v1325, %v1327
    %v1329 = vrot.slane %v1288, %v1328
    %vm1330 = vcmask 195712
    %v1331 = vsel %vm1330, %v1329, %v1324
    %v1332 = vadd.s32 %v1313, 4294967272
    %v1333 = vlaneseq
    %v1334 = vshrl.u32 %v1333, 7
    %v1335 = vsub.s32 %v1332, %v1334
    %v1336 = vrot.slane %v1291, %v1335
    %vm1337 = vcmask 261312
    %v1338 = vsel %vm1337, %v1336, %v1331
    %v1339 = vlaneseq
    %v1340 = vshrl.u32 %v1339, 7
    %v1341 = vsub.s32 %v1313, %v1340
    %v1342 = vrot.slane %v1294, %v1341
    %v1343 = vlaneseq
    %v1344 = vshrl.u32 %v1343, 7
    %v1345 = vsub.s32 %v1318, %v1344
    %v1346 = vrot.slane %v1297, %v1345
    %v1347 = vsel %vm1323, %v1346, %v1342
    %v1348 = vlaneseq
    %v1349 = vshrl.u32 %v1348, 7
    %v1350 = vsub.s32 %v1325, %v1349
    %v1351 = vrot.slane %v1300, %v1350
    %v1352 = vsel %vm1330, %v1351, %v1347
    %v1353 = vlaneseq
    %v1354 = vshrl.u32 %v1353, 7
    %v1355 = vsub.s32 %v1332, %v1354
    %v1356 = vrot.slane %v1303, %v1355
    %v1357 = vsel %vm1337, %v1356, %v1352
    %vm1358 = vcmask 1041409
    %v1359 = vsel %vm1358, %v1357, %v1338
    %v1361 = vsel %vm235, %v1359, 0.0
    %1362 = vadd.xlane.f32.xlu0 %v1361
    %v1363 = vpop.xlane.xlu0 %1362
    %v1364 = vmul.f32 %v1363, 0.5
    %v1365 = vsub.f32 %v238, %v1364
    %v1366 = vmul.f32 %v405, %v318
    %v1367 = vmul.f32 %v410, %v319
    %v1368 = vmul.f32 %v415, %v320
    %v1369 = vmul.f32 %v420, %v321
    %v1370 = vmul.f32 %v502, %v322
    %v1371 = vmul.f32 %v507, %v323
    %v1372 = vmul.f32 %v512, %v324
    %v1373 = vmul.f32 %v517, %v325
    %v1374 = vsel %vm154, %v1366, 0.0
    %1375 = vadd.xlane.f32.xlu0 %v1374
    %v1376 = vpop.xlane.xlu0 %1375
    %v1377 = vsel %vm154, %v1367, 0.0
    %1378 = vadd.xlane.f32.xlu0 %v1377
    %v1379 = vpop.xlane.xlu0 %1378
    %v1380 = vsel %vm154, %v1368, 0.0
    %1381 = vadd.xlane.f32.xlu0 %v1380
    %v1382 = vpop.xlane.xlu0 %1381
    %v1383 = vsel %vm154, %v1369, 0.0
    %1384 = vadd.xlane.f32.xlu0 %v1383
    %v1385 = vpop.xlane.xlu0 %1384
    %v1386 = vsel %vm154, %v1370, 0.0
    %1387 = vadd.xlane.f32.xlu0 %v1386
    %v1388 = vpop.xlane.xlu0 %1387
    %v1389 = vsel %vm154, %v1371, 0.0
    %1390 = vadd.xlane.f32.xlu0 %v1389
    %v1391 = vpop.xlane.xlu0 %1390
    %v1392 = vsel %vm154, %v1372, 0.0
    %1393 = vadd.xlane.f32.xlu0 %v1392
    %v1394 = vpop.xlane.xlu0 %1393
    %v1395 = vsel %vm154, %v1373, 0.0
    %1396 = vadd.xlane.f32.xlu0 %v1395
    %v1397 = vpop.xlane.xlu0 %1396
    %v1406 = vlaneseq
    %v1407 = vshrl.u32 %v1406, 7
    %v1408 = vsub.s32 %v1313, %v1407
    %v1409 = vrot.slane %v1376, %v1408
    %v1410 = vlaneseq
    %v1411 = vshrl.u32 %v1410, 7
    %v1412 = vsub.s32 %v1318, %v1411
    %v1413 = vrot.slane %v1379, %v1412
    %v1414 = vsel %vm1323, %v1413, %v1409
    %v1415 = vlaneseq
    %v1416 = vshrl.u32 %v1415, 7
    %v1417 = vsub.s32 %v1325, %v1416
    %v1418 = vrot.slane %v1382, %v1417
    %v1419 = vsel %vm1330, %v1418, %v1414
    %v1420 = vlaneseq
    %v1421 = vshrl.u32 %v1420, 7
    %v1422 = vsub.s32 %v1332, %v1421
    %v1423 = vrot.slane %v1385, %v1422
    %v1424 = vsel %vm1337, %v1423, %v1419
    %v1425 = vlaneseq
    %v1426 = vshrl.u32 %v1425, 7
    %v1427 = vsub.s32 %v1313, %v1426
    %v1428 = vrot.slane %v1388, %v1427
    %v1429 = vlaneseq
    %v1430 = vshrl.u32 %v1429, 7
    %v1431 = vsub.s32 %v1318, %v1430
    %v1432 = vrot.slane %v1391, %v1431
    %v1433 = vsel %vm1323, %v1432, %v1428
    %v1434 = vlaneseq
    %v1435 = vshrl.u32 %v1434, 7
    %v1436 = vsub.s32 %v1325, %v1435
    %v1437 = vrot.slane %v1394, %v1436
    %v1438 = vsel %vm1330, %v1437, %v1433
    %v1439 = vlaneseq
    %v1440 = vshrl.u32 %v1439, 7
    %v1441 = vsub.s32 %v1332, %v1440
    %v1442 = vrot.slane %v1397, %v1441
    %v1443 = vsel %vm1337, %v1442, %v1438
    %v1444 = vsel %vm1358, %v1443, %v1424
    %v1446 = vsel %vm235, %v1444, 0.0
    %1447 = vadd.xlane.f32.xlu0 %v1446
    %v1448 = vpop.xlane.xlu0 %1447
    %v1449 = vmul.f32 %v1448, 0.33333334
    %v1450 = vadd.f32 %v1365, %v1449
    %v1451 = vmul.f32 %v599, %v318
    %v1452 = vmul.f32 %v604, %v319
    %v1453 = vmul.f32 %v609, %v320
    %v1454 = vmul.f32 %v614, %v321
    %v1455 = vmul.f32 %v696, %v322
    %v1456 = vmul.f32 %v701, %v323
    %v1457 = vmul.f32 %v706, %v324
    %v1458 = vmul.f32 %v711, %v325
    %v1459 = vsel %vm154, %v1451, 0.0
    %1460 = vadd.xlane.f32.xlu0 %v1459
    %v1461 = vpop.xlane.xlu0 %1460
    %v1462 = vsel %vm154, %v1452, 0.0
    %1463 = vadd.xlane.f32.xlu0 %v1462
    %v1464 = vpop.xlane.xlu0 %1463
    %v1465 = vsel %vm154, %v1453, 0.0
    %1466 = vadd.xlane.f32.xlu0 %v1465
    %v1467 = vpop.xlane.xlu0 %1466
    %v1468 = vsel %vm154, %v1454, 0.0
    %1469 = vadd.xlane.f32.xlu0 %v1468
    %v1470 = vpop.xlane.xlu0 %1469
    %v1471 = vsel %vm154, %v1455, 0.0
    %1472 = vadd.xlane.f32.xlu0 %v1471
    %v1473 = vpop.xlane.xlu0 %1472
    %v1474 = vsel %vm154, %v1456, 0.0
    %1475 = vadd.xlane.f32.xlu0 %v1474
    %v1476 = vpop.xlane.xlu0 %1475
    %v1477 = vsel %vm154, %v1457, 0.0
    %1478 = vadd.xlane.f32.xlu0 %v1477
    %v1479 = vpop.xlane.xlu0 %1478
    %v1480 = vsel %vm154, %v1458, 0.0
    %1481 = vadd.xlane.f32.xlu0 %v1480
    %v1482 = vpop.xlane.xlu0 %1481
    %v1491 = vlaneseq
    %v1492 = vshrl.u32 %v1491, 7
    %v1493 = vsub.s32 %v1313, %v1492
    %v1494 = vrot.slane %v1461, %v1493
    %v1495 = vlaneseq
    %v1496 = vshrl.u32 %v1495, 7
    %v1497 = vsub.s32 %v1318, %v1496
    %v1498 = vrot.slane %v1464, %v1497
    %v1499 = vsel %vm1323, %v1498, %v1494
    %v1500 = vlaneseq
    %v1501 = vshrl.u32 %v1500, 7
    %v1502 = vsub.s32 %v1325, %v1501
    %v1503 = vrot.slane %v1467, %v1502
    %v1504 = vsel %vm1330, %v1503, %v1499
    %v1505 = vlaneseq
    %v1506 = vshrl.u32 %v1505, 7
    %v1507 = vsub.s32 %v1332, %v1506
    %v1508 = vrot.slane %v1470, %v1507
    %v1509 = vsel %vm1337, %v1508, %v1504
    %v1510 = vlaneseq
    %v1511 = vshrl.u32 %v1510, 7
    %v1512 = vsub.s32 %v1313, %v1511
    %v1513 = vrot.slane %v1473, %v1512
    %v1514 = vlaneseq
    %v1515 = vshrl.u32 %v1514, 7
    %v1516 = vsub.s32 %v1318, %v1515
    %v1517 = vrot.slane %v1476, %v1516
    %v1518 = vsel %vm1323, %v1517, %v1513
    %v1519 = vlaneseq
    %v1520 = vshrl.u32 %v1519, 7
    %v1521 = vsub.s32 %v1325, %v1520
    %v1522 = vrot.slane %v1479, %v1521
    %v1523 = vsel %vm1330, %v1522, %v1518
    %v1524 = vlaneseq
    %v1525 = vshrl.u32 %v1524, 7
    %v1526 = vsub.s32 %v1332, %v1525
    %v1527 = vrot.slane %v1482, %v1526
    %v1528 = vsel %vm1337, %v1527, %v1523
    %v1529 = vsel %vm1358, %v1528, %v1509
    %v1531 = vsel %vm235, %v1529, 0.0
    %1532 = vadd.xlane.f32.xlu0 %v1531
    %v1533 = vpop.xlane.xlu0 %1532
    %v1534 = vmul.f32 %v1533, 0.25
    %v1535 = vsub.f32 %v1450, %v1534
    %v1536 = vmul.f32 %v781, %v318
    %v1537 = vmul.f32 %v786, %v319
    %v1538 = vmul.f32 %v791, %v320
    %v1539 = vmul.f32 %v796, %v321
    %v1540 = vmul.f32 %v866, %v322
    %v1541 = vmul.f32 %v871, %v323
    %v1542 = vmul.f32 %v876, %v324
    %v1543 = vmul.f32 %v881, %v325
    %v1544 = vsel %vm154, %v1536, 0.0
    %1545 = vadd.xlane.f32.xlu0 %v1544
    %v1546 = vpop.xlane.xlu0 %1545
    %v1547 = vsel %vm154, %v1537, 0.0
    %1548 = vadd.xlane.f32.xlu0 %v1547
    %v1549 = vpop.xlane.xlu0 %1548
    %v1550 = vsel %vm154, %v1538, 0.0
    %1551 = vadd.xlane.f32.xlu0 %v1550
    %v1552 = vpop.xlane.xlu0 %1551
    %v1553 = vsel %vm154, %v1539, 0.0
    %1554 = vadd.xlane.f32.xlu0 %v1553
    %v1555 = vpop.xlane.xlu0 %1554
    %v1556 = vsel %vm154, %v1540, 0.0
    %1557 = vadd.xlane.f32.xlu0 %v1556
    %v1558 = vpop.xlane.xlu0 %1557
    %v1559 = vsel %vm154, %v1541, 0.0
    %1560 = vadd.xlane.f32.xlu0 %v1559
    %v1561 = vpop.xlane.xlu0 %1560
    %v1562 = vsel %vm154, %v1542, 0.0
    %1563 = vadd.xlane.f32.xlu0 %v1562
    %v1564 = vpop.xlane.xlu0 %1563
    %v1565 = vsel %vm154, %v1543, 0.0
    %1566 = vadd.xlane.f32.xlu0 %v1565
    %v1567 = vpop.xlane.xlu0 %1566
    %v1576 = vlaneseq
    %v1577 = vshrl.u32 %v1576, 7
    %v1578 = vsub.s32 %v1313, %v1577
    %v1579 = vrot.slane %v1546, %v1578
    %v1580 = vlaneseq
    %v1581 = vshrl.u32 %v1580, 7
    %v1582 = vsub.s32 %v1318, %v1581
    %v1583 = vrot.slane %v1549, %v1582
    %v1584 = vsel %vm1323, %v1583, %v1579
    %v1585 = vlaneseq
    %v1586 = vshrl.u32 %v1585, 7
    %v1587 = vsub.s32 %v1325, %v1586
    %v1588 = vrot.slane %v1552, %v1587
    %v1589 = vsel %vm1330, %v1588, %v1584
    %v1590 = vlaneseq
    %v1591 = vshrl.u32 %v1590, 7
    %v1592 = vsub.s32 %v1332, %v1591
    %v1593 = vrot.slane %v1555, %v1592
    %v1594 = vsel %vm1337, %v1593, %v1589
    %v1595 = vlaneseq
    %v1596 = vshrl.u32 %v1595, 7
    %v1597 = vsub.s32 %v1313, %v1596
    %v1598 = vrot.slane %v1558, %v1597
    %v1599 = vlaneseq
    %v1600 = vshrl.u32 %v1599, 7
    %v1601 = vsub.s32 %v1318, %v1600
    %v1602 = vrot.slane %v1561, %v1601
    %v1603 = vsel %vm1323, %v1602, %v1598
    %v1604 = vlaneseq
    %v1605 = vshrl.u32 %v1604, 7
    %v1606 = vsub.s32 %v1325, %v1605
    %v1607 = vrot.slane %v1564, %v1606
    %v1608 = vsel %vm1330, %v1607, %v1603
    %v1609 = vlaneseq
    %v1610 = vshrl.u32 %v1609, 7
    %v1611 = vsub.s32 %v1332, %v1610
    %v1612 = vrot.slane %v1567, %v1611
    %v1613 = vsel %vm1337, %v1612, %v1608
    %v1614 = vsel %vm1358, %v1613, %v1594
    %v1616 = vsel %vm235, %v1614, 0.0
    %1617 = vadd.xlane.f32.xlu0 %v1616
    %v1618 = vpop.xlane.xlu0 %1617
    %v1619 = vmul.f32 %v1618, 0.2
    %v1620 = vadd.f32 %v1535, %v1619
    %v1621 = vmul.f32 %v781, %v963
    %v1622 = vmul.f32 %v786, %v968
    %v1623 = vmul.f32 %v791, %v973
    %v1624 = vmul.f32 %v796, %v978
    %v1625 = vmul.f32 %v866, %v1060
    %v1626 = vmul.f32 %v871, %v1065
    %v1627 = vmul.f32 %v876, %v1070
    %v1628 = vmul.f32 %v881, %v1075
    %v1629 = vsel %vm154, %v1621, 0.0
    %1630 = vadd.xlane.f32.xlu0 %v1629
    %v1631 = vpop.xlane.xlu0 %1630
    %v1632 = vsel %vm154, %v1622, 0.0
    %1633 = vadd.xlane.f32.xlu0 %v1632
    %v1634 = vpop.xlane.xlu0 %1633
    %v1635 = vsel %vm154, %v1623, 0.0
    %1636 = vadd.xlane.f32.xlu0 %v1635
    %v1637 = vpop.xlane.xlu0 %1636
    %v1638 = vsel %vm154, %v1624, 0.0
    %1639 = vadd.xlane.f32.xlu0 %v1638
    %v1640 = vpop.xlane.xlu0 %1639
    %v1641 = vsel %vm154, %v1625, 0.0
    %1642 = vadd.xlane.f32.xlu0 %v1641
    %v1643 = vpop.xlane.xlu0 %1642
    %v1644 = vsel %vm154, %v1626, 0.0
    %1645 = vadd.xlane.f32.xlu0 %v1644
    %v1646 = vpop.xlane.xlu0 %1645
    %v1647 = vsel %vm154, %v1627, 0.0
    %1648 = vadd.xlane.f32.xlu0 %v1647
    %v1649 = vpop.xlane.xlu0 %1648
    %v1650 = vsel %vm154, %v1628, 0.0
    %1651 = vadd.xlane.f32.xlu0 %v1650
    %v1652 = vpop.xlane.xlu0 %1651
    %v1661 = vlaneseq
    %v1662 = vshrl.u32 %v1661, 7
    %v1663 = vsub.s32 %v1313, %v1662
    %v1664 = vrot.slane %v1631, %v1663
    %v1665 = vlaneseq
    %v1666 = vshrl.u32 %v1665, 7
    %v1667 = vsub.s32 %v1318, %v1666
    %v1668 = vrot.slane %v1634, %v1667
    %v1669 = vsel %vm1323, %v1668, %v1664
    %v1670 = vlaneseq
    %v1671 = vshrl.u32 %v1670, 7
    %v1672 = vsub.s32 %v1325, %v1671
    %v1673 = vrot.slane %v1637, %v1672
    %v1674 = vsel %vm1330, %v1673, %v1669
    %v1675 = vlaneseq
    %v1676 = vshrl.u32 %v1675, 7
    %v1677 = vsub.s32 %v1332, %v1676
    %v1678 = vrot.slane %v1640, %v1677
    %v1679 = vsel %vm1337, %v1678, %v1674
    %v1680 = vlaneseq
    %v1681 = vshrl.u32 %v1680, 7
    %v1682 = vsub.s32 %v1313, %v1681
    %v1683 = vrot.slane %v1643, %v1682
    %v1684 = vlaneseq
    %v1685 = vshrl.u32 %v1684, 7
    %v1686 = vsub.s32 %v1318, %v1685
    %v1687 = vrot.slane %v1646, %v1686
    %v1688 = vsel %vm1323, %v1687, %v1683
    %v1689 = vlaneseq
    %v1690 = vshrl.u32 %v1689, 7
    %v1691 = vsub.s32 %v1325, %v1690
    %v1692 = vrot.slane %v1649, %v1691
    %v1693 = vsel %vm1330, %v1692, %v1688
    %v1694 = vlaneseq
    %v1695 = vshrl.u32 %v1694, 7
    %v1696 = vsub.s32 %v1332, %v1695
    %v1697 = vrot.slane %v1652, %v1696
    %v1698 = vsel %vm1337, %v1697, %v1693
    %v1699 = vsel %vm1358, %v1698, %v1679
    %v1701 = vsel %vm235, %v1699, 0.0
    %1702 = vadd.xlane.f32.xlu0 %v1701
    %v1703 = vpop.xlane.xlu0 %1702
    %v1704 = vmul.f32 %v1703, 0.16666667
    %v1705 = vsub.f32 %v1620, %v1704
    %v1706 = vmul.f32 %v599, %v1157
    %v1707 = vmul.f32 %v604, %v1162
    %v1708 = vmul.f32 %v609, %v1167
    %v1709 = vmul.f32 %v614, %v1172
    %v1710 = vmul.f32 %v696, %v1254
    %v1711 = vmul.f32 %v701, %v1259
    %v1712 = vmul.f32 %v706, %v1264
    %v1713 = vmul.f32 %v711, %v1269
    %v1714 = vsel %vm154, %v1706, 0.0
    %1715 = vadd.xlane.f32.xlu0 %v1714
    %v1716 = vpop.xlane.xlu0 %1715
    %v1717 = vsel %vm154, %v1707, 0.0
    %1718 = vadd.xlane.f32.xlu0 %v1717
    %v1719 = vpop.xlane.xlu0 %1718
    %v1720 = vsel %vm154, %v1708, 0.0
    %1721 = vadd.xlane.f32.xlu0 %v1720
    %v1722 = vpop.xlane.xlu0 %1721
    %v1723 = vsel %vm154, %v1709, 0.0
    %1724 = vadd.xlane.f32.xlu0 %v1723
    %v1725 = vpop.xlane.xlu0 %1724
    %v1726 = vsel %vm154, %v1710, 0.0
    %1727 = vadd.xlane.f32.xlu0 %v1726
    %v1728 = vpop.xlane.xlu0 %1727
    %v1729 = vsel %vm154, %v1711, 0.0
    %1730 = vadd.xlane.f32.xlu0 %v1729
    %v1731 = vpop.xlane.xlu0 %1730
    %v1732 = vsel %vm154, %v1712, 0.0
    %1733 = vadd.xlane.f32.xlu0 %v1732
    %v1734 = vpop.xlane.xlu0 %1733
    %v1735 = vsel %vm154, %v1713, 0.0
    %1736 = vadd.xlane.f32.xlu0 %v1735
    %v1737 = vpop.xlane.xlu0 %1736
    %v1746 = vlaneseq
    %v1747 = vshrl.u32 %v1746, 7
    %v1748 = vsub.s32 %v1313, %v1747
    %v1749 = vrot.slane %v1716, %v1748
    %v1750 = vlaneseq
    %v1751 = vshrl.u32 %v1750, 7
    %v1752 = vsub.s32 %v1318, %v1751
    %v1753 = vrot.slane %v1719, %v1752
    %v1754 = vsel %vm1323, %v1753, %v1749
    %v1755 = vlaneseq
    %v1756 = vshrl.u32 %v1755, 7
    %v1757 = vsub.s32 %v1325, %v1756
    %v1758 = vrot.slane %v1722, %v1757
    %v1759 = vsel %vm1330, %v1758, %v1754
    %v1760 = vlaneseq
    %v1761 = vshrl.u32 %v1760, 7
    %v1762 = vsub.s32 %v1332, %v1761
    %v1763 = vrot.slane %v1725, %v1762
    %v1764 = vsel %vm1337, %v1763, %v1759
    %v1765 = vlaneseq
    %v1766 = vshrl.u32 %v1765, 7
    %v1767 = vsub.s32 %v1313, %v1766
    %v1768 = vrot.slane %v1728, %v1767
    %v1769 = vlaneseq
    %v1770 = vshrl.u32 %v1769, 7
    %v1771 = vsub.s32 %v1318, %v1770
    %v1772 = vrot.slane %v1731, %v1771
    %v1773 = vsel %vm1323, %v1772, %v1768
    %v1774 = vlaneseq
    %v1775 = vshrl.u32 %v1774, 7
    %v1776 = vsub.s32 %v1325, %v1775
    %v1777 = vrot.slane %v1734, %v1776
    %v1778 = vsel %vm1330, %v1777, %v1773
    %v1779 = vlaneseq
    %v1780 = vshrl.u32 %v1779, 7
    %v1781 = vsub.s32 %v1332, %v1780
    %v1782 = vrot.slane %v1737, %v1781
    %v1783 = vsel %vm1337, %v1782, %v1778
    %v1784 = vsel %vm1358, %v1783, %v1764
    %v1786 = vsel %vm235, %v1784, 0.0
    %1787 = vadd.xlane.f32.xlu0 %v1786
    %v1788 = vpop.xlane.xlu0 %1787
    %v1789 = vmul.f32 %v1788, 0.14285715
    %v1790 = vadd.f32 %v1705, %v1789
    %v1791 = vmul.f32 %v781, %v1157
    %v1792 = vmul.f32 %v786, %v1162
    %v1793 = vmul.f32 %v791, %v1167
    %v1794 = vmul.f32 %v796, %v1172
    %v1795 = vmul.f32 %v866, %v1254
    %v1796 = vmul.f32 %v871, %v1259
    %v1797 = vmul.f32 %v876, %v1264
    %v1798 = vmul.f32 %v881, %v1269
    %v1799 = vsel %vm154, %v1791, 0.0
    %1800 = vadd.xlane.f32.xlu0 %v1799
    %v1801 = vpop.xlane.xlu0 %1800
    %v1802 = vsel %vm154, %v1792, 0.0
    %1803 = vadd.xlane.f32.xlu0 %v1802
    %v1804 = vpop.xlane.xlu0 %1803
    %v1805 = vsel %vm154, %v1793, 0.0
    %1806 = vadd.xlane.f32.xlu0 %v1805
    %v1807 = vpop.xlane.xlu0 %1806
    %v1808 = vsel %vm154, %v1794, 0.0
    %1809 = vadd.xlane.f32.xlu0 %v1808
    %v1810 = vpop.xlane.xlu0 %1809
    %v1811 = vsel %vm154, %v1795, 0.0
    %1812 = vadd.xlane.f32.xlu0 %v1811
    %v1813 = vpop.xlane.xlu0 %1812
    %v1814 = vsel %vm154, %v1796, 0.0
    %1815 = vadd.xlane.f32.xlu0 %v1814
    %v1816 = vpop.xlane.xlu0 %1815
    %v1817 = vsel %vm154, %v1797, 0.0
    %1818 = vadd.xlane.f32.xlu0 %v1817
    %v1819 = vpop.xlane.xlu0 %1818
    %v1820 = vsel %vm154, %v1798, 0.0
    %1821 = vadd.xlane.f32.xlu0 %v1820
    %v1822 = vpop.xlane.xlu0 %1821
    %v1831 = vlaneseq
    %v1832 = vshrl.u32 %v1831, 7
    %v1833 = vsub.s32 %v1313, %v1832
    %v1834 = vrot.slane %v1801, %v1833
    %v1835 = vlaneseq
    %v1836 = vshrl.u32 %v1835, 7
    %v1837 = vsub.s32 %v1318, %v1836
    %v1838 = vrot.slane %v1804, %v1837
    %v1839 = vsel %vm1323, %v1838, %v1834
    %v1840 = vlaneseq
    %v1841 = vshrl.u32 %v1840, 7
    %v1842 = vsub.s32 %v1325, %v1841
    %v1843 = vrot.slane %v1807, %v1842
    %v1844 = vsel %vm1330, %v1843, %v1839
    %v1845 = vlaneseq
    %v1846 = vshrl.u32 %v1845, 7
    %v1847 = vsub.s32 %v1332, %v1846
    %v1848 = vrot.slane %v1810, %v1847
    %v1849 = vsel %vm1337, %v1848, %v1844
    %v1850 = vlaneseq
    %v1851 = vshrl.u32 %v1850, 7
    %v1852 = vsub.s32 %v1313, %v1851
    %v1853 = vrot.slane %v1813, %v1852
    %v1854 = vlaneseq
    %v1855 = vshrl.u32 %v1854, 7
    %v1856 = vsub.s32 %v1318, %v1855
    %v1857 = vrot.slane %v1816, %v1856
    %v1858 = vsel %vm1323, %v1857, %v1853
    %v1859 = vlaneseq
    %v1860 = vshrl.u32 %v1859, 7
    %v1861 = vsub.s32 %v1325, %v1860
    %v1862 = vrot.slane %v1819, %v1861
    %v1863 = vsel %vm1330, %v1862, %v1858
    %v1864 = vlaneseq
    %v1865 = vshrl.u32 %v1864, 7
    %v1866 = vsub.s32 %v1332, %v1865
    %v1867 = vrot.slane %v1822, %v1866
    %v1868 = vsel %vm1337, %v1867, %v1863
    %v1869 = vsel %vm1358, %v1868, %v1849
    %v1871 = vsel %vm235, %v1869, 0.0
    %1872 = vadd.xlane.f32.xlu0 %v1871
    %v1873 = vpop.xlane.xlu0 %1872
    %v1874 = vmul.f32 %v1873, 0.125
    %v1875 = vsub.f32 %v1790, %v1874
    %v1876 = vadd.f32 %v1875, 0.0
    %v1877 = vadd.f32 %v43, %v225
    %s1878 = scalar_lea.vmem %s1, 16
    %v1879 = vld [vmem:[%s1878] sm:$0xff]
    %v1880 = vld [vmem:[%s1878 + $0x8] sm:$0xff]
    %s1881 = scalar_lea.vmem %s2, 1
    %v1882 = vld [vmem:[%s1881] sm:$0x1]
    %s1883 = scalar_lea.vmem %s3, 32
    %v1884 = vld [vmem:[%s1883] sm:$0xff]
    %v1885 = vld [vmem:[%s1883 + $0x8] sm:$0xff]
    %v1886 = vld [vmem:[%s1883 + $0x10] sm:$0xff]
    %v1887 = vld [vmem:[%s1883 + $0x18] sm:$0xff]
    %s1888 = scalar_lea.vmem %s4, 1
    %v1889 = vld [vmem:[%s1888] sm:$0x1]
    %s1890 = scalar_lea.vmem %s5, 32
    %v1891 = vld [vmem:[%s1890] sm:$0xff]
    %v1892 = vld [vmem:[%s1890 + $0x8] sm:$0xff]
    %v1893 = vld [vmem:[%s1890 + $0x10] sm:$0xff]
    %v1894 = vld [vmem:[%s1890 + $0x18] sm:$0xff]
    %s1895 = scalar_lea.vmem [#allocation2], 32
    %v1896 = vld [vmem:[%s1895] sm:$0xff]
    %v1897 = vld [vmem:[%s1895 + $0x8] sm:$0xff]
    %v1898 = vld [vmem:[%s1895 + $0x10] sm:$0xff]
    %v1899 = vld [vmem:[%s1895 + $0x18] sm:$0xff]
    %s1900 = scalar_lea.vmem %s7, 1
    %v1901 = vld [vmem:[%s1900] sm:$0x1]
    %v1903 = vlaneseq
    %v1904 = vshrl.u32 %v1903, 7
    %v1905 = vsub.s32 0, %v1904
    %v1906 = vrot.slane %v1882, %v1905
    %v1909 = vsel %vm67, %v1877, 0
    %1911 = vmatprep.subr.mxu0 0.0
    %1912 = vmatpush1.msra.mxu0 %v1879
    %1913 = vmatprep.subr.mxu0 0.0
    %1914 = vmatpush1.msra.mxu0 %v1880
    %1915 = vmatprep.subr.mxu0 0.0
    %1916 = vmatpush1.msra.mxu0 0.0
    %1917 = vmatprep.subr.mxu0 0.0
    %1918 = vmatpush1.msra.mxu0 0.0
    %1919 = vmatprep.subr.mxu0 0.0
    %1920 = vmatpush1.msra.mxu0 0.0
    %1921 = vmatprep.subr.mxu0 0.0
    %1922 = vmatpush1.msra.mxu0 0.0
    %1923 = vmatprep.subr.mxu0 0.0
    %1924 = vmatpush1.msra.mxu0 0.0
    %1925 = vmatprep.subr.mxu0 0.0
    %1926 = vmatpush1.msra.mxu0 0.0
    %1927 = vmatprep.subr.mxu0 0.0
    %1928 = vmatpush1.msra.mxu0 0.0
    %1929 = vmatprep.subr.mxu0 0.0
    %1930 = vmatpush1.msra.mxu0 0.0
    %1931 = vmatprep.subr.mxu0 0.0
    %1932 = vmatpush1.msra.mxu0 0.0
    %1933 = vmatprep.subr.mxu0 0.0
    %1934 = vmatpush1.msra.mxu0 0.0
    %1935 = vmatprep.subr.mxu0 0.0
    %1936 = vmatpush1.msra.mxu0 0.0
    %1937 = vmatprep.subr.mxu0 0.0
    %1938 = vmatpush1.msra.mxu0 0.0
    %1939 = vmatprep.subr.mxu0 0.0
    %1940 = vmatpush1.msra.mxu0 0.0
    %1941 = vmatprep.subr.mxu0 0.0
    %1942 = vmatpush1.msra.mxu0 0.0
    %1943 = vmatprep.subr.mxu0 0.0
    %1944 = vmatpush1.msra.mxu0 0.0
    %1945 = vmatprep.subr.mxu0 0.0
    %1946 = vmatpush1.msra.mxu0 0.0
    %1947 = vmatprep.subr.mxu0 0.0
    %1948 = vmatpush1.msra.mxu0 0.0
    %1949 = vmatprep.subr.mxu0 0.0
    %1950 = vmatpush1.msra.mxu0 0.0
    %1951 = vmatprep.subr.mxu0 0.0
    %1952 = vmatpush1.msra.mxu0 0.0
    %1953 = vmatprep.subr.mxu0 0.0
    %1954 = vmatpush1.msra.mxu0 0.0
    %1955 = vmatprep.subr.mxu0 0.0
    %1956 = vmatpush1.msra.mxu0 0.0
    %1957 = vmatprep.subr.mxu0 0.0
    %1958 = vmatpush1.msra.mxu0 0.0
    %1959 = vmatprep.subr.mxu0 0.0
    %1960 = vmatpush1.msra.mxu0 0.0
    %1961 = vmatprep.subr.mxu0 0.0
    %1962 = vmatpush1.msra.mxu0 0.0
    %1963 = vmatprep.subr.mxu0 0.0
    %1964 = vmatpush1.msra.mxu0 0.0
    %1965 = vmatprep.subr.mxu0 0.0
    %1966 = vmatpush1.msra.mxu0 0.0
    %1967 = vmatprep.subr.mxu0 0.0
    %1968 = vmatpush1.msra.mxu0 0.0
    %1969 = vmatprep.subr.mxu0 0.0
    %1970 = vmatpush1.msra.mxu0 0.0
    %1971 = vmatprep.subr.mxu0 0.0
    %1972 = vmatpush1.msra.mxu0 0.0
    %1973 = vmatprep.subr.mxu0 0.0
    %1974 = vmatpush1.msra.mxu0 0.0
    %1975 = vmatprep.mubr.f32.mxu0 0.0
    %1976 = vmatmul.mubr.f32.gmra.mrb[0].mxu0 %v1909
    %v1977 = vpop.f32.mrb[0].mxu0
    %v1978 = vadd.f32 %v1906, %v1977
    %v1979 = vpop.f32.mrb[0].mxu0
    %1980 = vdwg.mxu0
    %v1981 = vmin.f32 %v1978, 0.0
    %v1982 = vmul.f32 %v1981, 1.442695
    %v1983 = vpow.pop %v1982
    %vm1984 = vcmp.gt.f32.partialorder %v1978, 0.0
    %v1985 = vsub.f32 %v1983, 1.0
    %v1986 = vsel %vm1984, %v1978, %v1985
    %v1987 = vsel %vm1984, 1.0, %v1983
    %v1989 = vlaneseq
    %v1990 = vshrl.u32 %v1989, 7
    %v1991 = vsub.s32 0, %v1990
    %v1992 = vrot.slane %v1889, %v1991
    %v1995 = vsel %vm154, %v1986, 0
    %1997 = vmatprep.subr.mxu0 0.0
    %1998 = vmatpush1.msra.mxu0 %v1884
    %1999 = vmatprep.subr.mxu0 0.0
    %2000 = vmatpush1.msra.mxu0 %v1885
    %2001 = vmatprep.subr.mxu0 0.0
    %2002 = vmatpush1.msra.mxu0 %v1886
    %2003 = vmatprep.subr.mxu0 0.0
    %2004 = vmatpush1.msra.mxu0 %v1887
    %2005 = vmatprep.subr.mxu0 0.0
    %2006 = vmatpush1.msra.mxu0 0.0
    %2007 = vmatprep.subr.mxu0 0.0
    %2008 = vmatpush1.msra.mxu0 0.0
    %2009 = vmatprep.subr.mxu0 0.0
    %2010 = vmatpush1.msra.mxu0 0.0
    %2011 = vmatprep.subr.mxu0 0.0
    %2012 = vmatpush1.msra.mxu0 0.0
    %2013 = vmatprep.subr.mxu0 0.0
    %2014 = vmatpush1.msra.mxu0 0.0
    %2015 = vmatprep.subr.mxu0 0.0
    %2016 = vmatpush1.msra.mxu0 0.0
    %2017 = vmatprep.subr.mxu0 0.0
    %2018 = vmatpush1.msra.mxu0 0.0
    %2019 = vmatprep.subr.mxu0 0.0
    %2020 = vmatpush1.msra.mxu0 0.0
    %2021 = vmatprep.subr.mxu0 0.0
    %2022 = vmatpush1.msra.mxu0 0.0
    %2023 = vmatprep.subr.mxu0 0.0
    %2024 = vmatpush1.msra.mxu0 0.0
    %2025 = vmatprep.subr.mxu0 0.0
    %2026 = vmatpush1.msra.mxu0 0.0
    %2027 = vmatprep.subr.mxu0 0.0
    %2028 = vmatpush1.msra.mxu0 0.0
    %2029 = vmatprep.subr.mxu0 0.0
    %2030 = vmatpush1.msra.mxu0 0.0
    %2031 = vmatprep.subr.mxu0 0.0
    %2032 = vmatpush1.msra.mxu0 0.0
    %2033 = vmatprep.subr.mxu0 0.0
    %2034 = vmatpush1.msra.mxu0 0.0
    %2035 = vmatprep.subr.mxu0 0.0
    %2036 = vmatpush1.msra.mxu0 0.0
    %2037 = vmatprep.subr.mxu0 0.0
    %2038 = vmatpush1.msra.mxu0 0.0
    %2039 = vmatprep.subr.mxu0 0.0
    %2040 = vmatpush1.msra.mxu0 0.0
    %2041 = vmatprep.subr.mxu0 0.0
    %2042 = vmatpush1.msra.mxu0 0.0
    %2043 = vmatprep.subr.mxu0 0.0
    %2044 = vmatpush1.msra.mxu0 0.0
    %2045 = vmatprep.subr.mxu0 0.0
    %2046 = vmatpush1.msra.mxu0 0.0
    %2047 = vmatprep.subr.mxu0 0.0
    %2048 = vmatpush1.msra.mxu0 0.0
    %2049 = vmatprep.subr.mxu0 0.0
    %2050 = vmatpush1.msra.mxu0 0.0
    %2051 = vmatprep.subr.mxu0 0.0
    %2052 = vmatpush1.msra.mxu0 0.0
    %2053 = vmatprep.subr.mxu0 0.0
    %2054 = vmatpush1.msra.mxu0 0.0
    %2055 = vmatprep.subr.mxu0 0.0
    %2056 = vmatpush1.msra.mxu0 0.0
    %2057 = vmatprep.subr.mxu0 0.0
    %2058 = vmatpush1.msra.mxu0 0.0
    %2059 = vmatprep.subr.mxu0 0.0
    %2060 = vmatpush1.msra.mxu0 0.0
    %2061 = vmatprep.mubr.f32.mxu0 0.0
    %2062 = vmatmul.mubr.f32.gmra.mrb[0].mxu0 %v1995
    %v2063 = vpop.f32.mrb[0].mxu0
    %v2064 = vadd.f32 %v1992, %v2063
    %v2065 = vpop.f32.mrb[0].mxu0
    %2066 = vdwg.mxu0
    %v2068 = vlaneseq
    %v2069 = vshrl.u32 %v2068, 7
    %v2070 = vsub.s32 0, %v2069
    %v2071 = vrot.slane %v1901, %v2070
    %v2073 = vmul.f32 %v1987, %v2071
    %v2074 = vsel %vm235, %v2073, 0.0
    %2075 = vadd.xlane.f32.xlu0 %v2074
    %v2076 = vpop.xlane.xlu0 %2075
    %v2077 = vlaneseq
    %v2078 = vshrl.u32 %v2077, 7
    %v2079 = vsub.s32 0, %v2078
    %v2080 = vrot.slane %v1987, %v2079
    %2082 = vbcast.lane.b32.xlu0 %v2080, 256
    %v2083 = vpop.permute.xlu0 %2082
    %s2085 = sor.u32 256, 8
    %2086 = vbcast.lane.b32.xlu0 %v2080, %s2085
    %v2087 = vpop.permute.xlu0 %2086
    %s2089 = sor.u32 256, 16
    %2090 = vbcast.lane.b32.xlu0 %v2080, %s2089
    %v2091 = vpop.permute.xlu0 %2090
    %s2093 = sor.u32 256, 24
    %2094 = vbcast.lane.b32.xlu0 %v2080, %s2093
    %v2095 = vpop.permute.xlu0 %2094
    %v2096 = vlaneseq
    %v2097 = vshrl.u32 %v2096, 7
    %v2098 = vsub.s32 1, %v2097
    %v2099 = vrot.slane %v1987, %v2098
    %2101 = vbcast.lane.b32.xlu0 %v2099, 256
    %v2102 = vpop.permute.xlu0 %2101
    %s2104 = sor.u32 256, 8
    %2105 = vbcast.lane.b32.xlu0 %v2099, %s2104
    %v2106 = vpop.permute.xlu0 %2105
    %s2108 = sor.u32 256, 16
    %2109 = vbcast.lane.b32.xlu0 %v2099, %s2108
    %v2110 = vpop.permute.xlu0 %2109
    %s2112 = sor.u32 256, 24
    %2113 = vbcast.lane.b32.xlu0 %v2099, %s2112
    %v2114 = vpop.permute.xlu0 %2113
    %v2115 = vmul.f32 %v2083, %v1891
    %v2116 = vmul.f32 %v2087, %v1892
    %v2117 = vmul.f32 %v2091, %v1893
    %v2118 = vmul.f32 %v2095, %v1894
    %v2119 = vmul.f32 %v2102, %v1891
    %v2120 = vmul.f32 %v2106, %v1892
    %v2121 = vmul.f32 %v2110, %v1893
    %v2122 = vmul.f32 %v2114, %v1894
    %v2125 = vunpack.c.l.s4 1966171168
    %v2126 = vunpack.c.0.s8 %v2125
    %v2127 = vlaneseq
    %v2128 = vshrl.u32 %v2127, 7
    %v2129 = vsub.s32 %v2126, %v2128
    %v2130 = vrot.slane %v1987, %v2129
    %v2131 = vcombine.high %v2130, %v2130
    %v2133 = vunpack.c.l.s4 1966171168
    %v2134 = vunpack.c.0.s8 %v2133
    %v2135 = vlaneseq
    %v2136 = vshrl.u32 %v2135, 7
    %v2137 = vsub.s32 %v2134, %v2136
    %v2138 = vrot.slane %v2130, %v2137
    %v2140 = vunpack.c.l.s4 1966171168
    %v2141 = vunpack.c.0.s8 %v2140
    %v2142 = vlaneseq
    %v2143 = vshrl.u32 %v2142, 7
    %v2144 = vsub.s32 %v2141, %v2143
    %v2145 = vrot.slane %v2131, %v2144
    %v2146 = vlaneseq
    %v2147 = vshrl.u32 %v2146, 7
    %v2148 = vsub.s32 0, %v2147
    %v2149 = vrot.slane %v2138, %v2148
    %v2150 = vlaneseq
    %v2151 = vshrl.u32 %v2150, 7
    %v2152 = vsub.s32 0, %v2151
    %v2153 = vrot.slane %v2145, %v2152
    %v2156 = vmul.f32 %v2149, %v1896
    %v2157 = vmul.f32 %v2149, %v1897
    %v2158 = vmul.f32 %v2149, %v1898
    %v2159 = vmul.f32 %v2149, %v1899
    %v2160 = vmul.f32 %v2153, %v1896
    %v2161 = vmul.f32 %v2153, %v1897
    %v2162 = vmul.f32 %v2153, %v1898
    %v2163 = vmul.f32 %v2153, %v1899
    %v2165 = vsel %vm154, %v2115, 0
    %v2168 = vsel %vm154, %v2116, 0
    %v2171 = vsel %vm154, %v2117, 0
    %v2174 = vsel %vm154, %v2118, 0
    %2176 = vmatprep.subr.mxu0 0.0
    %2177 = vmatpush1.msra.mxu0 %v2115
    %2178 = vmatprep.subr.mxu0 0.0
    %2179 = vmatpush1.msra.mxu0 %v2116
    %2180 = vmatprep.subr.mxu0 0.0
    %2181 = vmatpush1.msra.mxu0 %v2117
    %2182 = vmatprep.subr.mxu0 0.0
    %2183 = vmatpush1.msra.mxu0 %v2118
    %2184 = vmatprep.subr.mxu0 0.0
    %2185 = vmatpush1.msra.mxu0 0.0
    %2186 = vmatprep.subr.mxu0 0.0
    %2187 = vmatpush1.msra.mxu0 0.0
    %2188 = vmatprep.subr.mxu0 0.0
    %2189 = vmatpush1.msra.mxu0 0.0
    %2190 = vmatprep.subr.mxu0 0.0
    %2191 = vmatpush1.msra.mxu0 0.0
    %2192 = vmatprep.subr.mxu0 0.0
    %2193 = vmatpush1.msra.mxu0 0.0
    %2194 = vmatprep.subr.mxu0 0.0
    %2195 = vmatpush1.msra.mxu0 0.0
    %2196 = vmatprep.subr.mxu0 0.0
    %2197 = vmatpush1.msra.mxu0 0.0
    %2198 = vmatprep.subr.mxu0 0.0
    %2199 = vmatpush1.msra.mxu0 0.0
    %2200 = vmatprep.subr.mxu0 0.0
    %2201 = vmatpush1.msra.mxu0 0.0
    %2202 = vmatprep.subr.mxu0 0.0
    %2203 = vmatpush1.msra.mxu0 0.0
    %2204 = vmatprep.subr.mxu0 0.0
    %2205 = vmatpush1.msra.mxu0 0.0
    %2206 = vmatprep.subr.mxu0 0.0
    %2207 = vmatpush1.msra.mxu0 0.0
    %2208 = vmatprep.subr.mxu0 0.0
    %2209 = vmatpush1.msra.mxu0 0.0
    %2210 = vmatprep.subr.mxu0 0.0
    %2211 = vmatpush1.msra.mxu0 0.0
    %2212 = vmatprep.subr.mxu0 0.0
    %2213 = vmatpush1.msra.mxu0 0.0
    %2214 = vmatprep.subr.mxu0 0.0
    %2215 = vmatpush1.msra.mxu0 0.0
    %2216 = vmatprep.subr.mxu0 0.0
    %2217 = vmatpush1.msra.mxu0 0.0
    %2218 = vmatprep.subr.mxu0 0.0
    %2219 = vmatpush1.msra.mxu0 0.0
    %2220 = vmatprep.subr.mxu0 0.0
    %2221 = vmatpush1.msra.mxu0 0.0
    %2222 = vmatprep.subr.mxu0 0.0
    %2223 = vmatpush1.msra.mxu0 0.0
    %2224 = vmatprep.subr.mxu0 0.0
    %2225 = vmatpush1.msra.mxu0 0.0
    %2226 = vmatprep.subr.mxu0 0.0
    %2227 = vmatpush1.msra.mxu0 0.0
    %2228 = vmatprep.subr.mxu0 0.0
    %2229 = vmatpush1.msra.mxu0 0.0
    %2230 = vmatprep.subr.mxu0 0.0
    %2231 = vmatpush1.msra.mxu0 0.0
    %2232 = vmatprep.subr.mxu0 0.0
    %2233 = vmatpush1.msra.mxu0 0.0
    %2234 = vmatprep.subr.mxu0 0.0
    %2235 = vmatpush1.msra.mxu0 0.0
    %2236 = vmatprep.subr.mxu0 0.0
    %2237 = vmatpush1.msra.mxu0 0.0
    %2238 = vmatprep.subr.mxu0 0.0
    %2239 = vmatpush1.msra.mxu0 0.0
    %2240 = vmatprep.mubr.f32.mxu0 0.0
    %2241 = vmatmul.mubr.f32.gmra.mrb[0].mxu0 %v2165
    %v2242 = vpop.f32.mrb[0].mxu0
    %v2243 = vadd.f32 0.0, %v2242
    %v2244 = vpop.f32.mrb[0].mxu0
    %2245 = vmatprep.mubr.f32.mxu0 0.0
    %2246 = vmatmul.mubr.f32.gmra.mrb[0].mxu0 %v2168
    %v2247 = vpop.f32.mrb[0].mxu0
    %v2248 = vadd.f32 0.0, %v2247
    %v2249 = vpop.f32.mrb[0].mxu0
    %2250 = vmatprep.mubr.f32.mxu0 0.0
    %2251 = vmatmul.mubr.f32.gmra.mrb[0].mxu0 %v2171
    %v2252 = vpop.f32.mrb[0].mxu0
    %v2253 = vadd.f32 0.0, %v2252
    %v2254 = vpop.f32.mrb[0].mxu0
    %2255 = vmatprep.mubr.f32.mxu0 0.0
    %2256 = vmatmul.mubr.f32.gmra.mrb[0].mxu0 %v2174
    %v2257 = vpop.f32.mrb[0].mxu0
    %v2258 = vadd.f32 0.0, %v2257
    %v2259 = vpop.f32.mrb[0].mxu0
    %2260 = vdwg.mxu0
    %v2262 = vsel %vm154, %v2119, 0
    %v2265 = vsel %vm154, %v2120, 0
    %v2268 = vsel %vm154, %v2121, 0
    %v2271 = vsel %vm154, %v2122, 0
    %2273 = vmatprep.subr.mxu0 0.0
    %2274 = vmatpush1.msra.mxu0 %v2119
    %2275 = vmatprep.subr.mxu0 0.0
    %2276 = vmatpush1.msra.mxu0 %v2120
    %2277 = vmatprep.subr.mxu0 0.0
    %2278 = vmatpush1.msra.mxu0 %v2121
    %2279 = vmatprep.subr.mxu0 0.0
    %2280 = vmatpush1.msra.mxu0 %v2122
    %2281 = vmatprep.subr.mxu0 0.0
    %2282 = vmatpush1.msra.mxu0 0.0
    %2283 = vmatprep.subr.mxu0 0.0
    %2284 = vmatpush1.msra.mxu0 0.0
    %2285 = vmatprep.subr.mxu0 0.0
    %2286 = vmatpush1.msra.mxu0 0.0
    %2287 = vmatprep.subr.mxu0 0.0
    %2288 = vmatpush1.msra.mxu0 0.0
    %2289 = vmatprep.subr.mxu0 0.0
    %2290 = vmatpush1.msra.mxu0 0.0
    %2291 = vmatprep.subr.mxu0 0.0
    %2292 = vmatpush1.msra.mxu0 0.0
    %2293 = vmatprep.subr.mxu0 0.0
    %2294 = vmatpush1.msra.mxu0 0.0
    %2295 = vmatprep.subr.mxu0 0.0
    %2296 = vmatpush1.msra.mxu0 0.0
    %2297 = vmatprep.subr.mxu0 0.0
    %2298 = vmatpush1.msra.mxu0 0.0
    %2299 = vmatprep.subr.mxu0 0.0
    %2300 = vmatpush1.msra.mxu0 0.0
    %2301 = vmatprep.subr.mxu0 0.0
    %2302 = vmatpush1.msra.mxu0 0.0
    %2303 = vmatprep.subr.mxu0 0.0
    %2304 = vmatpush1.msra.mxu0 0.0
    %2305 = vmatprep.subr.mxu0 0.0
    %2306 = vmatpush1.msra.mxu0 0.0
    %2307 = vmatprep.subr.mxu0 0.0
    %2308 = vmatpush1.msra.mxu0 0.0
    %2309 = vmatprep.subr.mxu0 0.0
    %2310 = vmatpush1.msra.mxu0 0.0
    %2311 = vmatprep.subr.mxu0 0.0
    %2312 = vmatpush1.msra.mxu0 0.0
    %2313 = vmatprep.subr.mxu0 0.0
    %2314 = vmatpush1.msra.mxu0 0.0
    %2315 = vmatprep.subr.mxu0 0.0
    %2316 = vmatpush1.msra.mxu0 0.0
    %2317 = vmatprep.subr.mxu0 0.0
    %2318 = vmatpush1.msra.mxu0 0.0
    %2319 = vmatprep.subr.mxu0 0.0
    %2320 = vmatpush1.msra.mxu0 0.0
    %2321 = vmatprep.subr.mxu0 0.0
    %2322 = vmatpush1.msra.mxu0 0.0
    %2323 = vmatprep.subr.mxu0 0.0
    %2324 = vmatpush1.msra.mxu0 0.0
    %2325 = vmatprep.subr.mxu0 0.0
    %2326 = vmatpush1.msra.mxu0 0.0
    %2327 = vmatprep.subr.mxu0 0.0
    %2328 = vmatpush1.msra.mxu0 0.0
    %2329 = vmatprep.subr.mxu0 0.0
    %2330 = vmatpush1.msra.mxu0 0.0
    %2331 = vmatprep.subr.mxu0 0.0
    %2332 = vmatpush1.msra.mxu0 0.0
    %2333 = vmatprep.subr.mxu0 0.0
    %2334 = vmatpush1.msra.mxu0 0.0
    %2335 = vmatprep.subr.mxu0 0.0
    %2336 = vmatpush1.msra.mxu0 0.0
    %2337 = vmatprep.mubr.f32.mxu0 0.0
    %2338 = vmatmul.mubr.f32.gmra.mrb[0].mxu0 %v2262
    %v2339 = vpop.f32.mrb[0].mxu0
    %v2340 = vadd.f32 0.0, %v2339
    %v2341 = vpop.f32.mrb[0].mxu0
    %2342 = vmatprep.mubr.f32.mxu0 0.0
    %2343 = vmatmul.mubr.f32.gmra.mrb[0].mxu0 %v2265
    %v2344 = vpop.f32.mrb[0].mxu0
    %v2345 = vadd.f32 0.0, %v2344
    %v2346 = vpop.f32.mrb[0].mxu0
    %2347 = vmatprep.mubr.f32.mxu0 0.0
    %2348 = vmatmul.mubr.f32.gmra.mrb[0].mxu0 %v2268
    %v2349 = vpop.f32.mrb[0].mxu0
    %v2350 = vadd.f32 0.0, %v2349
    %v2351 = vpop.f32.mrb[0].mxu0
    %2352 = vmatprep.mubr.f32.mxu0 0.0
    %2353 = vmatmul.mubr.f32.gmra.mrb[0].mxu0 %v2271
    %v2354 = vpop.f32.mrb[0].mxu0
    %v2355 = vadd.f32 0.0, %v2354
    %v2356 = vpop.f32.mrb[0].mxu0
    %2357 = vdwg.mxu0
    %v2359 = vsel %vm154, %v2243, 0
    %v2362 = vsel %vm154, %v2248, 0
    %v2365 = vsel %vm154, %v2253, 0
    %v2368 = vsel %vm154, %v2258, 0
    %2370 = vmatprep.subr.mxu0 0.0
    %2371 = vmatpush1.msra.mxu0 %v2115
    %2372 = vmatprep.subr.mxu0 0.0
    %2373 = vmatpush1.msra.mxu0 %v2116
    %2374 = vmatprep.subr.mxu0 0.0
    %2375 = vmatpush1.msra.mxu0 %v2117
    %2376 = vmatprep.subr.mxu0 0.0
    %2377 = vmatpush1.msra.mxu0 %v2118
    %2378 = vmatprep.subr.mxu0 0.0
    %2379 = vmatpush1.msra.mxu0 0.0
    %2380 = vmatprep.subr.mxu0 0.0
    %2381 = vmatpush1.msra.mxu0 0.0
    %2382 = vmatprep.subr.mxu0 0.0
    %2383 = vmatpush1.msra.mxu0 0.0
    %2384 = vmatprep.subr.mxu0 0.0
    %2385 = vmatpush1.msra.mxu0 0.0
    %2386 = vmatprep.subr.mxu0 0.0
    %2387 = vmatpush1.msra.mxu0 0.0
    %2388 = vmatprep.subr.mxu0 0.0
    %2389 = vmatpush1.msra.mxu0 0.0
    %2390 = vmatprep.subr.mxu0 0.0
    %2391 = vmatpush1.msra.mxu0 0.0
    %2392 = vmatprep.subr.mxu0 0.0
    %2393 = vmatpush1.msra.mxu0 0.0
    %2394 = vmatprep.subr.mxu0 0.0
    %2395 = vmatpush1.msra.mxu0 0.0
    %2396 = vmatprep.subr.mxu0 0.0
    %2397 = vmatpush1.msra.mxu0 0.0
    %2398 = vmatprep.subr.mxu0 0.0
    %2399 = vmatpush1.msra.mxu0 0.0
    %2400 = vmatprep.subr.mxu0 0.0
    %2401 = vmatpush1.msra.mxu0 0.0
    %2402 = vmatprep.subr.mxu0 0.0
    %2403 = vmatpush1.msra.mxu0 0.0
    %2404 = vmatprep.subr.mxu0 0.0
    %2405 = vmatpush1.msra.mxu0 0.0
    %2406 = vmatprep.subr.mxu0 0.0
    %2407 = vmatpush1.msra.mxu0 0.0
    %2408 = vmatprep.subr.mxu0 0.0
    %2409 = vmatpush1.msra.mxu0 0.0
    %2410 = vmatprep.subr.mxu0 0.0
    %2411 = vmatpush1.msra.mxu0 0.0
    %2412 = vmatprep.subr.mxu0 0.0
    %2413 = vmatpush1.msra.mxu0 0.0
    %2414 = vmatprep.subr.mxu0 0.0
    %2415 = vmatpush1.msra.mxu0 0.0
    %2416 = vmatprep.subr.mxu0 0.0
    %2417 = vmatpush1.msra.mxu0 0.0
    %2418 = vmatprep.subr.mxu0 0.0
    %2419 = vmatpush1.msra.mxu0 0.0
    %2420 = vmatprep.subr.mxu0 0.0
    %2421 = vmatpush1.msra.mxu0 0.0
    %2422 = vmatprep.subr.mxu0 0.0
    %2423 = vmatpush1.msra.mxu0 0.0
    %2424 = vmatprep.subr.mxu0 0.0
    %2425 = vmatpush1.msra.mxu0 0.0
    %2426 = vmatprep.subr.mxu0 0.0
    %2427 = vmatpush1.msra.mxu0 0.0
    %2428 = vmatprep.subr.mxu0 0.0
    %2429 = vmatpush1.msra.mxu0 0.0
    %2430 = vmatprep.subr.mxu0 0.0
    %2431 = vmatpush1.msra.mxu0 0.0
    %2432 = vmatprep.subr.mxu0 0.0
    %2433 = vmatpush1.msra.mxu0 0.0
    %2434 = vmatprep.mubr.f32.mxu0 0.0
    %2435 = vmatmul.mubr.f32.gmra.mrb[0].mxu0 %v2359
    %v2436 = vpop.f32.mrb[0].mxu0
    %v2437 = vadd.f32 0.0, %v2436
    %v2438 = vpop.f32.mrb[0].mxu0
    %2439 = vmatprep.mubr.f32.mxu0 0.0
    %2440 = vmatmul.mubr.f32.gmra.mrb[0].mxu0 %v2362
    %v2441 = vpop.f32.mrb[0].mxu0
    %v2442 = vadd.f32 0.0, %v2441
    %v2443 = vpop.f32.mrb[0].mxu0
    %2444 = vmatprep.mubr.f32.mxu0 0.0
    %2445 = vmatmul.mubr.f32.gmra.mrb[0].mxu0 %v2365
    %v2446 = vpop.f32.mrb[0].mxu0
    %v2447 = vadd.f32 0.0, %v2446
    %v2448 = vpop.f32.mrb[0].mxu0
    %2449 = vmatprep.mubr.f32.mxu0 0.0
    %2450 = vmatmul.mubr.f32.gmra.mrb[0].mxu0 %v2368
    %v2451 = vpop.f32.mrb[0].mxu0
    %v2452 = vadd.f32 0.0, %v2451
    %v2453 = vpop.f32.mrb[0].mxu0
    %2454 = vdwg.mxu0
    %v2456 = vsel %vm154, %v2340, 0
    %v2459 = vsel %vm154, %v2345, 0
    %v2462 = vsel %vm154, %v2350, 0
    %v2465 = vsel %vm154, %v2355, 0
    %2467 = vmatprep.subr.mxu0 0.0
    %2468 = vmatpush1.msra.mxu0 %v2119
    %2469 = vmatprep.subr.mxu0 0.0
    %2470 = vmatpush1.msra.mxu0 %v2120
    %2471 = vmatprep.subr.mxu0 0.0
    %2472 = vmatpush1.msra.mxu0 %v2121
    %2473 = vmatprep.subr.mxu0 0.0
    %2474 = vmatpush1.msra.mxu0 %v2122
    %2475 = vmatprep.subr.mxu0 0.0
    %2476 = vmatpush1.msra.mxu0 0.0
    %2477 = vmatprep.subr.mxu0 0.0
    %2478 = vmatpush1.msra.mxu0 0.0
    %2479 = vmatprep.subr.mxu0 0.0
    %2480 = vmatpush1.msra.mxu0 0.0
    %2481 = vmatprep.subr.mxu0 0.0
    %2482 = vmatpush1.msra.mxu0 0.0
    %2483 = vmatprep.subr.mxu0 0.0
    %2484 = vmatpush1.msra.mxu0 0.0
    %2485 = vmatprep.subr.mxu0 0.0
    %2486 = vmatpush1.msra.mxu0 0.0
    %2487 = vmatprep.subr.mxu0 0.0
    %2488 = vmatpush1.msra.mxu0 0.0
    %2489 = vmatprep.subr.mxu0 0.0
    %2490 = vmatpush1.msra.mxu0 0.0
    %2491 = vmatprep.subr.mxu0 0.0
    %2492 = vmatpush1.msra.mxu0 0.0
    %2493 = vmatprep.subr.mxu0 0.0
    %2494 = vmatpush1.msra.mxu0 0.0
    %2495 = vmatprep.subr.mxu0 0.0
    %2496 = vmatpush1.msra.mxu0 0.0
    %2497 = vmatprep.subr.mxu0 0.0
    %2498 = vmatpush1.msra.mxu0 0.0
    %2499 = vmatprep.subr.mxu0 0.0
    %2500 = vmatpush1.msra.mxu0 0.0
    %2501 = vmatprep.subr.mxu0 0.0
    %2502 = vmatpush1.msra.mxu0 0.0
    %2503 = vmatprep.subr.mxu0 0.0
    %2504 = vmatpush1.msra.mxu0 0.0
    %2505 = vmatprep.subr.mxu0 0.0
    %2506 = vmatpush1.msra.mxu0 0.0
    %2507 = vmatprep.subr.mxu0 0.0
    %2508 = vmatpush1.msra.mxu0 0.0
    %2509 = vmatprep.subr.mxu0 0.0
    %2510 = vmatpush1.msra.mxu0 0.0
    %2511 = vmatprep.subr.mxu0 0.0
    %2512 = vmatpush1.msra.mxu0 0.0
    %2513 = vmatprep.subr.mxu0 0.0
    %2514 = vmatpush1.msra.mxu0 0.0
    %2515 = vmatprep.subr.mxu0 0.0
    %2516 = vmatpush1.msra.mxu0 0.0
    %2517 = vmatprep.subr.mxu0 0.0
    %2518 = vmatpush1.msra.mxu0 0.0
    %2519 = vmatprep.subr.mxu0 0.0
    %2520 = vmatpush1.msra.mxu0 0.0
    %2521 = vmatprep.subr.mxu0 0.0
    %2522 = vmatpush1.msra.mxu0 0.0
    %2523 = vmatprep.subr.mxu0 0.0
    %2524 = vmatpush1.msra.mxu0 0.0
    %2525 = vmatprep.subr.mxu0 0.0
    %2526 = vmatpush1.msra.mxu0 0.0
    %2527 = vmatprep.subr.mxu0 0.0
    %2528 = vmatpush1.msra.mxu0 0.0
    %2529 = vmatprep.subr.mxu0 0.0
    %2530 = vmatpush1.msra.mxu0 0.0
    %2531 = vmatprep.mubr.f32.mxu0 0.0
    %2532 = vmatmul.mubr.f32.gmra.mrb[0].mxu0 %v2456
    %v2533 = vpop.f32.mrb[0].mxu0
    %v2534 = vadd.f32 0.0, %v2533
    %v2535 = vpop.f32.mrb[0].mxu0
    %2536 = vmatprep.mubr.f32.mxu0 0.0
    %2537 = vmatmul.mubr.f32.gmra.mrb[0].mxu0 %v2459
    %v2538 = vpop.f32.mrb[0].mxu0
    %v2539 = vadd.f32 0.0, %v2538
    %v2540 = vpop.f32.mrb[0].mxu0
    %2541 = vmatprep.mubr.f32.mxu0 0.0
    %2542 = vmatmul.mubr.f32.gmra.mrb[0].mxu0 %v2462
    %v2543 = vpop.f32.mrb[0].mxu0
    %v2544 = vadd.f32 0.0, %v2543
    %v2545 = vpop.f32.mrb[0].mxu0
    %2546 = vmatprep.mubr.f32.mxu0 0.0
    %2547 = vmatmul.mubr.f32.gmra.mrb[0].mxu0 %v2465
    %v2548 = vpop.f32.mrb[0].mxu0
    %v2549 = vadd.f32 0.0, %v2548
    %v2550 = vpop.f32.mrb[0].mxu0
    %2551 = vdwg.mxu0
    %2552 = vmatprep.subr.mxu0 0.0
    %2553 = vmatpush1.msra.mxu0 %v2243
    %2554 = vmatprep.subr.mxu0 0.0
    %2555 = vmatpush1.msra.mxu0 %v2248
    %2556 = vmatprep.subr.mxu0 0.0
    %2557 = vmatpush1.msra.mxu0 %v2253
    %2558 = vmatprep.subr.mxu0 0.0
    %2559 = vmatpush1.msra.mxu0 %v2258
    %2560 = vmatprep.subr.mxu0 0.0
    %2561 = vmatpush1.msra.mxu0 0.0
    %2562 = vmatprep.subr.mxu0 0.0
    %2563 = vmatpush1.msra.mxu0 0.0
    %2564 = vmatprep.subr.mxu0 0.0
    %2565 = vmatpush1.msra.mxu0 0.0
    %2566 = vmatprep.subr.mxu0 0.0
    %2567 = vmatpush1.msra.mxu0 0.0
    %2568 = vmatprep.subr.mxu0 0.0
    %2569 = vmatpush1.msra.mxu0 0.0
    %2570 = vmatprep.subr.mxu0 0.0
    %2571 = vmatpush1.msra.mxu0 0.0
    %2572 = vmatprep.subr.mxu0 0.0
    %2573 = vmatpush1.msra.mxu0 0.0
    %2574 = vmatprep.subr.mxu0 0.0
    %2575 = vmatpush1.msra.mxu0 0.0
    %2576 = vmatprep.subr.mxu0 0.0
    %2577 = vmatpush1.msra.mxu0 0.0
    %2578 = vmatprep.subr.mxu0 0.0
    %2579 = vmatpush1.msra.mxu0 0.0
    %2580 = vmatprep.subr.mxu0 0.0
    %2581 = vmatpush1.msra.mxu0 0.0
    %2582 = vmatprep.subr.mxu0 0.0
    %2583 = vmatpush1.msra.mxu0 0.0
    %2584 = vmatprep.subr.mxu0 0.0
    %2585 = vmatpush1.msra.mxu0 0.0
    %2586 = vmatprep.subr.mxu0 0.0
    %2587 = vmatpush1.msra.mxu0 0.0
    %2588 = vmatprep.subr.mxu0 0.0
    %2589 = vmatpush1.msra.mxu0 0.0
    %2590 = vmatprep.subr.mxu0 0.0
    %2591 = vmatpush1.msra.mxu0 0.0
    %2592 = vmatprep.subr.mxu0 0.0
    %2593 = vmatpush1.msra.mxu0 0.0
    %2594 = vmatprep.subr.mxu0 0.0
    %2595 = vmatpush1.msra.mxu0 0.0
    %2596 = vmatprep.subr.mxu0 0.0
    %2597 = vmatpush1.msra.mxu0 0.0
    %2598 = vmatprep.subr.mxu0 0.0
    %2599 = vmatpush1.msra.mxu0 0.0
    %2600 = vmatprep.subr.mxu0 0.0
    %2601 = vmatpush1.msra.mxu0 0.0
    %2602 = vmatprep.subr.mxu0 0.0
    %2603 = vmatpush1.msra.mxu0 0.0
    %2604 = vmatprep.subr.mxu0 0.0
    %2605 = vmatpush1.msra.mxu0 0.0
    %2606 = vmatprep.subr.mxu0 0.0
    %2607 = vmatpush1.msra.mxu0 0.0
    %2608 = vmatprep.subr.mxu0 0.0
    %2609 = vmatpush1.msra.mxu0 0.0
    %2610 = vmatprep.subr.mxu0 0.0
    %2611 = vmatpush1.msra.mxu0 0.0
    %2612 = vmatprep.subr.mxu0 0.0
    %2613 = vmatpush1.msra.mxu0 0.0
    %2614 = vmatprep.subr.mxu0 0.0
    %2615 = vmatpush1.msra.mxu0 0.0
    %2616 = vmatprep.mubr.f32.mxu0 0.0
    %2617 = vmatmul.mubr.f32.gmra.mrb[0].mxu0 %v2359
    %v2618 = vpop.f32.mrb[0].mxu0
    %v2619 = vadd.f32 0.0, %v2618
    %v2620 = vpop.f32.mrb[0].mxu0
    %2621 = vmatprep.mubr.f32.mxu0 0.0
    %2622 = vmatmul.mubr.f32.gmra.mrb[0].mxu0 %v2362
    %v2623 = vpop.f32.mrb[0].mxu0
    %v2624 = vadd.f32 0.0, %v2623
    %v2625 = vpop.f32.mrb[0].mxu0
    %2626 = vmatprep.mubr.f32.mxu0 0.0
    %2627 = vmatmul.mubr.f32.gmra.mrb[0].mxu0 %v2365
    %v2628 = vpop.f32.mrb[0].mxu0
    %v2629 = vadd.f32 0.0, %v2628
    %v2630 = vpop.f32.mrb[0].mxu0
    %2631 = vmatprep.mubr.f32.mxu0 0.0
    %2632 = vmatmul.mubr.f32.gmra.mrb[0].mxu0 %v2368
    %v2633 = vpop.f32.mrb[0].mxu0
    %v2634 = vadd.f32 0.0, %v2633
    %v2635 = vpop.f32.mrb[0].mxu0
    %2636 = vdwg.mxu0
    %2637 = vmatprep.subr.mxu0 0.0
    %2638 = vmatpush1.msra.mxu0 %v2340
    %2639 = vmatprep.subr.mxu0 0.0
    %2640 = vmatpush1.msra.mxu0 %v2345
    %2641 = vmatprep.subr.mxu0 0.0
    %2642 = vmatpush1.msra.mxu0 %v2350
    %2643 = vmatprep.subr.mxu0 0.0
    %2644 = vmatpush1.msra.mxu0 %v2355
    %2645 = vmatprep.subr.mxu0 0.0
    %2646 = vmatpush1.msra.mxu0 0.0
    %2647 = vmatprep.subr.mxu0 0.0
    %2648 = vmatpush1.msra.mxu0 0.0
    %2649 = vmatprep.subr.mxu0 0.0
    %2650 = vmatpush1.msra.mxu0 0.0
    %2651 = vmatprep.subr.mxu0 0.0
    %2652 = vmatpush1.msra.mxu0 0.0
    %2653 = vmatprep.subr.mxu0 0.0
    %2654 = vmatpush1.msra.mxu0 0.0
    %2655 = vmatprep.subr.mxu0 0.0
    %2656 = vmatpush1.msra.mxu0 0.0
    %2657 = vmatprep.subr.mxu0 0.0
    %2658 = vmatpush1.msra.mxu0 0.0
    %2659 = vmatprep.subr.mxu0 0.0
    %2660 = vmatpush1.msra.mxu0 0.0
    %2661 = vmatprep.subr.mxu0 0.0
    %2662 = vmatpush1.msra.mxu0 0.0
    %2663 = vmatprep.subr.mxu0 0.0
    %2664 = vmatpush1.msra.mxu0 0.0
    %2665 = vmatprep.subr.mxu0 0.0
    %2666 = vmatpush1.msra.mxu0 0.0
    %2667 = vmatprep.subr.mxu0 0.0
    %2668 = vmatpush1.msra.mxu0 0.0
    %2669 = vmatprep.subr.mxu0 0.0
    %2670 = vmatpush1.msra.mxu0 0.0
    %2671 = vmatprep.subr.mxu0 0.0
    %2672 = vmatpush1.msra.mxu0 0.0
    %2673 = vmatprep.subr.mxu0 0.0
    %2674 = vmatpush1.msra.mxu0 0.0
    %2675 = vmatprep.subr.mxu0 0.0
    %2676 = vmatpush1.msra.mxu0 0.0
    %2677 = vmatprep.subr.mxu0 0.0
    %2678 = vmatpush1.msra.mxu0 0.0
    %2679 = vmatprep.subr.mxu0 0.0
    %2680 = vmatpush1.msra.mxu0 0.0
    %2681 = vmatprep.subr.mxu0 0.0
    %2682 = vmatpush1.msra.mxu0 0.0
    %2683 = vmatprep.subr.mxu0 0.0
    %2684 = vmatpush1.msra.mxu0 0.0
    %2685 = vmatprep.subr.mxu0 0.0
    %2686 = vmatpush1.msra.mxu0 0.0
    %2687 = vmatprep.subr.mxu0 0.0
    %2688 = vmatpush1.msra.mxu0 0.0
    %2689 = vmatprep.subr.mxu0 0.0
    %2690 = vmatpush1.msra.mxu0 0.0
    %2691 = vmatprep.subr.mxu0 0.0
    %2692 = vmatpush1.msra.mxu0 0.0
    %2693 = vmatprep.subr.mxu0 0.0
    %2694 = vmatpush1.msra.mxu0 0.0
    %2695 = vmatprep.subr.mxu0 0.0
    %2696 = vmatpush1.msra.mxu0 0.0
    %2697 = vmatprep.subr.mxu0 0.0
    %2698 = vmatpush1.msra.mxu0 0.0
    %2699 = vmatprep.subr.mxu0 0.0
    %2700 = vmatpush1.msra.mxu0 0.0
    %2701 = vmatprep.mubr.f32.mxu0 0.0
    %2702 = vmatmul.mubr.f32.gmra.mrb[0].mxu0 %v2456
    %v2703 = vpop.f32.mrb[0].mxu0
    %v2704 = vadd.f32 0.0, %v2703
    %v2705 = vpop.f32.mrb[0].mxu0
    %2706 = vmatprep.mubr.f32.mxu0 0.0
    %2707 = vmatmul.mubr.f32.gmra.mrb[0].mxu0 %v2459
    %v2708 = vpop.f32.mrb[0].mxu0
    %v2709 = vadd.f32 0.0, %v2708
    %v2710 = vpop.f32.mrb[0].mxu0
    %2711 = vmatprep.mubr.f32.mxu0 0.0
    %2712 = vmatmul.mubr.f32.gmra.mrb[0].mxu0 %v2462
    %v2713 = vpop.f32.mrb[0].mxu0
    %v2714 = vadd.f32 0.0, %v2713
    %v2715 = vpop.f32.mrb[0].mxu0
    %2716 = vmatprep.mubr.f32.mxu0 0.0
    %2717 = vmatmul.mubr.f32.gmra.mrb[0].mxu0 %v2465
    %v2718 = vpop.f32.mrb[0].mxu0
    %v2719 = vadd.f32 0.0, %v2718
    %v2720 = vpop.f32.mrb[0].mxu0
    %2721 = vdwg.mxu0
    %v2723 = vsel %vm154, %v2156, 0
    %v2726 = vsel %vm154, %v2157, 0
    %v2729 = vsel %vm154, %v2158, 0
    %v2732 = vsel %vm154, %v2159, 0
    %2734 = vmatprep.subr.mxu0 0.0
    %2735 = vmatpush1.msra.mxu0 %v2156
    %2736 = vmatprep.subr.mxu0 0.0
    %2737 = vmatpush1.msra.mxu0 %v2157
    %2738 = vmatprep.subr.mxu0 0.0
    %2739 = vmatpush1.msra.mxu0 %v2158
    %2740 = vmatprep.subr.mxu0 0.0
    %2741 = vmatpush1.msra.mxu0 %v2159
    %2742 = vmatprep.subr.mxu0 0.0
    %2743 = vmatpush1.msra.mxu0 0.0
    %2744 = vmatprep.subr.mxu0 0.0
    %2745 = vmatpush1.msra.mxu0 0.0
    %2746 = vmatprep.subr.mxu0 0.0
    %2747 = vmatpush1.msra.mxu0 0.0
    %2748 = vmatprep.subr.mxu0 0.0
    %2749 = vmatpush1.msra.mxu0 0.0
    %2750 = vmatprep.subr.mxu0 0.0
    %2751 = vmatpush1.msra.mxu0 0.0
    %2752 = vmatprep.subr.mxu0 0.0
    %2753 = vmatpush1.msra.mxu0 0.0
    %2754 = vmatprep.subr.mxu0 0.0
    %2755 = vmatpush1.msra.mxu0 0.0
    %2756 = vmatprep.subr.mxu0 0.0
    %2757 = vmatpush1.msra.mxu0 0.0
    %2758 = vmatprep.subr.mxu0 0.0
    %2759 = vmatpush1.msra.mxu0 0.0
    %2760 = vmatprep.subr.mxu0 0.0
    %2761 = vmatpush1.msra.mxu0 0.0
    %2762 = vmatprep.subr.mxu0 0.0
    %2763 = vmatpush1.msra.mxu0 0.0
    %2764 = vmatprep.subr.mxu0 0.0
    %2765 = vmatpush1.msra.mxu0 0.0
    %2766 = vmatprep.subr.mxu0 0.0
    %2767 = vmatpush1.msra.mxu0 0.0
    %2768 = vmatprep.subr.mxu0 0.0
    %2769 = vmatpush1.msra.mxu0 0.0
    %2770 = vmatprep.subr.mxu0 0.0
    %2771 = vmatpush1.msra.mxu0 0.0
    %2772 = vmatprep.subr.mxu0 0.0
    %2773 = vmatpush1.msra.mxu0 0.0
    %2774 = vmatprep.subr.mxu0 0.0
    %2775 = vmatpush1.msra.mxu0 0.0
    %2776 = vmatprep.subr.mxu0 0.0
    %2777 = vmatpush1.msra.mxu0 0.0
    %2778 = vmatprep.subr.mxu0 0.0
    %2779 = vmatpush1.msra.mxu0 0.0
    %2780 = vmatprep.subr.mxu0 0.0
    %2781 = vmatpush1.msra.mxu0 0.0
    %2782 = vmatprep.subr.mxu0 0.0
    %2783 = vmatpush1.msra.mxu0 0.0
    %2784 = vmatprep.subr.mxu0 0.0
    %2785 = vmatpush1.msra.mxu0 0.0
    %2786 = vmatprep.subr.mxu0 0.0
    %2787 = vmatpush1.msra.mxu0 0.0
    %2788 = vmatprep.subr.mxu0 0.0
    %2789 = vmatpush1.msra.mxu0 0.0
    %2790 = vmatprep.subr.mxu0 0.0
    %2791 = vmatpush1.msra.mxu0 0.0
    %2792 = vmatprep.subr.mxu0 0.0
    %2793 = vmatpush1.msra.mxu0 0.0
    %2794 = vmatprep.subr.mxu0 0.0
    %2795 = vmatpush1.msra.mxu0 0.0
    %2796 = vmatprep.subr.mxu0 0.0
    %2797 = vmatpush1.msra.mxu0 0.0
    %2798 = vmatprep.mubr.f32.mxu0 0.0
    %2799 = vmatmul.mubr.f32.gmra.mrb[0].mxu0 %v2723
    %v2800 = vpop.f32.mrb[0].mxu0
    %v2801 = vadd.f32 0.0, %v2800
    %v2802 = vpop.f32.mrb[0].mxu0
    %2803 = vmatprep.mubr.f32.mxu0 0.0
    %2804 = vmatmul.mubr.f32.gmra.mrb[0].mxu0 %v2726
    %v2805 = vpop.f32.mrb[0].mxu0
    %v2806 = vadd.f32 0.0, %v2805
    %v2807 = vpop.f32.mrb[0].mxu0
    %2808 = vmatprep.mubr.f32.mxu0 0.0
    %2809 = vmatmul.mubr.f32.gmra.mrb[0].mxu0 %v2729
    %v2810 = vpop.f32.mrb[0].mxu0
    %v2811 = vadd.f32 0.0, %v2810
    %v2812 = vpop.f32.mrb[0].mxu0
    %2813 = vmatprep.mubr.f32.mxu0 0.0
    %2814 = vmatmul.mubr.f32.gmra.mrb[0].mxu0 %v2732
    %v2815 = vpop.f32.mrb[0].mxu0
    %v2816 = vadd.f32 0.0, %v2815
    %v2817 = vpop.f32.mrb[0].mxu0
    %2818 = vdwg.mxu0
    %v2820 = vsel %vm154, %v2160, 0
    %v2823 = vsel %vm154, %v2161, 0
    %v2826 = vsel %vm154, %v2162, 0
    %v2829 = vsel %vm154, %v2163, 0
    %2831 = vmatprep.subr.mxu0 0.0
    %2832 = vmatpush1.msra.mxu0 %v2160
    %2833 = vmatprep.subr.mxu0 0.0
    %2834 = vmatpush1.msra.mxu0 %v2161
    %2835 = vmatprep.subr.mxu0 0.0
    %2836 = vmatpush1.msra.mxu0 %v2162
    %2837 = vmatprep.subr.mxu0 0.0
    %2838 = vmatpush1.msra.mxu0 %v2163
    %2839 = vmatprep.subr.mxu0 0.0
    %2840 = vmatpush1.msra.mxu0 0.0
    %2841 = vmatprep.subr.mxu0 0.0
    %2842 = vmatpush1.msra.mxu0 0.0
    %2843 = vmatprep.subr.mxu0 0.0
    %2844 = vmatpush1.msra.mxu0 0.0
    %2845 = vmatprep.subr.mxu0 0.0
    %2846 = vmatpush1.msra.mxu0 0.0
    %2847 = vmatprep.subr.mxu0 0.0
    %2848 = vmatpush1.msra.mxu0 0.0
    %2849 = vmatprep.subr.mxu0 0.0
    %2850 = vmatpush1.msra.mxu0 0.0
    %2851 = vmatprep.subr.mxu0 0.0
    %2852 = vmatpush1.msra.mxu0 0.0
    %2853 = vmatprep.subr.mxu0 0.0
    %2854 = vmatpush1.msra.mxu0 0.0
    %2855 = vmatprep.subr.mxu0 0.0
    %2856 = vmatpush1.msra.mxu0 0.0
    %2857 = vmatprep.subr.mxu0 0.0
    %2858 = vmatpush1.msra.mxu0 0.0
    %2859 = vmatprep.subr.mxu0 0.0
    %2860 = vmatpush1.msra.mxu0 0.0
    %2861 = vmatprep.subr.mxu0 0.0
    %2862 = vmatpush1.msra.mxu0 0.0
    %2863 = vmatprep.subr.mxu0 0.0
    %2864 = vmatpush1.msra.mxu0 0.0
    %2865 = vmatprep.subr.mxu0 0.0
    %2866 = vmatpush1.msra.mxu0 0.0
    %2867 = vmatprep.subr.mxu0 0.0
    %2868 = vmatpush1.msra.mxu0 0.0
    %2869 = vmatprep.subr.mxu0 0.0
    %2870 = vmatpush1.msra.mxu0 0.0
    %2871 = vmatprep.subr.mxu0 0.0
    %2872 = vmatpush1.msra.mxu0 0.0
    %2873 = vmatprep.subr.mxu0 0.0
    %2874 = vmatpush1.msra.mxu0 0.0
    %2875 = vmatprep.subr.mxu0 0.0
    %2876 = vmatpush1.msra.mxu0 0.0
    %2877 = vmatprep.subr.mxu0 0.0
    %2878 = vmatpush1.msra.mxu0 0.0
    %2879 = vmatprep.subr.mxu0 0.0
    %2880 = vmatpush1.msra.mxu0 0.0
    %2881 = vmatprep.subr.mxu0 0.0
    %2882 = vmatpush1.msra.mxu0 0.0
    %2883 = vmatprep.subr.mxu0 0.0
    %2884 = vmatpush1.msra.mxu0 0.0
    %2885 = vmatprep.subr.mxu0 0.0
    %2886 = vmatpush1.msra.mxu0 0.0
    %2887 = vmatprep.subr.mxu0 0.0
    %2888 = vmatpush1.msra.mxu0 0.0
    %2889 = vmatprep.subr.mxu0 0.0
    %2890 = vmatpush1.msra.mxu0 0.0
    %2891 = vmatprep.subr.mxu0 0.0
    %2892 = vmatpush1.msra.mxu0 0.0
    %2893 = vmatprep.subr.mxu0 0.0
    %2894 = vmatpush1.msra.mxu0 0.0
    %2895 = vmatprep.mubr.f32.mxu0 0.0
    %2896 = vmatmul.mubr.f32.gmra.mrb[0].mxu0 %v2820
    %v2897 = vpop.f32.mrb[0].mxu0
    %v2898 = vadd.f32 0.0, %v2897
    %v2899 = vpop.f32.mrb[0].mxu0
    %2900 = vmatprep.mubr.f32.mxu0 0.0
    %2901 = vmatmul.mubr.f32.gmra.mrb[0].mxu0 %v2823
    %v2902 = vpop.f32.mrb[0].mxu0
    %v2903 = vadd.f32 0.0, %v2902
    %v2904 = vpop.f32.mrb[0].mxu0
    %2905 = vmatprep.mubr.f32.mxu0 0.0
    %2906 = vmatmul.mubr.f32.gmra.mrb[0].mxu0 %v2826
    %v2907 = vpop.f32.mrb[0].mxu0
    %v2908 = vadd.f32 0.0, %v2907
    %v2909 = vpop.f32.mrb[0].mxu0
    %2910 = vmatprep.mubr.f32.mxu0 0.0
    %2911 = vmatmul.mubr.f32.gmra.mrb[0].mxu0 %v2829
    %v2912 = vpop.f32.mrb[0].mxu0
    %v2913 = vadd.f32 0.0, %v2912
    %v2914 = vpop.f32.mrb[0].mxu0
    %2915 = vdwg.mxu0
    %v2917 = vsel %vm154, %v2801, 0
    %v2920 = vsel %vm154, %v2806, 0
    %v2923 = vsel %vm154, %v2811, 0
    %v2926 = vsel %vm154, %v2816, 0
    %2928 = vmatprep.subr.mxu0 0.0
    %2929 = vmatpush1.msra.mxu0 %v2801
    %2930 = vmatprep.subr.mxu0 0.0
    %2931 = vmatpush1.msra.mxu0 %v2806
    %2932 = vmatprep.subr.mxu0 0.0
    %2933 = vmatpush1.msra.mxu0 %v2811
    %2934 = vmatprep.subr.mxu0 0.0
    %2935 = vmatpush1.msra.mxu0 %v2816
    %2936 = vmatprep.subr.mxu0 0.0
    %2937 = vmatpush1.msra.mxu0 0.0
    %2938 = vmatprep.subr.mxu0 0.0
    %2939 = vmatpush1.msra.mxu0 0.0
    %2940 = vmatprep.subr.mxu0 0.0
    %2941 = vmatpush1.msra.mxu0 0.0
    %2942 = vmatprep.subr.mxu0 0.0
    %2943 = vmatpush1.msra.mxu0 0.0
    %2944 = vmatprep.subr.mxu0 0.0
    %2945 = vmatpush1.msra.mxu0 0.0
    %2946 = vmatprep.subr.mxu0 0.0
    %2947 = vmatpush1.msra.mxu0 0.0
    %2948 = vmatprep.subr.mxu0 0.0
    %2949 = vmatpush1.msra.mxu0 0.0
    %2950 = vmatprep.subr.mxu0 0.0
    %2951 = vmatpush1.msra.mxu0 0.0
    %2952 = vmatprep.subr.mxu0 0.0
    %2953 = vmatpush1.msra.mxu0 0.0
    %2954 = vmatprep.subr.mxu0 0.0
    %2955 = vmatpush1.msra.mxu0 0.0
    %2956 = vmatprep.subr.mxu0 0.0
    %2957 = vmatpush1.msra.mxu0 0.0
    %2958 = vmatprep.subr.mxu0 0.0
    %2959 = vmatpush1.msra.mxu0 0.0
    %2960 = vmatprep.subr.mxu0 0.0
    %2961 = vmatpush1.msra.mxu0 0.0
    %2962 = vmatprep.subr.mxu0 0.0
    %2963 = vmatpush1.msra.mxu0 0.0
    %2964 = vmatprep.subr.mxu0 0.0
    %2965 = vmatpush1.msra.mxu0 0.0
    %2966 = vmatprep.subr.mxu0 0.0
    %2967 = vmatpush1.msra.mxu0 0.0
    %2968 = vmatprep.subr.mxu0 0.0
    %2969 = vmatpush1.msra.mxu0 0.0
    %2970 = vmatprep.subr.mxu0 0.0
    %2971 = vmatpush1.msra.mxu0 0.0
    %2972 = vmatprep.subr.mxu0 0.0
    %2973 = vmatpush1.msra.mxu0 0.0
    %2974 = vmatprep.subr.mxu0 0.0
    %2975 = vmatpush1.msra.mxu0 0.0
    %2976 = vmatprep.subr.mxu0 0.0
    %2977 = vmatpush1.msra.mxu0 0.0
    %2978 = vmatprep.subr.mxu0 0.0
    %2979 = vmatpush1.msra.mxu0 0.0
    %2980 = vmatprep.subr.mxu0 0.0
    %2981 = vmatpush1.msra.mxu0 0.0
    %2982 = vmatprep.subr.mxu0 0.0
    %2983 = vmatpush1.msra.mxu0 0.0
    %2984 = vmatprep.subr.mxu0 0.0
    %2985 = vmatpush1.msra.mxu0 0.0
    %2986 = vmatprep.subr.mxu0 0.0
    %2987 = vmatpush1.msra.mxu0 0.0
    %2988 = vmatprep.subr.mxu0 0.0
    %2989 = vmatpush1.msra.mxu0 0.0
    %2990 = vmatprep.subr.mxu0 0.0
    %2991 = vmatpush1.msra.mxu0 0.0
    %2992 = vmatprep.mubr.f32.mxu0 0.0
    %2993 = vmatmul.mubr.f32.gmra.mrb[0].mxu0 %v2917
    %v2994 = vpop.f32.mrb[0].mxu0
    %v2995 = vadd.f32 0.0, %v2994
    %v2996 = vpop.f32.mrb[0].mxu0
    %2997 = vmatprep.mubr.f32.mxu0 0.0
    %2998 = vmatmul.mubr.f32.gmra.mrb[0].mxu0 %v2920
    %v2999 = vpop.f32.mrb[0].mxu0
    %v3000 = vadd.f32 0.0, %v2999
    %v3001 = vpop.f32.mrb[0].mxu0
    %3002 = vmatprep.mubr.f32.mxu0 0.0
    %3003 = vmatmul.mubr.f32.gmra.mrb[0].mxu0 %v2923
    %v3004 = vpop.f32.mrb[0].mxu0
    %v3005 = vadd.f32 0.0, %v3004
    %v3006 = vpop.f32.mrb[0].mxu0
    %3007 = vmatprep.mubr.f32.mxu0 0.0
    %3008 = vmatmul.mubr.f32.gmra.mrb[0].mxu0 %v2926
    %v3009 = vpop.f32.mrb[0].mxu0
    %v3010 = vadd.f32 0.0, %v3009
    %v3011 = vpop.f32.mrb[0].mxu0
    %3012 = vdwg.mxu0
    %v3014 = vsel %vm154, %v2898, 0
    %v3017 = vsel %vm154, %v2903, 0
    %v3020 = vsel %vm154, %v2908, 0
    %v3023 = vsel %vm154, %v2913, 0
    %3025 = vmatprep.subr.mxu0 0.0
    %3026 = vmatpush1.msra.mxu0 %v2898
    %3027 = vmatprep.subr.mxu0 0.0
    %3028 = vmatpush1.msra.mxu0 %v2903
    %3029 = vmatprep.subr.mxu0 0.0
    %3030 = vmatpush1.msra.mxu0 %v2908
    %3031 = vmatprep.subr.mxu0 0.0
    %3032 = vmatpush1.msra.mxu0 %v2913
    %3033 = vmatprep.subr.mxu0 0.0
    %3034 = vmatpush1.msra.mxu0 0.0
    %3035 = vmatprep.subr.mxu0 0.0
    %3036 = vmatpush1.msra.mxu0 0.0
    %3037 = vmatprep.subr.mxu0 0.0
    %3038 = vmatpush1.msra.mxu0 0.0
    %3039 = vmatprep.subr.mxu0 0.0
    %3040 = vmatpush1.msra.mxu0 0.0
    %3041 = vmatprep.subr.mxu0 0.0
    %3042 = vmatpush1.msra.mxu0 0.0
    %3043 = vmatprep.subr.mxu0 0.0
    %3044 = vmatpush1.msra.mxu0 0.0
    %3045 = vmatprep.subr.mxu0 0.0
    %3046 = vmatpush1.msra.mxu0 0.0
    %3047 = vmatprep.subr.mxu0 0.0
    %3048 = vmatpush1.msra.mxu0 0.0
    %3049 = vmatprep.subr.mxu0 0.0
    %3050 = vmatpush1.msra.mxu0 0.0
    %3051 = vmatprep.subr.mxu0 0.0
    %3052 = vmatpush1.msra.mxu0 0.0
    %3053 = vmatprep.subr.mxu0 0.0
    %3054 = vmatpush1.msra.mxu0 0.0
    %3055 = vmatprep.subr.mxu0 0.0
    %3056 = vmatpush1.msra.mxu0 0.0
    %3057 = vmatprep.subr.mxu0 0.0
    %3058 = vmatpush1.msra.mxu0 0.0
    %3059 = vmatprep.subr.mxu0 0.0
    %3060 = vmatpush1.msra.mxu0 0.0
    %3061 = vmatprep.subr.mxu0 0.0
    %3062 = vmatpush1.msra.mxu0 0.0
    %3063 = vmatprep.subr.mxu0 0.0
    %3064 = vmatpush1.msra.mxu0 0.0
    %3065 = vmatprep.subr.mxu0 0.0
    %3066 = vmatpush1.msra.mxu0 0.0
    %3067 = vmatprep.subr.mxu0 0.0
    %3068 = vmatpush1.msra.mxu0 0.0
    %3069 = vmatprep.subr.mxu0 0.0
    %3070 = vmatpush1.msra.mxu0 0.0
    %3071 = vmatprep.subr.mxu0 0.0
    %3072 = vmatpush1.msra.mxu0 0.0
    %3073 = vmatprep.subr.mxu0 0.0
    %3074 = vmatpush1.msra.mxu0 0.0
    %3075 = vmatprep.subr.mxu0 0.0
    %3076 = vmatpush1.msra.mxu0 0.0
    %3077 = vmatprep.subr.mxu0 0.0
    %3078 = vmatpush1.msra.mxu0 0.0
    %3079 = vmatprep.subr.mxu0 0.0
    %3080 = vmatpush1.msra.mxu0 0.0
    %3081 = vmatprep.subr.mxu0 0.0
    %3082 = vmatpush1.msra.mxu0 0.0
    %3083 = vmatprep.subr.mxu0 0.0
    %3084 = vmatpush1.msra.mxu0 0.0
    %3085 = vmatprep.subr.mxu0 0.0
    %3086 = vmatpush1.msra.mxu0 0.0
    %3087 = vmatprep.subr.mxu0 0.0
    %3088 = vmatpush1.msra.mxu0 0.0
    %3089 = vmatprep.mubr.f32.mxu0 0.0
    %3090 = vmatmul.mubr.f32.gmra.mrb[0].mxu0 %v3014
    %v3091 = vpop.f32.mrb[0].mxu0
    %v3092 = vadd.f32 0.0, %v3091
    %v3093 = vpop.f32.mrb[0].mxu0
    %3094 = vmatprep.mubr.f32.mxu0 0.0
    %3095 = vmatmul.mubr.f32.gmra.mrb[0].mxu0 %v3017
    %v3096 = vpop.f32.mrb[0].mxu0
    %v3097 = vadd.f32 0.0, %v3096
    %v3098 = vpop.f32.mrb[0].mxu0
    %3099 = vmatprep.mubr.f32.mxu0 0.0
    %3100 = vmatmul.mubr.f32.gmra.mrb[0].mxu0 %v3020
    %v3101 = vpop.f32.mrb[0].mxu0
    %v3102 = vadd.f32 0.0, %v3101
    %v3103 = vpop.f32.mrb[0].mxu0
    %3104 = vmatprep.mubr.f32.mxu0 0.0
    %3105 = vmatmul.mubr.f32.gmra.mrb[0].mxu0 %v3023
    %v3106 = vpop.f32.mrb[0].mxu0
    %v3107 = vadd.f32 0.0, %v3106
    %v3108 = vpop.f32.mrb[0].mxu0
    %3109 = vdwg.mxu0
    %v3110 = vmul.f32 %v2115, %v2156
    %v3111 = vmul.f32 %v2116, %v2157
    %v3112 = vmul.f32 %v2117, %v2158
    %v3113 = vmul.f32 %v2118, %v2159
    %v3114 = vmul.f32 %v2119, %v2160
    %v3115 = vmul.f32 %v2120, %v2161
    %v3116 = vmul.f32 %v2121, %v2162
    %v3117 = vmul.f32 %v2122, %v2163
    %v3118 = vsel %vm154, %v3110, 0.0
    %3119 = vadd.xlane.f32.xlu0 %v3118
    %v3120 = vpop.xlane.xlu0 %3119
    %v3121 = vsel %vm154, %v3111, 0.0
    %3122 = vadd.xlane.f32.xlu0 %v3121
    %v3123 = vpop.xlane.xlu0 %3122
    %v3124 = vsel %vm154, %v3112, 0.0
    %3125 = vadd.xlane.f32.xlu0 %v3124
    %v3126 = vpop.xlane.xlu0 %3125
    %v3127 = vsel %vm154, %v3113, 0.0
    %3128 = vadd.xlane.f32.xlu0 %v3127
    %v3129 = vpop.xlane.xlu0 %3128
    %v3130 = vsel %vm154, %v3114, 0.0
    %3131 = vadd.xlane.f32.xlu0 %v3130
    %v3132 = vpop.xlane.xlu0 %3131
    %v3133 = vsel %vm154, %v3115, 0.0
    %3134 = vadd.xlane.f32.xlu0 %v3133
    %v3135 = vpop.xlane.xlu0 %3134
    %v3136 = vsel %vm154, %v3116, 0.0
    %3137 = vadd.xlane.f32.xlu0 %v3136
    %v3138 = vpop.xlane.xlu0 %3137
    %v3139 = vsel %vm154, %v3117, 0.0
    %3140 = vadd.xlane.f32.xlu0 %v3139
    %v3141 = vpop.xlane.xlu0 %3140
    %v3150 = vlaneseq
    %v3151 = vshrl.u32 %v3150, 7
    %v3152 = vsub.s32 %v1313, %v3151
    %v3153 = vrot.slane %v3120, %v3152
    %v3154 = vlaneseq
    %v3155 = vshrl.u32 %v3154, 7
    %v3156 = vsub.s32 %v1318, %v3155
    %v3157 = vrot.slane %v3123, %v3156
    %v3158 = vsel %vm1323, %v3157, %v3153
    %v3159 = vlaneseq
    %v3160 = vshrl.u32 %v3159, 7
    %v3161 = vsub.s32 %v1325, %v3160
    %v3162 = vrot.slane %v3126, %v3161
    %v3163 = vsel %vm1330, %v3162, %v3158
    %v3164 = vlaneseq
    %v3165 = vshrl.u32 %v3164, 7
    %v3166 = vsub.s32 %v1332, %v3165
    %v3167 = vrot.slane %v3129, %v3166
    %v3168 = vsel %vm1337, %v3167, %v3163
    %v3169 = vlaneseq
    %v3170 = vshrl.u32 %v3169, 7
    %v3171 = vsub.s32 %v1313, %v3170
    %v3172 = vrot.slane %v3132, %v3171
    %v3173 = vlaneseq
    %v3174 = vshrl.u32 %v3173, 7
    %v3175 = vsub.s32 %v1318, %v3174
    %v3176 = vrot.slane %v3135, %v3175
    %v3177 = vsel %vm1323, %v3176, %v3172
    %v3178 = vlaneseq
    %v3179 = vshrl.u32 %v3178, 7
    %v3180 = vsub.s32 %v1325, %v3179
    %v3181 = vrot.slane %v3138, %v3180
    %v3182 = vsel %vm1330, %v3181, %v3177
    %v3183 = vlaneseq
    %v3184 = vshrl.u32 %v3183, 7
    %v3185 = vsub.s32 %v1332, %v3184
    %v3186 = vrot.slane %v3141, %v3185
    %v3187 = vsel %vm1337, %v3186, %v3182
    %v3188 = vsel %vm1358, %v3187, %v3168
    %v3190 = vsel %vm235, %v3188, 0.0
    %3191 = vadd.xlane.f32.xlu0 %v3190
    %v3192 = vpop.xlane.xlu0 %3191
    %v3193 = vmul.f32 %v3192, 0.5
    %v3194 = vsub.f32 %v2076, %v3193
    %v3195 = vmul.f32 %v2243, %v2156
    %v3196 = vmul.f32 %v2248, %v2157
    %v3197 = vmul.f32 %v2253, %v2158
    %v3198 = vmul.f32 %v2258, %v2159
    %v3199 = vmul.f32 %v2340, %v2160
    %v3200 = vmul.f32 %v2345, %v2161
    %v3201 = vmul.f32 %v2350, %v2162
    %v3202 = vmul.f32 %v2355, %v2163
    %v3203 = vsel %vm154, %v3195, 0.0
    %3204 = vadd.xlane.f32.xlu0 %v3203
    %v3205 = vpop.xlane.xlu0 %3204
    %v3206 = vsel %vm154, %v3196, 0.0
    %3207 = vadd.xlane.f32.xlu0 %v3206
    %v3208 = vpop.xlane.xlu0 %3207
    %v3209 = vsel %vm154, %v3197, 0.0
    %3210 = vadd.xlane.f32.xlu0 %v3209
    %v3211 = vpop.xlane.xlu0 %3210
    %v3212 = vsel %vm154, %v3198, 0.0
    %3213 = vadd.xlane.f32.xlu0 %v3212
    %v3214 = vpop.xlane.xlu0 %3213
    %v3215 = vsel %vm154, %v3199, 0.0
    %3216 = vadd.xlane.f32.xlu0 %v3215
    %v3217 = vpop.xlane.xlu0 %3216
    %v3218 = vsel %vm154, %v3200, 0.0
    %3219 = vadd.xlane.f32.xlu0 %v3218
    %v3220 = vpop.xlane.xlu0 %3219
    %v3221 = vsel %vm154, %v3201, 0.0
    %3222 = vadd.xlane.f32.xlu0 %v3221
    %v3223 = vpop.xlane.xlu0 %3222
    %v3224 = vsel %vm154, %v3202, 0.0
    %3225 = vadd.xlane.f32.xlu0 %v3224
    %v3226 = vpop.xlane.xlu0 %3225
    %v3235 = vlaneseq
    %v3236 = vshrl.u32 %v3235, 7
    %v3237 = vsub.s32 %v1313, %v3236
    %v3238 = vrot.slane %v3205, %v3237
    %v3239 = vlaneseq
    %v3240 = vshrl.u32 %v3239, 7
    %v3241 = vsub.s32 %v1318, %v3240
    %v3242 = vrot.slane %v3208, %v3241
    %v3243 = vsel %vm1323, %v3242, %v3238
    %v3244 = vlaneseq
    %v3245 = vshrl.u32 %v3244, 7
    %v3246 = vsub.s32 %v1325, %v3245
    %v3247 = vrot.slane %v3211, %v3246
    %v3248 = vsel %vm1330, %v3247, %v3243
    %v3249 = vlaneseq
    %v3250 = vshrl.u32 %v3249, 7
    %v3251 = vsub.s32 %v1332, %v3250
    %v3252 = vrot.slane %v3214, %v3251
    %v3253 = vsel %vm1337, %v3252, %v3248
    %v3254 = vlaneseq
    %v3255 = vshrl.u32 %v3254, 7
    %v3256 = vsub.s32 %v1313, %v3255
    %v3257 = vrot.slane %v3217, %v3256
    %v3258 = vlaneseq
    %v3259 = vshrl.u32 %v3258, 7
    %v3260 = vsub.s32 %v1318, %v3259
    %v3261 = vrot.slane %v3220, %v3260
    %v3262 = vsel %vm1323, %v3261, %v3257
    %v3263 = vlaneseq
    %v3264 = vshrl.u32 %v3263, 7
    %v3265 = vsub.s32 %v1325, %v3264
    %v3266 = vrot.slane %v3223, %v3265
    %v3267 = vsel %vm1330, %v3266, %v3262
    %v3268 = vlaneseq
    %v3269 = vshrl.u32 %v3268, 7
    %v3270 = vsub.s32 %v1332, %v3269
    %v3271 = vrot.slane %v3226, %v3270
    %v3272 = vsel %vm1337, %v3271, %v3267
    %v3273 = vsel %vm1358, %v3272, %v3253
    %v3275 = vsel %vm235, %v3273, 0.0
    %3276 = vadd.xlane.f32.xlu0 %v3275
    %v3277 = vpop.xlane.xlu0 %3276
    %v3278 = vmul.f32 %v3277, 0.33333334
    %v3279 = vadd.f32 %v3194, %v3278
    %v3280 = vmul.f32 %v2437, %v2156
    %v3281 = vmul.f32 %v2442, %v2157
    %v3282 = vmul.f32 %v2447, %v2158
    %v3283 = vmul.f32 %v2452, %v2159
    %v3284 = vmul.f32 %v2534, %v2160
    %v3285 = vmul.f32 %v2539, %v2161
    %v3286 = vmul.f32 %v2544, %v2162
    %v3287 = vmul.f32 %v2549, %v2163
    %v3288 = vsel %vm154, %v3280, 0.0
    %3289 = vadd.xlane.f32.xlu0 %v3288
    %v3290 = vpop.xlane.xlu0 %3289
    %v3291 = vsel %vm154, %v3281, 0.0
    %3292 = vadd.xlane.f32.xlu0 %v3291
    %v3293 = vpop.xlane.xlu0 %3292
    %v3294 = vsel %vm154, %v3282, 0.0
    %3295 = vadd.xlane.f32.xlu0 %v3294
    %v3296 = vpop.xlane.xlu0 %3295
    %v3297 = vsel %vm154, %v3283, 0.0
    %3298 = vadd.xlane.f32.xlu0 %v3297
    %v3299 = vpop.xlane.xlu0 %3298
    %v3300 = vsel %vm154, %v3284, 0.0
    %3301 = vadd.xlane.f32.xlu0 %v3300
    %v3302 = vpop.xlane.xlu0 %3301
    %v3303 = vsel %vm154, %v3285, 0.0
    %3304 = vadd.xlane.f32.xlu0 %v3303
    %v3305 = vpop.xlane.xlu0 %3304
    %v3306 = vsel %vm154, %v3286, 0.0
    %3307 = vadd.xlane.f32.xlu0 %v3306
    %v3308 = vpop.xlane.xlu0 %3307
    %v3309 = vsel %vm154, %v3287, 0.0
    %3310 = vadd.xlane.f32.xlu0 %v3309
    %v3311 = vpop.xlane.xlu0 %3310
    %v3320 = vlaneseq
    %v3321 = vshrl.u32 %v3320, 7
    %v3322 = vsub.s32 %v1313, %v3321
    %v3323 = vrot.slane %v3290, %v3322
    %v3324 = vlaneseq
    %v3325 = vshrl.u32 %v3324, 7
    %v3326 = vsub.s32 %v1318, %v3325
    %v3327 = vrot.slane %v3293, %v3326
    %v3328 = vsel %vm1323, %v3327, %v3323
    %v3329 = vlaneseq
    %v3330 = vshrl.u32 %v3329, 7
    %v3331 = vsub.s32 %v1325, %v3330
    %v3332 = vrot.slane %v3296, %v3331
    %v3333 = vsel %vm1330, %v3332, %v3328
    %v3334 = vlaneseq
    %v3335 = vshrl.u32 %v3334, 7
    %v3336 = vsub.s32 %v1332, %v3335
    %v3337 = vrot.slane %v3299, %v3336
    %v3338 = vsel %vm1337, %v3337, %v3333
    %v3339 = vlaneseq
    %v3340 = vshrl.u32 %v3339, 7
    %v3341 = vsub.s32 %v1313, %v3340
    %v3342 = vrot.slane %v3302, %v3341
    %v3343 = vlaneseq
    %v3344 = vshrl.u32 %v3343, 7
    %v3345 = vsub.s32 %v1318, %v3344
    %v3346 = vrot.slane %v3305, %v3345
    %v3347 = vsel %vm1323, %v3346, %v3342
    %v3348 = vlaneseq
    %v3349 = vshrl.u32 %v3348, 7
    %v3350 = vsub.s32 %v1325, %v3349
    %v3351 = vrot.slane %v3308, %v3350
    %v3352 = vsel %vm1330, %v3351, %v3347
    %v3353 = vlaneseq
    %v3354 = vshrl.u32 %v3353, 7
    %v3355 = vsub.s32 %v1332, %v3354
    %v3356 = vrot.slane %v3311, %v3355
    %v3357 = vsel %vm1337, %v3356, %v3352
    %v3358 = vsel %vm1358, %v3357, %v3338
    %v3360 = vsel %vm235, %v3358, 0.0
    %3361 = vadd.xlane.f32.xlu0 %v3360
    %v3362 = vpop.xlane.xlu0 %3361
    %v3363 = vmul.f32 %v3362, 0.25
    %v3364 = vsub.f32 %v3279, %v3363
    %v3365 = vmul.f32 %v2619, %v2156
    %v3366 = vmul.f32 %v2624, %v2157
    %v3367 = vmul.f32 %v2629, %v2158
    %v3368 = vmul.f32 %v2634, %v2159
    %v3369 = vmul.f32 %v2704, %v2160
    %v3370 = vmul.f32 %v2709, %v2161
    %v3371 = vmul.f32 %v2714, %v2162
    %v3372 = vmul.f32 %v2719, %v2163
    %v3373 = vsel %vm154, %v3365, 0.0
    %3374 = vadd.xlane.f32.xlu0 %v3373
    %v3375 = vpop.xlane.xlu0 %3374
    %v3376 = vsel %vm154, %v3366, 0.0
    %3377 = vadd.xlane.f32.xlu0 %v3376
    %v3378 = vpop.xlane.xlu0 %3377
    %v3379 = vsel %vm154, %v3367, 0.0
    %3380 = vadd.xlane.f32.xlu0 %v3379
    %v3381 = vpop.xlane.xlu0 %3380
    %v3382 = vsel %vm154, %v3368, 0.0
    %3383 = vadd.xlane.f32.xlu0 %v3382
    %v3384 = vpop.xlane.xlu0 %3383
    %v3385 = vsel %vm154, %v3369, 0.0
    %3386 = vadd.xlane.f32.xlu0 %v3385
    %v3387 = vpop.xlane.xlu0 %3386
    %v3388 = vsel %vm154, %v3370, 0.0
    %3389 = vadd.xlane.f32.xlu0 %v3388
    %v3390 = vpop.xlane.xlu0 %3389
    %v3391 = vsel %vm154, %v3371, 0.0
    %3392 = vadd.xlane.f32.xlu0 %v3391
    %v3393 = vpop.xlane.xlu0 %3392
    %v3394 = vsel %vm154, %v3372, 0.0
    %3395 = vadd.xlane.f32.xlu0 %v3394
    %v3396 = vpop.xlane.xlu0 %3395
    %v3405 = vlaneseq
    %v3406 = vshrl.u32 %v3405, 7
    %v3407 = vsub.s32 %v1313, %v3406
    %v3408 = vrot.slane %v3375, %v3407
    %v3409 = vlaneseq
    %v3410 = vshrl.u32 %v3409, 7
    %v3411 = vsub.s32 %v1318, %v3410
    %v3412 = vrot.slane %v3378, %v3411
    %v3413 = vsel %vm1323, %v3412, %v3408
    %v3414 = vlaneseq
    %v3415 = vshrl.u32 %v3414, 7
    %v3416 = vsub.s32 %v1325, %v3415
    %v3417 = vrot.slane %v3381, %v3416
    %v3418 = vsel %vm1330, %v3417, %v3413
    %v3419 = vlaneseq
    %v3420 = vshrl.u32 %v3419, 7
    %v3421 = vsub.s32 %v1332, %v3420
    %v3422 = vrot.slane %v3384, %v3421
    %v3423 = vsel %vm1337, %v3422, %v3418
    %v3424 = vlaneseq
    %v3425 = vshrl.u32 %v3424, 7
    %v3426 = vsub.s32 %v1313, %v3425
    %v3427 = vrot.slane %v3387, %v3426
    %v3428 = vlaneseq
    %v3429 = vshrl.u32 %v3428, 7
    %v3430 = vsub.s32 %v1318, %v3429
    %v3431 = vrot.slane %v3390, %v3430
    %v3432 = vsel %vm1323, %v3431, %v3427
    %v3433 = vlaneseq
    %v3434 = vshrl.u32 %v3433, 7
    %v3435 = vsub.s32 %v1325, %v3434
    %v3436 = vrot.slane %v3393, %v3435
    %v3437 = vsel %vm1330, %v3436, %v3432
    %v3438 = vlaneseq
    %v3439 = vshrl.u32 %v3438, 7
    %v3440 = vsub.s32 %v1332, %v3439
    %v3441 = vrot.slane %v3396, %v3440
    %v3442 = vsel %vm1337, %v3441, %v3437
    %v3443 = vsel %vm1358, %v3442, %v3423
    %v3445 = vsel %vm235, %v3443, 0.0
    %3446 = vadd.xlane.f32.xlu0 %v3445
    %v3447 = vpop.xlane.xlu0 %3446
    %v3448 = vmul.f32 %v3447, 0.2
    %v3449 = vadd.f32 %v3364, %v3448
    %v3450 = vmul.f32 %v2619, %v2801
    %v3451 = vmul.f32 %v2624, %v2806
    %v3452 = vmul.f32 %v2629, %v2811
    %v3453 = vmul.f32 %v2634, %v2816
    %v3454 = vmul.f32 %v2704, %v2898
    %v3455 = vmul.f32 %v2709, %v2903
    %v3456 = vmul.f32 %v2714, %v2908
    %v3457 = vmul.f32 %v2719, %v2913
    %v3458 = vsel %vm154, %v3450, 0.0
    %3459 = vadd.xlane.f32.xlu0 %v3458
    %v3460 = vpop.xlane.xlu0 %3459
    %v3461 = vsel %vm154, %v3451, 0.0
    %3462 = vadd.xlane.f32.xlu0 %v3461
    %v3463 = vpop.xlane.xlu0 %3462
    %v3464 = vsel %vm154, %v3452, 0.0
    %3465 = vadd.xlane.f32.xlu0 %v3464
    %v3466 = vpop.xlane.xlu0 %3465
    %v3467 = vsel %vm154, %v3453, 0.0
    %3468 = vadd.xlane.f32.xlu0 %v3467
    %v3469 = vpop.xlane.xlu0 %3468
    %v3470 = vsel %vm154, %v3454, 0.0
    %3471 = vadd.xlane.f32.xlu0 %v3470
    %v3472 = vpop.xlane.xlu0 %3471
    %v3473 = vsel %vm154, %v3455, 0.0
    %3474 = vadd.xlane.f32.xlu0 %v3473
    %v3475 = vpop.xlane.xlu0 %3474
    %v3476 = vsel %vm154, %v3456, 0.0
    %3477 = vadd.xlane.f32.xlu0 %v3476
    %v3478 = vpop.xlane.xlu0 %3477
    %v3479 = vsel %vm154, %v3457, 0.0
    %3480 = vadd.xlane.f32.xlu0 %v3479
    %v3481 = vpop.xlane.xlu0 %3480
    %v3490 = vlaneseq
    %v3491 = vshrl.u32 %v3490, 7
    %v3492 = vsub.s32 %v1313, %v3491
    %v3493 = vrot.slane %v3460, %v3492
    %v3494 = vlaneseq
    %v3495 = vshrl.u32 %v3494, 7
    %v3496 = vsub.s32 %v1318, %v3495
    %v3497 = vrot.slane %v3463, %v3496
    %v3498 = vsel %vm1323, %v3497, %v3493
    %v3499 = vlaneseq
    %v3500 = vshrl.u32 %v3499, 7
    %v3501 = vsub.s32 %v1325, %v3500
    %v3502 = vrot.slane %v3466, %v3501
    %v3503 = vsel %vm1330, %v3502, %v3498
    %v3504 = vlaneseq
    %v3505 = vshrl.u32 %v3504, 7
    %v3506 = vsub.s32 %v1332, %v3505
    %v3507 = vrot.slane %v3469, %v3506
    %v3508 = vsel %vm1337, %v3507, %v3503
    %v3509 = vlaneseq
    %v3510 = vshrl.u32 %v3509, 7
    %v3511 = vsub.s32 %v1313, %v3510
    %v3512 = vrot.slane %v3472, %v3511
    %v3513 = vlaneseq
    %v3514 = vshrl.u32 %v3513, 7
    %v3515 = vsub.s32 %v1318, %v3514
    %v3516 = vrot.slane %v3475, %v3515
    %v3517 = vsel %vm1323, %v3516, %v3512
    %v3518 = vlaneseq
    %v3519 = vshrl.u32 %v3518, 7
    %v3520 = vsub.s32 %v1325, %v3519
    %v3521 = vrot.slane %v3478, %v3520
    %v3522 = vsel %vm1330, %v3521, %v3517
    %v3523 = vlaneseq
    %v3524 = vshrl.u32 %v3523, 7
    %v3525 = vsub.s32 %v1332, %v3524
    %v3526 = vrot.slane %v3481, %v3525
    %v3527 = vsel %vm1337, %v3526, %v3522
    %v3528 = vsel %vm1358, %v3527, %v3508
    %v3530 = vsel %vm235, %v3528, 0.0
    %3531 = vadd.xlane.f32.xlu0 %v3530
    %v3532 = vpop.xlane.xlu0 %3531
    %v3533 = vmul.f32 %v3532, 0.16666667
    %v3534 = vsub.f32 %v3449, %v3533
    %v3535 = vmul.f32 %v2437, %v2995
    %v3536 = vmul.f32 %v2442, %v3000
    %v3537 = vmul.f32 %v2447, %v3005
    %v3538 = vmul.f32 %v2452, %v3010
    %v3539 = vmul.f32 %v2534, %v3092
    %v3540 = vmul.f32 %v2539, %v3097
    %v3541 = vmul.f32 %v2544, %v3102
    %v3542 = vmul.f32 %v2549, %v3107
    %v3543 = vsel %vm154, %v3535, 0.0
    %3544 = vadd.xlane.f32.xlu0 %v3543
    %v3545 = vpop.xlane.xlu0 %3544
    %v3546 = vsel %vm154, %v3536, 0.0
    %3547 = vadd.xlane.f32.xlu0 %v3546
    %v3548 = vpop.xlane.xlu0 %3547
    %v3549 = vsel %vm154, %v3537, 0.0
    %3550 = vadd.xlane.f32.xlu0 %v3549
    %v3551 = vpop.xlane.xlu0 %3550
    %v3552 = vsel %vm154, %v3538, 0.0
    %3553 = vadd.xlane.f32.xlu0 %v3552
    %v3554 = vpop.xlane.xlu0 %3553
    %v3555 = vsel %vm154, %v3539, 0.0
    %3556 = vadd.xlane.f32.xlu0 %v3555
    %v3557 = vpop.xlane.xlu0 %3556
    %v3558 = vsel %vm154, %v3540, 0.0
    %3559 = vadd.xlane.f32.xlu0 %v3558
    %v3560 = vpop.xlane.xlu0 %3559
    %v3561 = vsel %vm154, %v3541, 0.0
    %3562 = vadd.xlane.f32.xlu0 %v3561
    %v3563 = vpop.xlane.xlu0 %3562
    %v3564 = vsel %vm154, %v3542, 0.0
    %3565 = vadd.xlane.f32.xlu0 %v3564
    %v3566 = vpop.xlane.xlu0 %3565
    %v3575 = vlaneseq
    %v3576 = vshrl.u32 %v3575, 7
    %v3577 = vsub.s32 %v1313, %v3576
    %v3578 = vrot.slane %v3545, %v3577
    %v3579 = vlaneseq
    %v3580 = vshrl.u32 %v3579, 7
    %v3581 = vsub.s32 %v1318, %v3580
    %v3582 = vrot.slane %v3548, %v3581
    %v3583 = vsel %vm1323, %v3582, %v3578
    %v3584 = vlaneseq
    %v3585 = vshrl.u32 %v3584, 7
    %v3586 = vsub.s32 %v1325, %v3585
    %v3587 = vrot.slane %v3551, %v3586
    %v3588 = vsel %vm1330, %v3587, %v3583
    %v3589 = vlaneseq
    %v3590 = vshrl.u32 %v3589, 7
    %v3591 = vsub.s32 %v1332, %v3590
    %v3592 = vrot.slane %v3554, %v3591
    %v3593 = vsel %vm1337, %v3592, %v3588
    %v3594 = vlaneseq
    %v3595 = vshrl.u32 %v3594, 7
    %v3596 = vsub.s32 %v1313, %v3595
    %v3597 = vrot.slane %v3557, %v3596
    %v3598 = vlaneseq
    %v3599 = vshrl.u32 %v3598, 7
    %v3600 = vsub.s32 %v1318, %v3599
    %v3601 = vrot.slane %v3560, %v3600
    %v3602 = vsel %vm1323, %v3601, %v3597
    %v3603 = vlaneseq
    %v3604 = vshrl.u32 %v3603, 7
    %v3605 = vsub.s32 %v1325, %v3604
    %v3606 = vrot.slane %v3563, %v3605
    %v3607 = vsel %vm1330, %v3606, %v3602
    %v3608 = vlaneseq
    %v3609 = vshrl.u32 %v3608, 7
    %v3610 = vsub.s32 %v1332, %v3609
    %v3611 = vrot.slane %v3566, %v3610
    %v3612 = vsel %vm1337, %v3611, %v3607
    %v3613 = vsel %vm1358, %v3612, %v3593
    %v3615 = vsel %vm235, %v3613, 0.0
    %3616 = vadd.xlane.f32.xlu0 %v3615
    %v3617 = vpop.xlane.xlu0 %3616
    %v3618 = vmul.f32 %v3617, 0.14285715
    %v3619 = vadd.f32 %v3534, %v3618
    %v3620 = vmul.f32 %v2619, %v2995
    %v3621 = vmul.f32 %v2624, %v3000
    %v3622 = vmul.f32 %v2629, %v3005
    %v3623 = vmul.f32 %v2634, %v3010
    %v3624 = vmul.f32 %v2704, %v3092
    %v3625 = vmul.f32 %v2709, %v3097
    %v3626 = vmul.f32 %v2714, %v3102
    %v3627 = vmul.f32 %v2719, %v3107
    %v3628 = vsel %vm154, %v3620, 0.0
    %3629 = vadd.xlane.f32.xlu0 %v3628
    %v3630 = vpop.xlane.xlu0 %3629
    %v3631 = vsel %vm154, %v3621, 0.0
    %3632 = vadd.xlane.f32.xlu0 %v3631
    %v3633 = vpop.xlane.xlu0 %3632
    %v3634 = vsel %vm154, %v3622, 0.0
    %3635 = vadd.xlane.f32.xlu0 %v3634
    %v3636 = vpop.xlane.xlu0 %3635
    %v3637 = vsel %vm154, %v3623, 0.0
    %3638 = vadd.xlane.f32.xlu0 %v3637
    %v3639 = vpop.xlane.xlu0 %3638
    %v3640 = vsel %vm154, %v3624, 0.0
    %3641 = vadd.xlane.f32.xlu0 %v3640
    %v3642 = vpop.xlane.xlu0 %3641
    %v3643 = vsel %vm154, %v3625, 0.0
    %3644 = vadd.xlane.f32.xlu0 %v3643
    %v3645 = vpop.xlane.xlu0 %3644
    %v3646 = vsel %vm154, %v3626, 0.0
    %3647 = vadd.xlane.f32.xlu0 %v3646
    %v3648 = vpop.xlane.xlu0 %3647
    %v3649 = vsel %vm154, %v3627, 0.0
    %3650 = vadd.xlane.f32.xlu0 %v3649
    %v3651 = vpop.xlane.xlu0 %3650
    %v3660 = vlaneseq
    %v3661 = vshrl.u32 %v3660, 7
    %v3662 = vsub.s32 %v1313, %v3661
    %v3663 = vrot.slane %v3630, %v3662
    %v3664 = vlaneseq
    %v3665 = vshrl.u32 %v3664, 7
    %v3666 = vsub.s32 %v1318, %v3665
    %v3667 = vrot.slane %v3633, %v3666
    %v3668 = vsel %vm1323, %v3667, %v3663
    %v3669 = vlaneseq
    %v3670 = vshrl.u32 %v3669, 7
    %v3671 = vsub.s32 %v1325, %v3670
    %v3672 = vrot.slane %v3636, %v3671
    %v3673 = vsel %vm1330, %v3672, %v3668
    %v3674 = vlaneseq
    %v3675 = vshrl.u32 %v3674, 7
    %v3676 = vsub.s32 %v1332, %v3675
    %v3677 = vrot.slane %v3639, %v3676
    %v3678 = vsel %vm1337, %v3677, %v3673
    %v3679 = vlaneseq
    %v3680 = vshrl.u32 %v3679, 7
    %v3681 = vsub.s32 %v1313, %v3680
    %v3682 = vrot.slane %v3642, %v3681
    %v3683 = vlaneseq
    %v3684 = vshrl.u32 %v3683, 7
    %v3685 = vsub.s32 %v1318, %v3684
    %v3686 = vrot.slane %v3645, %v3685
    %v3687 = vsel %vm1323, %v3686, %v3682
    %v3688 = vlaneseq
    %v3689 = vshrl.u32 %v3688, 7
    %v3690 = vsub.s32 %v1325, %v3689
    %v3691 = vrot.slane %v3648, %v3690
    %v3692 = vsel %vm1330, %v3691, %v3687
    %v3693 = vlaneseq
    %v3694 = vshrl.u32 %v3693, 7
    %v3695 = vsub.s32 %v1332, %v3694
    %v3696 = vrot.slane %v3651, %v3695
    %v3697 = vsel %vm1337, %v3696, %v3692
    %v3698 = vsel %vm1358, %v3697, %v3678
    %v3700 = vsel %vm235, %v3698, 0.0
    %3701 = vadd.xlane.f32.xlu0 %v3700
    %v3702 = vpop.xlane.xlu0 %3701
    %v3703 = vmul.f32 %v3702, 0.125
    %v3704 = vsub.f32 %v3619, %v3703
    %v3705 = vadd.f32 %v1876, %v3704
    %v3706 = vadd.f32 %v1877, %v2064
    %s3707 = scalar_lea.vmem %s1, 32
    %v3708 = vld [vmem:[%s3707] sm:$0xff]
    %v3709 = vld [vmem:[%s3707 + $0x8] sm:$0xff]
    %s3710 = scalar_lea.vmem %s2, 2
    %v3711 = vld [vmem:[%s3710] sm:$0x1]
    %s3712 = scalar_lea.vmem %s3, 64
    %v3713 = vld [vmem:[%s3712] sm:$0xff]
    %v3714 = vld [vmem:[%s3712 + $0x8] sm:$0xff]
    %v3715 = vld [vmem:[%s3712 + $0x10] sm:$0xff]
    %v3716 = vld [vmem:[%s3712 + $0x18] sm:$0xff]
    %s3717 = scalar_lea.vmem %s4, 2
    %v3718 = vld [vmem:[%s3717] sm:$0x1]
    %s3719 = scalar_lea.vmem %s5, 64
    %v3720 = vld [vmem:[%s3719] sm:$0xff]
    %v3721 = vld [vmem:[%s3719 + $0x8] sm:$0xff]
    %v3722 = vld [vmem:[%s3719 + $0x10] sm:$0xff]
    %v3723 = vld [vmem:[%s3719 + $0x18] sm:$0xff]
    %s3724 = scalar_lea.vmem [#allocation2], 64
    %v3725 = vld [vmem:[%s3724] sm:$0xff]
    %v3726 = vld [vmem:[%s3724 + $0x8] sm:$0xff]
    %v3727 = vld [vmem:[%s3724 + $0x10] sm:$0xff]
    %v3728 = vld [vmem:[%s3724 + $0x18] sm:$0xff]
    %s3729 = scalar_lea.vmem %s7, 2
    %v3730 = vld [vmem:[%s3729] sm:$0x1]
    %v3732 = vlaneseq
    %v3733 = vshrl.u32 %v3732, 7
    %v3734 = vsub.s32 0, %v3733
    %v3735 = vrot.slane %v3711, %v3734
    %v3738 = vsel %vm67, %v3706, 0
    %3740 = vmatprep.subr.mxu0 0.0
    %3741 = vmatpush1.msra.mxu0 %v3708
    %3742 = vmatprep.subr.mxu0 0.0
    %3743 = vmatpush1.msra.mxu0 %v3709
    %3744 = vmatprep.subr.mxu0 0.0
    %3745 = vmatpush1.msra.mxu0 0.0
    %3746 = vmatprep.subr.mxu0 0.0
    %3747 = vmatpush1.msra.mxu0 0.0
    %3748 = vmatprep.subr.mxu0 0.0
    %3749 = vmatpush1.msra.mxu0 0.0
    %3750 = vmatprep.subr.mxu0 0.0
    %3751 = vmatpush1.msra.mxu0 0.0
    %3752 = vmatprep.subr.mxu0 0.0
    %3753 = vmatpush1.msra.mxu0 0.0
    %3754 = vmatprep.subr.mxu0 0.0
    %3755 = vmatpush1.msra.mxu0 0.0
    %3756 = vmatprep.subr.mxu0 0.0
    %3757 = vmatpush1.msra.mxu0 0.0
    %3758 = vmatprep.subr.mxu0 0.0
    %3759 = vmatpush1.msra.mxu0 0.0
    %3760 = vmatprep.subr.mxu0 0.0
    %3761 = vmatpush1.msra.mxu0 0.0
    %3762 = vmatprep.subr.mxu0 0.0
    %3763 = vmatpush1.msra.mxu0 0.0
    %3764 = vmatprep.subr.mxu0 0.0
    %3765 = vmatpush1.msra.mxu0 0.0
    %3766 = vmatprep.subr.mxu0 0.0
    %3767 = vmatpush1.msra.mxu0 0.0
    %3768 = vmatprep.subr.mxu0 0.0
    %3769 = vmatpush1.msra.mxu0 0.0
    %3770 = vmatprep.subr.mxu0 0.0
    %3771 = vmatpush1.msra.mxu0 0.0
    %3772 = vmatprep.subr.mxu0 0.0
    %3773 = vmatpush1.msra.mxu0 0.0
    %3774 = vmatprep.subr.mxu0 0.0
    %3775 = vmatpush1.msra.mxu0 0.0
    %3776 = vmatprep.subr.mxu0 0.0
    %3777 = vmatpush1.msra.mxu0 0.0
    %3778 = vmatprep.subr.mxu0 0.0
    %3779 = vmatpush1.msra.mxu0 0.0
    %3780 = vmatprep.subr.mxu0 0.0
    %3781 = vmatpush1.msra.mxu0 0.0
    %3782 = vmatprep.subr.mxu0 0.0
    %3783 = vmatpush1.msra.mxu0 0.0
    %3784 = vmatprep.subr.mxu0 0.0
    %3785 = vmatpush1.msra.mxu0 0.0
    %3786 = vmatprep.subr.mxu0 0.0
    %3787 = vmatpush1.msra.mxu0 0.0
    %3788 = vmatprep.subr.mxu0 0.0
    %3789 = vmatpush1.msra.mxu0 0.0
    %3790 = vmatprep.subr.mxu0 0.0
    %3791 = vmatpush1.msra.mxu0 0.0
    %3792 = vmatprep.subr.mxu0 0.0
    %3793 = vmatpush1.msra.mxu0 0.0
    %3794 = vmatprep.subr.mxu0 0.0
    %3795 = vmatpush1.msra.mxu0 0.0
    %3796 = vmatprep.subr.mxu0 0.0
    %3797 = vmatpush1.msra.mxu0 0.0
    %3798 = vmatprep.subr.mxu0 0.0
    %3799 = vmatpush1.msra.mxu0 0.0
    %3800 = vmatprep.subr.mxu0 0.0
    %3801 = vmatpush1.msra.mxu0 0.0
    %3802 = vmatprep.subr.mxu0 0.0
    %3803 = vmatpush1.msra.mxu0 0.0
    %3804 = vmatprep.mubr.f32.mxu0 0.0
    %3805 = vmatmul.mubr.f32.gmra.mrb[0].mxu0 %v3738
    %v3806 = vpop.f32.mrb[0].mxu0
    %v3807 = vadd.f32 %v3735, %v3806
    %v3808 = vpop.f32.mrb[0].mxu0
    %3809 = vdwg.mxu0
    %v3810 = vmin.f32 %v3807, 0.0
    %v3811 = vmul.f32 %v3810, 1.442695
    %v3812 = vpow.pop %v3811
    %vm3813 = vcmp.gt.f32.partialorder %v3807, 0.0
    %v3814 = vsub.f32 %v3812, 1.0
    %v3815 = vsel %vm3813, %v3807, %v3814
    %v3816 = vsel %vm3813, 1.0, %v3812
    %v3818 = vlaneseq
    %v3819 = vshrl.u32 %v3818, 7
    %v3820 = vsub.s32 0, %v3819
    %v3821 = vrot.slane %v3718, %v3820
    %v3824 = vsel %vm154, %v3815, 0
    %3826 = vmatprep.subr.mxu0 0.0
    %3827 = vmatpush1.msra.mxu0 %v3713
    %3828 = vmatprep.subr.mxu0 0.0
    %3829 = vmatpush1.msra.mxu0 %v3714
    %3830 = vmatprep.subr.mxu0 0.0
    %3831 = vmatpush1.msra.mxu0 %v3715
    %3832 = vmatprep.subr.mxu0 0.0
    %3833 = vmatpush1.msra.mxu0 %v3716
    %3834 = vmatprep.subr.mxu0 0.0
    %3835 = vmatpush1.msra.mxu0 0.0
    %3836 = vmatprep.subr.mxu0 0.0
    %3837 = vmatpush1.msra.mxu0 0.0
    %3838 = vmatprep.subr.mxu0 0.0
    %3839 = vmatpush1.msra.mxu0 0.0
    %3840 = vmatprep.subr.mxu0 0.0
    %3841 = vmatpush1.msra.mxu0 0.0
    %3842 = vmatprep.subr.mxu0 0.0
    %3843 = vmatpush1.msra.mxu0 0.0
    %3844 = vmatprep.subr.mxu0 0.0
    %3845 = vmatpush1.msra.mxu0 0.0
    %3846 = vmatprep.subr.mxu0 0.0
    %3847 = vmatpush1.msra.mxu0 0.0
    %3848 = vmatprep.subr.mxu0 0.0
    %3849 = vmatpush1.msra.mxu0 0.0
    %3850 = vmatprep.subr.mxu0 0.0
    %3851 = vmatpush1.msra.mxu0 0.0
    %3852 = vmatprep.subr.mxu0 0.0
    %3853 = vmatpush1.msra.mxu0 0.0
    %3854 = vmatprep.subr.mxu0 0.0
    %3855 = vmatpush1.msra.mxu0 0.0
    %3856 = vmatprep.subr.mxu0 0.0
    %3857 = vmatpush1.msra.mxu0 0.0
    %3858 = vmatprep.subr.mxu0 0.0
    %3859 = vmatpush1.msra.mxu0 0.0
    %3860 = vmatprep.subr.mxu0 0.0
    %3861 = vmatpush1.msra.mxu0 0.0
    %3862 = vmatprep.subr.mxu0 0.0
    %3863 = vmatpush1.msra.mxu0 0.0
    %3864 = vmatprep.subr.mxu0 0.0
    %3865 = vmatpush1.msra.mxu0 0.0
    %3866 = vmatprep.subr.mxu0 0.0
    %3867 = vmatpush1.msra.mxu0 0.0
    %3868 = vmatprep.subr.mxu0 0.0
    %3869 = vmatpush1.msra.mxu0 0.0
    %3870 = vmatprep.subr.mxu0 0.0
    %3871 = vmatpush1.msra.mxu0 0.0
    %3872 = vmatprep.subr.mxu0 0.0
    %3873 = vmatpush1.msra.mxu0 0.0
    %3874 = vmatprep.subr.mxu0 0.0
    %3875 = vmatpush1.msra.mxu0 0.0
    %3876 = vmatprep.subr.mxu0 0.0
    %3877 = vmatpush1.msra.mxu0 0.0
    %3878 = vmatprep.subr.mxu0 0.0
    %3879 = vmatpush1.msra.mxu0 0.0
    %3880 = vmatprep.subr.mxu0 0.0
    %3881 = vmatpush1.msra.mxu0 0.0
    %3882 = vmatprep.subr.mxu0 0.0
    %3883 = vmatpush1.msra.mxu0 0.0
    %3884 = vmatprep.subr.mxu0 0.0
    %3885 = vmatpush1.msra.mxu0 0.0
    %3886 = vmatprep.subr.mxu0 0.0
    %3887 = vmatpush1.msra.mxu0 0.0
    %3888 = vmatprep.subr.mxu0 0.0
    %3889 = vmatpush1.msra.mxu0 0.0
    %3890 = vmatprep.mubr.f32.mxu0 0.0
    %3891 = vmatmul.mubr.f32.gmra.mrb[0].mxu0 %v3824
    %v3892 = vpop.f32.mrb[0].mxu0
    %v3893 = vadd.f32 %v3821, %v3892
    %v3894 = vpop.f32.mrb[0].mxu0
    %3895 = vdwg.mxu0
    %v3897 = vlaneseq
    %v3898 = vshrl.u32 %v3897, 7
    %v3899 = vsub.s32 0, %v3898
    %v3900 = vrot.slane %v3730, %v3899
    %v3902 = vmul.f32 %v3816, %v3900
    %v3903 = vsel %vm235, %v3902, 0.0
    %3904 = vadd.xlane.f32.xlu0 %v3903
    %v3905 = vpop.xlane.xlu0 %3904
    %v3906 = vlaneseq
    %v3907 = vshrl.u32 %v3906, 7
    %v3908 = vsub.s32 0, %v3907
    %v3909 = vrot.slane %v3816, %v3908
    %3911 = vbcast.lane.b32.xlu0 %v3909, 256
    %v3912 = vpop.permute.xlu0 %3911
    %s3914 = sor.u32 256, 8
    %3915 = vbcast.lane.b32.xlu0 %v3909, %s3914
    %v3916 = vpop.permute.xlu0 %3915
    %s3918 = sor.u32 256, 16
    %3919 = vbcast.lane.b32.xlu0 %v3909, %s3918
    %v3920 = vpop.permute.xlu0 %3919
    %s3922 = sor.u32 256, 24
    %3923 = vbcast.lane.b32.xlu0 %v3909, %s3922
    %v3924 = vpop.permute.xlu0 %3923
    %v3925 = vlaneseq
    %v3926 = vshrl.u32 %v3925, 7
    %v3927 = vsub.s32 1, %v3926
    %v3928 = vrot.slane %v3816, %v3927
    %3930 = vbcast.lane.b32.xlu0 %v3928, 256
    %v3931 = vpop.permute.xlu0 %3930
    %s3933 = sor.u32 256, 8
    %3934 = vbcast.lane.b32.xlu0 %v3928, %s3933
    %v3935 = vpop.permute.xlu0 %3934
    %s3937 = sor.u32 256, 16
    %3938 = vbcast.lane.b32.xlu0 %v3928, %s3937
    %v3939 = vpop.permute.xlu0 %3938
    %s3941 = sor.u32 256, 24
    %3942 = vbcast.lane.b32.xlu0 %v3928, %s3941
    %v3943 = vpop.permute.xlu0 %3942
    %v3944 = vmul.f32 %v3912, %v3720
    %v3945 = vmul.f32 %v3916, %v3721
    %v3946 = vmul.f32 %v3920, %v3722
    %v3947 = vmul.f32 %v3924, %v3723
    %v3948 = vmul.f32 %v3931, %v3720
    %v3949 = vmul.f32 %v3935, %v3721
    %v3950 = vmul.f32 %v3939, %v3722
    %v3951 = vmul.f32 %v3943, %v3723
    %v3954 = vunpack.c.l.s4 1966171168
    %v3955 = vunpack.c.0.s8 %v3954
    %v3956 = vlaneseq
    %v3957 = vshrl.u32 %v3956, 7
    %v3958 = vsub.s32 %v3955, %v3957
    %v3959 = vrot.slane %v3816, %v3958
    %v3960 = vcombine.high %v3959, %v3959
    %v3962 = vunpack.c.l.s4 1966171168
    %v3963 = vunpack.c.0.s8 %v3962
    %v3964 = vlaneseq
    %v3965 = vshrl.u32 %v3964, 7
    %v3966 = vsub.s32 %v3963, %v3965
    %v3967 = vrot.slane %v3959, %v3966
    %v3969 = vunpack.c.l.s4 1966171168
    %v3970 = vunpack.c.0.s8 %v3969
    %v3971 = vlaneseq
    %v3972 = vshrl.u32 %v3971, 7
    %v3973 = vsub.s32 %v3970, %v3972
    %v3974 = vrot.slane %v3960, %v3973
    %v3975 = vlaneseq
    %v3976 = vshrl.u32 %v3975, 7
    %v3977 = vsub.s32 0, %v3976
    %v3978 = vrot.slane %v3967, %v3977
    %v3979 = vlaneseq
    %v3980 = vshrl.u32 %v3979, 7
    %v3981 = vsub.s32 0, %v3980
    %v3982 = vrot.slane %v3974, %v3981
    %v3985 = vmul.f32 %v3978, %v3725
    %v3986 = vmul.f32 %v3978, %v3726
    %v3987 = vmul.f32 %v3978, %v3727
    %v3988 = vmul.f32 %v3978, %v3728
    %v3989 = vmul.f32 %v3982, %v3725
    %v3990 = vmul.f32 %v3982, %v3726
    %v3991 = vmul.f32 %v3982, %v3727
    %v3992 = vmul.f32 %v3982, %v3728
    %v3994 = vsel %vm154, %v3944, 0
    %v3997 = vsel %vm154, %v3945, 0
    %v4000 = vsel %vm154, %v3946, 0
    %v4003 = vsel %vm154, %v3947, 0
    %4005 = vmatprep.subr.mxu0 0.0
    %4006 = vmatpush1.msra.mxu0 %v3944
    %4007 = vmatprep.subr.mxu0 0.0
    %4008 = vmatpush1.msra.mxu0 %v3945
    %4009 = vmatprep.subr.mxu0 0.0
    %4010 = vmatpush1.msra.mxu0 %v3946
    %4011 = vmatprep.subr.mxu0 0.0
    %4012 = vmatpush1.msra.mxu0 %v3947
    %4013 = vmatprep.subr.mxu0 0.0
    %4014 = vmatpush1.msra.mxu0 0.0
    %4015 = vmatprep.subr.mxu0 0.0
    %4016 = vmatpush1.msra.mxu0 0.0
    %4017 = vmatprep.subr.mxu0 0.0
    %4018 = vmatpush1.msra.mxu0 0.0
    %4019 = vmatprep.subr.mxu0 0.0
    %4020 = vmatpush1.msra.mxu0 0.0
    %4021 = vmatprep.subr.mxu0 0.0
    %4022 = vmatpush1.msra.mxu0 0.0
    %4023 = vmatprep.subr.mxu0 0.0
    %4024 = vmatpush1.msra.mxu0 0.0
    %4025 = vmatprep.subr.mxu0 0.0
    %4026 = vmatpush1.msra.mxu0 0.0
    %4027 = vmatprep.subr.mxu0 0.0
    %4028 = vmatpush1.msra.mxu0 0.0
    %4029 = vmatprep.subr.mxu0 0.0
    %4030 = vmatpush1.msra.mxu0 0.0
    %4031 = vmatprep.subr.mxu0 0.0
    %4032 = vmatpush1.msra.mxu0 0.0
    %4033 = vmatprep.subr.mxu0 0.0
    %4034 = vmatpush1.msra.mxu0 0.0
    %4035 = vmatprep.subr.mxu0 0.0
    %4036 = vmatpush1.msra.mxu0 0.0
    %4037 = vmatprep.subr.mxu0 0.0
    %4038 = vmatpush1.msra.mxu0 0.0
    %4039 = vmatprep.subr.mxu0 0.0
    %4040 = vmatpush1.msra.mxu0 0.0
    %4041 = vmatprep.subr.mxu0 0.0
    %4042 = vmatpush1.msra.mxu0 0.0
    %4043 = vmatprep.subr.mxu0 0.0
    %4044 = vmatpush1.msra.mxu0 0.0
    %4045 = vmatprep.subr.mxu0 0.0
    %4046 = vmatpush1.msra.mxu0 0.0
    %4047 = vmatprep.subr.mxu0 0.0
    %4048 = vmatpush1.msra.mxu0 0.0
    %4049 = vmatprep.subr.mxu0 0.0
    %4050 = vmatpush1.msra.mxu0 0.0
    %4051 = vmatprep.subr.mxu0 0.0
    %4052 = vmatpush1.msra.mxu0 0.0
    %4053 = vmatprep.subr.mxu0 0.0
    %4054 = vmatpush1.msra.mxu0 0.0
    %4055 = vmatprep.subr.mxu0 0.0
    %4056 = vmatpush1.msra.mxu0 0.0
    %4057 = vmatprep.subr.mxu0 0.0
    %4058 = vmatpush1.msra.mxu0 0.0
    %4059 = vmatprep.subr.mxu0 0.0
    %4060 = vmatpush1.msra.mxu0 0.0
    %4061 = vmatprep.subr.mxu0 0.0
    %4062 = vmatpush1.msra.mxu0 0.0
    %4063 = vmatprep.subr.mxu0 0.0
    %4064 = vmatpush1.msra.mxu0 0.0
    %4065 = vmatprep.subr.mxu0 0.0
    %4066 = vmatpush1.msra.mxu0 0.0
    %4067 = vmatprep.subr.mxu0 0.0
    %4068 = vmatpush1.msra.mxu0 0.0
    %4069 = vmatprep.mubr.f32.mxu0 0.0
    %4070 = vmatmul.mubr.f32.gmra.mrb[0].mxu0 %v3994
    %v4071 = vpop.f32.mrb[0].mxu0
    %v4072 = vadd.f32 0.0, %v4071
    %v4073 = vpop.f32.mrb[0].mxu0
    %4074 = vmatprep.mubr.f32.mxu0 0.0
    %4075 = vmatmul.mubr.f32.gmra.mrb[0].mxu0 %v3997
    %v4076 = vpop.f32.mrb[0].mxu0
    %v4077 = vadd.f32 0.0, %v4076
    %v4078 = vpop.f32.mrb[0].mxu0
    %4079 = vmatprep.mubr.f32.mxu0 0.0
    %4080 = vmatmul.mubr.f32.gmra.mrb[0].mxu0 %v4000
    %v4081 = vpop.f32.mrb[0].mxu0
    %v4082 = vadd.f32 0.0, %v4081
    %v4083 = vpop.f32.mrb[0].mxu0
    %4084 = vmatprep.mubr.f32.mxu0 0.0
    %4085 = vmatmul.mubr.f32.gmra.mrb[0].mxu0 %v4003
    %v4086 = vpop.f32.mrb[0].mxu0
    %v4087 = vadd.f32 0.0, %v4086
    %v4088 = vpop.f32.mrb[0].mxu0
    %4089 = vdwg.mxu0
    %v4091 = vsel %vm154, %v3948, 0
    %v4094 = vsel %vm154, %v3949, 0
    %v4097 = vsel %vm154, %v3950, 0
    %v4100 = vsel %vm154, %v3951, 0
    %4102 = vmatprep.subr.mxu0 0.0
    %4103 = vmatpush1.msra.mxu0 %v3948
    %4104 = vmatprep.subr.mxu0 0.0
    %4105 = vmatpush1.msra.mxu0 %v3949
    %4106 = vmatprep.subr.mxu0 0.0
    %4107 = vmatpush1.msra.mxu0 %v3950
    %4108 = vmatprep.subr.mxu0 0.0
    %4109 = vmatpush1.msra.mxu0 %v3951
    %4110 = vmatprep.subr.mxu0 0.0
    %4111 = vmatpush1.msra.mxu0 0.0
    %4112 = vmatprep.subr.mxu0 0.0
    %4113 = vmatpush1.msra.mxu0 0.0
    %4114 = vmatprep.subr.mxu0 0.0
    %4115 = vmatpush1.msra.mxu0 0.0
    %4116 = vmatprep.subr.mxu0 0.0
    %4117 = vmatpush1.msra.mxu0 0.0
    %4118 = vmatprep.subr.mxu0 0.0
    %4119 = vmatpush1.msra.mxu0 0.0
    %4120 = vmatprep.subr.mxu0 0.0
    %4121 = vmatpush1.msra.mxu0 0.0
    %4122 = vmatprep.subr.mxu0 0.0
    %4123 = vmatpush1.msra.mxu0 0.0
    %4124 = vmatprep.subr.mxu0 0.0
    %4125 = vmatpush1.msra.mxu0 0.0
    %4126 = vmatprep.subr.mxu0 0.0
    %4127 = vmatpush1.msra.mxu0 0.0
    %4128 = vmatprep.subr.mxu0 0.0
    %4129 = vmatpush1.msra.mxu0 0.0
    %4130 = vmatprep.subr.mxu0 0.0
    %4131 = vmatpush1.msra.mxu0 0.0
    %4132 = vmatprep.subr.mxu0 0.0
    %4133 = vmatpush1.msra.mxu0 0.0
    %4134 = vmatprep.subr.mxu0 0.0
    %4135 = vmatpush1.msra.mxu0 0.0
    %4136 = vmatprep.subr.mxu0 0.0
    %4137 = vmatpush1.msra.mxu0 0.0
    %4138 = vmatprep.subr.mxu0 0.0
    %4139 = vmatpush1.msra.mxu0 0.0
    %4140 = vmatprep.subr.mxu0 0.0
    %4141 = vmatpush1.msra.mxu0 0.0
    %4142 = vmatprep.subr.mxu0 0.0
    %4143 = vmatpush1.msra.mxu0 0.0
    %4144 = vmatprep.subr.mxu0 0.0
    %4145 = vmatpush1.msra.mxu0 0.0
    %4146 = vmatprep.subr.mxu0 0.0
    %4147 = vmatpush1.msra.mxu0 0.0
    %4148 = vmatprep.subr.mxu0 0.0
    %4149 = vmatpush1.msra.mxu0 0.0
    %4150 = vmatprep.subr.mxu0 0.0
    %4151 = vmatpush1.msra.mxu0 0.0
    %4152 = vmatprep.subr.mxu0 0.0
    %4153 = vmatpush1.msra.mxu0 0.0
    %4154 = vmatprep.subr.mxu0 0.0
    %4155 = vmatpush1.msra.mxu0 0.0
    %4156 = vmatprep.subr.mxu0 0.0
    %4157 = vmatpush1.msra.mxu0 0.0
    %4158 = vmatprep.subr.mxu0 0.0
    %4159 = vmatpush1.msra.mxu0 0.0
    %4160 = vmatprep.subr.mxu0 0.0
    %4161 = vmatpush1.msra.mxu0 0.0
    %4162 = vmatprep.subr.mxu0 0.0
    %4163 = vmatpush1.msra.mxu0 0.0
    %4164 = vmatprep.subr.mxu0 0.0
    %4165 = vmatpush1.msra.mxu0 0.0
    %4166 = vmatprep.mubr.f32.mxu0 0.0
    %4167 = vmatmul.mubr.f32.gmra.mrb[0].mxu0 %v4091
    %v4168 = vpop.f32.mrb[0].mxu0
    %v4169 = vadd.f32 0.0, %v4168
    %v4170 = vpop.f32.mrb[0].mxu0
    %4171 = vmatprep.mubr.f32.mxu0 0.0
    %4172 = vmatmul.mubr.f32.gmra.mrb[0].mxu0 %v4094
    %v4173 = vpop.f32.mrb[0].mxu0
    %v4174 = vadd.f32 0.0, %v4173
    %v4175 = vpop.f32.mrb[0].mxu0
    %4176 = vmatprep.mubr.f32.mxu0 0.0
    %4177 = vmatmul.mubr.f32.gmra.mrb[0].mxu0 %v4097
    %v4178 = vpop.f32.mrb[0].mxu0
    %v4179 = vadd.f32 0.0, %v4178
    %v4180 = vpop.f32.mrb[0].mxu0
    %4181 = vmatprep.mubr.f32.mxu0 0.0
    %4182 = vmatmul.mubr.f32.gmra.mrb[0].mxu0 %v4100
    %v4183 = vpop.f32.mrb[0].mxu0
    %v4184 = vadd.f32 0.0, %v4183
    %v4185 = vpop.f32.mrb[0].mxu0
    %4186 = vdwg.mxu0
    %v4188 = vsel %vm154, %v4072, 0
    %v4191 = vsel %vm154, %v4077, 0
    %v4194 = vsel %vm154, %v4082, 0
    %v4197 = vsel %vm154, %v4087, 0
    %4199 = vmatprep.subr.mxu0 0.0
    %4200 = vmatpush1.msra.mxu0 %v3944
    %4201 = vmatprep.subr.mxu0 0.0
    %4202 = vmatpush1.msra.mxu0 %v3945
    %4203 = vmatprep.subr.mxu0 0.0
    %4204 = vmatpush1.msra.mxu0 %v3946
    %4205 = vmatprep.subr.mxu0 0.0
    %4206 = vmatpush1.msra.mxu0 %v3947
    %4207 = vmatprep.subr.mxu0 0.0
    %4208 = vmatpush1.msra.mxu0 0.0
    %4209 = vmatprep.subr.mxu0 0.0
    %4210 = vmatpush1.msra.mxu0 0.0
    %4211 = vmatprep.subr.mxu0 0.0
    %4212 = vmatpush1.msra.mxu0 0.0
    %4213 = vmatprep.subr.mxu0 0.0
    %4214 = vmatpush1.msra.mxu0 0.0
    %4215 = vmatprep.subr.mxu0 0.0
    %4216 = vmatpush1.msra.mxu0 0.0
    %4217 = vmatprep.subr.mxu0 0.0
    %4218 = vmatpush1.msra.mxu0 0.0
    %4219 = vmatprep.subr.mxu0 0.0
    %4220 = vmatpush1.msra.mxu0 0.0
    %4221 = vmatprep.subr.mxu0 0.0
    %4222 = vmatpush1.msra.mxu0 0.0
    %4223 = vmatprep.subr.mxu0 0.0
    %4224 = vmatpush1.msra.mxu0 0.0
    %4225 = vmatprep.subr.mxu0 0.0
    %4226 = vmatpush1.msra.mxu0 0.0
    %4227 = vmatprep.subr.mxu0 0.0
    %4228 = vmatpush1.msra.mxu0 0.0
    %4229 = vmatprep.subr.mxu0 0.0
    %4230 = vmatpush1.msra.mxu0 0.0
    %4231 = vmatprep.subr.mxu0 0.0
    %4232 = vmatpush1.msra.mxu0 0.0
    %4233 = vmatprep.subr.mxu0 0.0
    %4234 = vmatpush1.msra.mxu0 0.0
    %4235 = vmatprep.subr.mxu0 0.0
    %4236 = vmatpush1.msra.mxu0 0.0
    %4237 = vmatprep.subr.mxu0 0.0
    %4238 = vmatpush1.msra.mxu0 0.0
    %4239 = vmatprep.subr.mxu0 0.0
    %4240 = vmatpush1.msra.mxu0 0.0
    %4241 = vmatprep.subr.mxu0 0.0
    %4242 = vmatpush1.msra.mxu0 0.0
    %4243 = vmatprep.subr.mxu0 0.0
    %4244 = vmatpush1.msra.mxu0 0.0
    %4245 = vmatprep.subr.mxu0 0.0
    %4246 = vmatpush1.msra.mxu0 0.0
    %4247 = vmatprep.subr.mxu0 0.0
    %4248 = vmatpush1.msra.mxu0 0.0
    %4249 = vmatprep.subr.mxu0 0.0
    %4250 = vmatpush1.msra.mxu0 0.0
    %4251 = vmatprep.subr.mxu0 0.0
    %4252 = vmatpush1.msra.mxu0 0.0
    %4253 = vmatprep.subr.mxu0 0.0
    %4254 = vmatpush1.msra.mxu0 0.0
    %4255 = vmatprep.subr.mxu0 0.0
    %4256 = vmatpush1.msra.mxu0 0.0
    %4257 = vmatprep.subr.mxu0 0.0
    %4258 = vmatpush1.msra.mxu0 0.0
    %4259 = vmatprep.subr.mxu0 0.0
    %4260 = vmatpush1.msra.mxu0 0.0
    %4261 = vmatprep.subr.mxu0 0.0
    %4262 = vmatpush1.msra.mxu0 0.0
    %4263 = vmatprep.mubr.f32.mxu0 0.0
    %4264 = vmatmul.mubr.f32.gmra.mrb[0].mxu0 %v4188
    %v4265 = vpop.f32.mrb[0].mxu0
    %v4266 = vadd.f32 0.0, %v4265
    %v4267 = vpop.f32.mrb[0].mxu0
    %4268 = vmatprep.mubr.f32.mxu0 0.0
    %4269 = vmatmul.mubr.f32.gmra.mrb[0].mxu0 %v4191
    %v4270 = vpop.f32.mrb[0].mxu0
    %v4271 = vadd.f32 0.0, %v4270
    %v4272 = vpop.f32.mrb[0].mxu0
    %4273 = vmatprep.mubr.f32.mxu0 0.0
    %4274 = vmatmul.mubr.f32.gmra.mrb[0].mxu0 %v4194
    %v4275 = vpop.f32.mrb[0].mxu0
    %v4276 = vadd.f32 0.0, %v4275
    %v4277 = vpop.f32.mrb[0].mxu0
    %4278 = vmatprep.mubr.f32.mxu0 0.0
    %4279 = vmatmul.mubr.f32.gmra.mrb[0].mxu0 %v4197
    %v4280 = vpop.f32.mrb[0].mxu0
    %v4281 = vadd.f32 0.0, %v4280
    %v4282 = vpop.f32.mrb[0].mxu0
    %4283 = vdwg.mxu0
    %v4285 = vsel %vm154, %v4169, 0
    %v4288 = vsel %vm154, %v4174, 0
    %v4291 = vsel %vm154, %v4179, 0
    %v4294 = vsel %vm154, %v4184, 0
    %4296 = vmatprep.subr.mxu0 0.0
    %4297 = vmatpush1.msra.mxu0 %v3948
    %4298 = vmatprep.subr.mxu0 0.0
    %4299 = vmatpush1.msra.mxu0 %v3949
    %4300 = vmatprep.subr.mxu0 0.0
    %4301 = vmatpush1.msra.mxu0 %v3950
    %4302 = vmatprep.subr.mxu0 0.0
    %4303 = vmatpush1.msra.mxu0 %v3951
    %4304 = vmatprep.subr.mxu0 0.0
    %4305 = vmatpush1.msra.mxu0 0.0
    %4306 = vmatprep.subr.mxu0 0.0
    %4307 = vmatpush1.msra.mxu0 0.0
    %4308 = vmatprep.subr.mxu0 0.0
    %4309 = vmatpush1.msra.mxu0 0.0
    %4310 = vmatprep.subr.mxu0 0.0
    %4311 = vmatpush1.msra.mxu0 0.0
    %4312 = vmatprep.subr.mxu0 0.0
    %4313 = vmatpush1.msra.mxu0 0.0
    %4314 = vmatprep.subr.mxu0 0.0
    %4315 = vmatpush1.msra.mxu0 0.0
    %4316 = vmatprep.subr.mxu0 0.0
    %4317 = vmatpush1.msra.mxu0 0.0
    %4318 = vmatprep.subr.mxu0 0.0
    %4319 = vmatpush1.msra.mxu0 0.0
    %4320 = vmatprep.subr.mxu0 0.0
    %4321 = vmatpush1.msra.mxu0 0.0
    %4322 = vmatprep.subr.mxu0 0.0
    %4323 = vmatpush1.msra.mxu0 0.0
    %4324 = vmatprep.subr.mxu0 0.0
    %4325 = vmatpush1.msra.mxu0 0.0
    %4326 = vmatprep.subr.mxu0 0.0
    %4327 = vmatpush1.msra.mxu0 0.0
    %4328 = vmatprep.subr.mxu0 0.0
    %4329 = vmatpush1.msra.mxu0 0.0
    %4330 = vmatprep.subr.mxu0 0.0
    %4331 = vmatpush1.msra.mxu0 0.0
    %4332 = vmatprep.subr.mxu0 0.0
    %4333 = vmatpush1.msra.mxu0 0.0
    %4334 = vmatprep.subr.mxu0 0.0
    %4335 = vmatpush1.msra.mxu0 0.0
    %4336 = vmatprep.subr.mxu0 0.0
    %4337 = vmatpush1.msra.mxu0 0.0
    %4338 = vmatprep.subr.mxu0 0.0
    %4339 = vmatpush1.msra.mxu0 0.0
    %4340 = vmatprep.subr.mxu0 0.0
    %4341 = vmatpush1.msra.mxu0 0.0
    %4342 = vmatprep.subr.mxu0 0.0
    %4343 = vmatpush1.msra.mxu0 0.0
    %4344 = vmatprep.subr.mxu0 0.0
    %4345 = vmatpush1.msra.mxu0 0.0
    %4346 = vmatprep.subr.mxu0 0.0
    %4347 = vmatpush1.msra.mxu0 0.0
    %4348 = vmatprep.subr.mxu0 0.0
    %4349 = vmatpush1.msra.mxu0 0.0
    %4350 = vmatprep.subr.mxu0 0.0
    %4351 = vmatpush1.msra.mxu0 0.0
    %4352 = vmatprep.subr.mxu0 0.0
    %4353 = vmatpush1.msra.mxu0 0.0
    %4354 = vmatprep.subr.mxu0 0.0
    %4355 = vmatpush1.msra.mxu0 0.0
    %4356 = vmatprep.subr.mxu0 0.0
    %4357 = vmatpush1.msra.mxu0 0.0
    %4358 = vmatprep.subr.mxu0 0.0
    %4359 = vmatpush1.msra.mxu0 0.0
    %4360 = vmatprep.mubr.f32.mxu0 0.0
    %4361 = vmatmul.mubr.f32.gmra.mrb[0].mxu0 %v4285
    %v4362 = vpop.f32.mrb[0].mxu0
    %v4363 = vadd.f32 0.0, %v4362
    %v4364 = vpop.f32.mrb[0].mxu0
    %4365 = vmatprep.mubr.f32.mxu0 0.0
    %4366 = vmatmul.mubr.f32.gmra.mrb[0].mxu0 %v4288
    %v4367 = vpop.f32.mrb[0].mxu0
    %v4368 = vadd.f32 0.0, %v4367
    %v4369 = vpop.f32.mrb[0].mxu0
    %4370 = vmatprep.mubr.f32.mxu0 0.0
    %4371 = vmatmul.mubr.f32.gmra.mrb[0].mxu0 %v4291
    %v4372 = vpop.f32.mrb[0].mxu0
    %v4373 = vadd.f32 0.0, %v4372
    %v4374 = vpop.f32.mrb[0].mxu0
    %4375 = vmatprep.mubr.f32.mxu0 0.0
    %4376 = vmatmul.mubr.f32.gmra.mrb[0].mxu0 %v4294
    %v4377 = vpop.f32.mrb[0].mxu0
    %v4378 = vadd.f32 0.0, %v4377
    %v4379 = vpop.f32.mrb[0].mxu0
    %4380 = vdwg.mxu0
    %4381 = vmatprep.subr.mxu0 0.0
    %4382 = vmatpush1.msra.mxu0 %v4072
    %4383 = vmatprep.subr.mxu0 0.0
    %4384 = vmatpush1.msra.mxu0 %v4077
    %4385 = vmatprep.subr.mxu0 0.0
    %4386 = vmatpush1.msra.mxu0 %v4082
    %4387 = vmatprep.subr.mxu0 0.0
    %4388 = vmatpush1.msra.mxu0 %v4087
    %4389 = vmatprep.subr.mxu0 0.0
    %4390 = vmatpush1.msra.mxu0 0.0
    %4391 = vmatprep.subr.mxu0 0.0
    %4392 = vmatpush1.msra.mxu0 0.0
    %4393 = vmatprep.subr.mxu0 0.0
    %4394 = vmatpush1.msra.mxu0 0.0
    %4395 = vmatprep.subr.mxu0 0.0
    %4396 = vmatpush1.msra.mxu0 0.0
    %4397 = vmatprep.subr.mxu0 0.0
    %4398 = vmatpush1.msra.mxu0 0.0
    %4399 = vmatprep.subr.mxu0 0.0
    %4400 = vmatpush1.msra.mxu0 0.0
    %4401 = vmatprep.subr.mxu0 0.0
    %4402 = vmatpush1.msra.mxu0 0.0
    %4403 = vmatprep.subr.mxu0 0.0
    %4404 = vmatpush1.msra.mxu0 0.0
    %4405 = vmatprep.subr.mxu0 0.0
    %4406 = vmatpush1.msra.mxu0 0.0
    %4407 = vmatprep.subr.mxu0 0.0
    %4408 = vmatpush1.msra.mxu0 0.0
    %4409 = vmatprep.subr.mxu0 0.0
    %4410 = vmatpush1.msra.mxu0 0.0
    %4411 = vmatprep.subr.mxu0 0.0
    %4412 = vmatpush1.msra.mxu0 0.0
    %4413 = vmatprep.subr.mxu0 0.0
    %4414 = vmatpush1.msra.mxu0 0.0
    %4415 = vmatprep.subr.mxu0 0.0
    %4416 = vmatpush1.msra.mxu0 0.0
    %4417 = vmatprep.subr.mxu0 0.0
    %4418 = vmatpush1.msra.mxu0 0.0
    %4419 = vmatprep.subr.mxu0 0.0
    %4420 = vmatpush1.msra.mxu0 0.0
    %4421 = vmatprep.subr.mxu0 0.0
    %4422 = vmatpush1.msra.mxu0 0.0
    %4423 = vmatprep.subr.mxu0 0.0
    %4424 = vmatpush1.msra.mxu0 0.0
    %4425 = vmatprep.subr.mxu0 0.0
    %4426 = vmatpush1.msra.mxu0 0.0
    %4427 = vmatprep.subr.mxu0 0.0
    %4428 = vmatpush1.msra.mxu0 0.0
    %4429 = vmatprep.subr.mxu0 0.0
    %4430 = vmatpush1.msra.mxu0 0.0
    %4431 = vmatprep.subr.mxu0 0.0
    %4432 = vmatpush1.msra.mxu0 0.0
    %4433 = vmatprep.subr.mxu0 0.0
    %4434 = vmatpush1.msra.mxu0 0.0
    %4435 = vmatprep.subr.mxu0 0.0
    %4436 = vmatpush1.msra.mxu0 0.0
    %4437 = vmatprep.subr.mxu0 0.0
    %4438 = vmatpush1.msra.mxu0 0.0
    %4439 = vmatprep.subr.mxu0 0.0
    %4440 = vmatpush1.msra.mxu0 0.0
    %4441 = vmatprep.subr.mxu0 0.0
    %4442 = vmatpush1.msra.mxu0 0.0
    %4443 = vmatprep.subr.mxu0 0.0
    %4444 = vmatpush1.msra.mxu0 0.0
    %4445 = vmatprep.mubr.f32.mxu0 0.0
    %4446 = vmatmul.mubr.f32.gmra.mrb[0].mxu0 %v4188
    %v4447 = vpop.f32.mrb[0].mxu0
    %v4448 = vadd.f32 0.0, %v4447
    %v4449 = vpop.f32.mrb[0].mxu0
    %4450 = vmatprep.mubr.f32.mxu0 0.0
    %4451 = vmatmul.mubr.f32.gmra.mrb[0].mxu0 %v4191
    %v4452 = vpop.f32.mrb[0].mxu0
    %v4453 = vadd.f32 0.0, %v4452
    %v4454 = vpop.f32.mrb[0].mxu0
    %4455 = vmatprep.mubr.f32.mxu0 0.0
    %4456 = vmatmul.mubr.f32.gmra.mrb[0].mxu0 %v4194
    %v4457 = vpop.f32.mrb[0].mxu0
    %v4458 = vadd.f32 0.0, %v4457
    %v4459 = vpop.f32.mrb[0].mxu0
    %4460 = vmatprep.mubr.f32.mxu0 0.0
    %4461 = vmatmul.mubr.f32.gmra.mrb[0].mxu0 %v4197
    %v4462 = vpop.f32.mrb[0].mxu0
    %v4463 = vadd.f32 0.0, %v4462
    %v4464 = vpop.f32.mrb[0].mxu0
    %4465 = vdwg.mxu0
    %4466 = vmatprep.subr.mxu0 0.0
    %4467 = vmatpush1.msra.mxu0 %v4169
    %4468 = vmatprep.subr.mxu0 0.0
    %4469 = vmatpush1.msra.mxu0 %v4174
    %4470 = vmatprep.subr.mxu0 0.0
    %4471 = vmatpush1.msra.mxu0 %v4179
    %4472 = vmatprep.subr.mxu0 0.0
    %4473 = vmatpush1.msra.mxu0 %v4184
    %4474 = vmatprep.subr.mxu0 0.0
    %4475 = vmatpush1.msra.mxu0 0.0
    %4476 = vmatprep.subr.mxu0 0.0
    %4477 = vmatpush1.msra.mxu0 0.0
    %4478 = vmatprep.subr.mxu0 0.0
    %4479 = vmatpush1.msra.mxu0 0.0
    %4480 = vmatprep.subr.mxu0 0.0
    %4481 = vmatpush1.msra.mxu0 0.0
    %4482 = vmatprep.subr.mxu0 0.0
    %4483 = vmatpush1.msra.mxu0 0.0
    %4484 = vmatprep.subr.mxu0 0.0
    %4485 = vmatpush1.msra.mxu0 0.0
    %4486 = vmatprep.subr.mxu0 0.0
    %4487 = vmatpush1.msra.mxu0 0.0
    %4488 = vmatprep.subr.mxu0 0.0
    %4489 = vmatpush1.msra.mxu0 0.0
    %4490 = vmatprep.subr.mxu0 0.0
    %4491 = vmatpush1.msra.mxu0 0.0
    %4492 = vmatprep.subr.mxu0 0.0
    %4493 = vmatpush1.msra.mxu0 0.0
    %4494 = vmatprep.subr.mxu0 0.0
    %4495 = vmatpush1.msra.mxu0 0.0
    %4496 = vmatprep.subr.mxu0 0.0
    %4497 = vmatpush1.msra.mxu0 0.0
    %4498 = vmatprep.subr.mxu0 0.0
    %4499 = vmatpush1.msra.mxu0 0.0
    %4500 = vmatprep.subr.mxu0 0.0
    %4501 = vmatpush1.msra.mxu0 0.0
    %4502 = vmatprep.subr.mxu0 0.0
    %4503 = vmatpush1.msra.mxu0 0.0
    %4504 = vmatprep.subr.mxu0 0.0
    %4505 = vmatpush1.msra.mxu0 0.0
    %4506 = vmatprep.subr.mxu0 0.0
    %4507 = vmatpush1.msra.mxu0 0.0
    %4508 = vmatprep.subr.mxu0 0.0
    %4509 = vmatpush1.msra.mxu0 0.0
    %4510 = vmatprep.subr.mxu0 0.0
    %4511 = vmatpush1.msra.mxu0 0.0
    %4512 = vmatprep.subr.mxu0 0.0
    %4513 = vmatpush1.msra.mxu0 0.0
    %4514 = vmatprep.subr.mxu0 0.0
    %4515 = vmatpush1.msra.mxu0 0.0
    %4516 = vmatprep.subr.mxu0 0.0
    %4517 = vmatpush1.msra.mxu0 0.0
    %4518 = vmatprep.subr.mxu0 0.0
    %4519 = vmatpush1.msra.mxu0 0.0
    %4520 = vmatprep.subr.mxu0 0.0
    %4521 = vmatpush1.msra.mxu0 0.0
    %4522 = vmatprep.subr.mxu0 0.0
    %4523 = vmatpush1.msra.mxu0 0.0
    %4524 = vmatprep.subr.mxu0 0.0
    %4525 = vmatpush1.msra.mxu0 0.0
    %4526 = vmatprep.subr.mxu0 0.0
    %4527 = vmatpush1.msra.mxu0 0.0
    %4528 = vmatprep.subr.mxu0 0.0
    %4529 = vmatpush1.msra.mxu0 0.0
    %4530 = vmatprep.mubr.f32.mxu0 0.0
    %4531 = vmatmul.mubr.f32.gmra.mrb[0].mxu0 %v4285
    %v4532 = vpop.f32.mrb[0].mxu0
    %v4533 = vadd.f32 0.0, %v4532
    %v4534 = vpop.f32.mrb[0].mxu0
    %4535 = vmatprep.mubr.f32.mxu0 0.0
    %4536 = vmatmul.mubr.f32.gmra.mrb[0].mxu0 %v4288
    %v4537 = vpop.f32.mrb[0].mxu0
    %v4538 = vadd.f32 0.0, %v4537
    %v4539 = vpop.f32.mrb[0].mxu0
    %4540 = vmatprep.mubr.f32.mxu0 0.0
    %4541 = vmatmul.mubr.f32.gmra.mrb[0].mxu0 %v4291
    %v4542 = vpop.f32.mrb[0].mxu0
    %v4543 = vadd.f32 0.0, %v4542
    %v4544 = vpop.f32.mrb[0].mxu0
    %4545 = vmatprep.mubr.f32.mxu0 0.0
    %4546 = vmatmul.mubr.f32.gmra.mrb[0].mxu0 %v4294
    %v4547 = vpop.f32.mrb[0].mxu0
    %v4548 = vadd.f32 0.0, %v4547
    %v4549 = vpop.f32.mrb[0].mxu0
    %4550 = vdwg.mxu0
    %v4552 = vsel %vm154, %v3985, 0
    %v4555 = vsel %vm154, %v3986, 0
    %v4558 = vsel %vm154, %v3987, 0
    %v4561 = vsel %vm154, %v3988, 0
    %4563 = vmatprep.subr.mxu0 0.0
    %4564 = vmatpush1.msra.mxu0 %v3985
    %4565 = vmatprep.subr.mxu0 0.0
    %4566 = vmatpush1.msra.mxu0 %v3986
    %4567 = vmatprep.subr.mxu0 0.0
    %4568 = vmatpush1.msra.mxu0 %v3987
    %4569 = vmatprep.subr.mxu0 0.0
    %4570 = vmatpush1.msra.mxu0 %v3988
    %4571 = vmatprep.subr.mxu0 0.0
    %4572 = vmatpush1.msra.mxu0 0.0
    %4573 = vmatprep.subr.mxu0 0.0
    %4574 = vmatpush1.msra.mxu0 0.0
    %4575 = vmatprep.subr.mxu0 0.0
    %4576 = vmatpush1.msra.mxu0 0.0
    %4577 = vmatprep.subr.mxu0 0.0
    %4578 = vmatpush1.msra.mxu0 0.0
    %4579 = vmatprep.subr.mxu0 0.0
    %4580 = vmatpush1.msra.mxu0 0.0
    %4581 = vmatprep.subr.mxu0 0.0
    %4582 = vmatpush1.msra.mxu0 0.0
    %4583 = vmatprep.subr.mxu0 0.0
    %4584 = vmatpush1.msra.mxu0 0.0
    %4585 = vmatprep.subr.mxu0 0.0
    %4586 = vmatpush1.msra.mxu0 0.0
    %4587 = vmatprep.subr.mxu0 0.0
    %4588 = vmatpush1.msra.mxu0 0.0
    %4589 = vmatprep.subr.mxu0 0.0
    %4590 = vmatpush1.msra.mxu0 0.0
    %4591 = vmatprep.subr.mxu0 0.0
    %4592 = vmatpush1.msra.mxu0 0.0
    %4593 = vmatprep.subr.mxu0 0.0
    %4594 = vmatpush1.msra.mxu0 0.0
    %4595 = vmatprep.subr.mxu0 0.0
    %4596 = vmatpush1.msra.mxu0 0.0
    %4597 = vmatprep.subr.mxu0 0.0
    %4598 = vmatpush1.msra.mxu0 0.0
    %4599 = vmatprep.subr.mxu0 0.0
    %4600 = vmatpush1.msra.mxu0 0.0
    %4601 = vmatprep.subr.mxu0 0.0
    %4602 = vmatpush1.msra.mxu0 0.0
    %4603 = vmatprep.subr.mxu0 0.0
    %4604 = vmatpush1.msra.mxu0 0.0
    %4605 = vmatprep.subr.mxu0 0.0
    %4606 = vmatpush1.msra.mxu0 0.0
    %4607 = vmatprep.subr.mxu0 0.0
    %4608 = vmatpush1.msra.mxu0 0.0
    %4609 = vmatprep.subr.mxu0 0.0
    %4610 = vmatpush1.msra.mxu0 0.0
    %4611 = vmatprep.subr.mxu0 0.0
    %4612 = vmatpush1.msra.mxu0 0.0
    %4613 = vmatprep.subr.mxu0 0.0
    %4614 = vmatpush1.msra.mxu0 0.0
    %4615 = vmatprep.subr.mxu0 0.0
    %4616 = vmatpush1.msra.mxu0 0.0
    %4617 = vmatprep.subr.mxu0 0.0
    %4618 = vmatpush1.msra.mxu0 0.0
    %4619 = vmatprep.subr.mxu0 0.0
    %4620 = vmatpush1.msra.mxu0 0.0
    %4621 = vmatprep.subr.mxu0 0.0
    %4622 = vmatpush1.msra.mxu0 0.0
    %4623 = vmatprep.subr.mxu0 0.0
    %4624 = vmatpush1.msra.mxu0 0.0
    %4625 = vmatprep.subr.mxu0 0.0
    %4626 = vmatpush1.msra.mxu0 0.0
    %4627 = vmatprep.mubr.f32.mxu0 0.0
    %4628 = vmatmul.mubr.f32.gmra.mrb[0].mxu0 %v4552
    %v4629 = vpop.f32.mrb[0].mxu0
    %v4630 = vadd.f32 0.0, %v4629
    %v4631 = vpop.f32.mrb[0].mxu0
    %4632 = vmatprep.mubr.f32.mxu0 0.0
    %4633 = vmatmul.mubr.f32.gmra.mrb[0].mxu0 %v4555
    %v4634 = vpop.f32.mrb[0].mxu0
    %v4635 = vadd.f32 0.0, %v4634
    %v4636 = vpop.f32.mrb[0].mxu0
    %4637 = vmatprep.mubr.f32.mxu0 0.0
    %4638 = vmatmul.mubr.f32.gmra.mrb[0].mxu0 %v4558
    %v4639 = vpop.f32.mrb[0].mxu0
    %v4640 = vadd.f32 0.0, %v4639
    %v4641 = vpop.f32.mrb[0].mxu0
    %4642 = vmatprep.mubr.f32.mxu0 0.0
    %4643 = vmatmul.mubr.f32.gmra.mrb[0].mxu0 %v4561
    %v4644 = vpop.f32.mrb[0].mxu0
    %v4645 = vadd.f32 0.0, %v4644
    %v4646 = vpop.f32.mrb[0].mxu0
    %4647 = vdwg.mxu0
    %v4649 = vsel %vm154, %v3989, 0
    %v4652 = vsel %vm154, %v3990, 0
    %v4655 = vsel %vm154, %v3991, 0
    %v4658 = vsel %vm154, %v3992, 0
    %4660 = vmatprep.subr.mxu0 0.0
    %4661 = vmatpush1.msra.mxu0 %v3989
    %4662 = vmatprep.subr.mxu0 0.0
    %4663 = vmatpush1.msra.mxu0 %v3990
    %4664 = vmatprep.subr.mxu0 0.0
    %4665 = vmatpush1.msra.mxu0 %v3991
    %4666 = vmatprep.subr.mxu0 0.0
    %4667 = vmatpush1.msra.mxu0 %v3992
    %4668 = vmatprep.subr.mxu0 0.0
    %4669 = vmatpush1.msra.mxu0 0.0
    %4670 = vmatprep.subr.mxu0 0.0
    %4671 = vmatpush1.msra.mxu0 0.0
    %4672 = vmatprep.subr.mxu0 0.0
    %4673 = vmatpush1.msra.mxu0 0.0
    %4674 = vmatprep.subr.mxu0 0.0
    %4675 = vmatpush1.msra.mxu0 0.0
    %4676 = vmatprep.subr.mxu0 0.0
    %4677 = vmatpush1.msra.mxu0 0.0
    %4678 = vmatprep.subr.mxu0 0.0
    %4679 = vmatpush1.msra.mxu0 0.0
    %4680 = vmatprep.subr.mxu0 0.0
    %4681 = vmatpush1.msra.mxu0 0.0
    %4682 = vmatprep.subr.mxu0 0.0
    %4683 = vmatpush1.msra.mxu0 0.0
    %4684 = vmatprep.subr.mxu0 0.0
    %4685 = vmatpush1.msra.mxu0 0.0
    %4686 = vmatprep.subr.mxu0 0.0
    %4687 = vmatpush1.msra.mxu0 0.0
    %4688 = vmatprep.subr.mxu0 0.0
    %4689 = vmatpush1.msra.mxu0 0.0
    %4690 = vmatprep.subr.mxu0 0.0
    %4691 = vmatpush1.msra.mxu0 0.0
    %4692 = vmatprep.subr.mxu0 0.0
    %4693 = vmatpush1.msra.mxu0 0.0
    %4694 = vmatprep.subr.mxu0 0.0
    %4695 = vmatpush1.msra.mxu0 0.0
    %4696 = vmatprep.subr.mxu0 0.0
    %4697 = vmatpush1.msra.mxu0 0.0
    %4698 = vmatprep.subr.mxu0 0.0
    %4699 = vmatpush1.msra.mxu0 0.0
    %4700 = vmatprep.subr.mxu0 0.0
    %4701 = vmatpush1.msra.mxu0 0.0
    %4702 = vmatprep.subr.mxu0 0.0
    %4703 = vmatpush1.msra.mxu0 0.0
    %4704 = vmatprep.subr.mxu0 0.0
    %4705 = vmatpush1.msra.mxu0 0.0
    %4706 = vmatprep.subr.mxu0 0.0
    %4707 = vmatpush1.msra.mxu0 0.0
    %4708 = vmatprep.subr.mxu0 0.0
    %4709 = vmatpush1.msra.mxu0 0.0
    %4710 = vmatprep.subr.mxu0 0.0
    %4711 = vmatpush1.msra.mxu0 0.0
    %4712 = vmatprep.subr.mxu0 0.0
    %4713 = vmatpush1.msra.mxu0 0.0
    %4714 = vmatprep.subr.mxu0 0.0
    %4715 = vmatpush1.msra.mxu0 0.0
    %4716 = vmatprep.subr.mxu0 0.0
    %4717 = vmatpush1.msra.mxu0 0.0
    %4718 = vmatprep.subr.mxu0 0.0
    %4719 = vmatpush1.msra.mxu0 0.0
    %4720 = vmatprep.subr.mxu0 0.0
    %4721 = vmatpush1.msra.mxu0 0.0
    %4722 = vmatprep.subr.mxu0 0.0
    %4723 = vmatpush1.msra.mxu0 0.0
    %4724 = vmatprep.mubr.f32.mxu0 0.0
    %4725 = vmatmul.mubr.f32.gmra.mrb[0].mxu0 %v4649
    %v4726 = vpop.f32.mrb[0].mxu0
    %v4727 = vadd.f32 0.0, %v4726
    %v4728 = vpop.f32.mrb[0].mxu0
    %4729 = vmatprep.mubr.f32.mxu0 0.0
    %4730 = vmatmul.mubr.f32.gmra.mrb[0].mxu0 %v4652
    %v4731 = vpop.f32.mrb[0].mxu0
    %v4732 = vadd.f32 0.0, %v4731
    %v4733 = vpop.f32.mrb[0].mxu0
    %4734 = vmatprep.mubr.f32.mxu0 0.0
    %4735 = vmatmul.mubr.f32.gmra.mrb[0].mxu0 %v4655
    %v4736 = vpop.f32.mrb[0].mxu0
    %v4737 = vadd.f32 0.0, %v4736
    %v4738 = vpop.f32.mrb[0].mxu0
    %4739 = vmatprep.mubr.f32.mxu0 0.0
    %4740 = vmatmul.mubr.f32.gmra.mrb[0].mxu0 %v4658
    %v4741 = vpop.f32.mrb[0].mxu0
    %v4742 = vadd.f32 0.0, %v4741
    %v4743 = vpop.f32.mrb[0].mxu0
    %4744 = vdwg.mxu0
    %v4746 = vsel %vm154, %v4630, 0
    %v4749 = vsel %vm154, %v4635, 0
    %v4752 = vsel %vm154, %v4640, 0
    %v4755 = vsel %vm154, %v4645, 0
    %4757 = vmatprep.subr.mxu0 0.0
    %4758 = vmatpush1.msra.mxu0 %v4630
    %4759 = vmatprep.subr.mxu0 0.0
    %4760 = vmatpush1.msra.mxu0 %v4635
    %4761 = vmatprep.subr.mxu0 0.0
    %4762 = vmatpush1.msra.mxu0 %v4640
    %4763 = vmatprep.subr.mxu0 0.0
    %4764 = vmatpush1.msra.mxu0 %v4645
    %4765 = vmatprep.subr.mxu0 0.0
    %4766 = vmatpush1.msra.mxu0 0.0
    %4767 = vmatprep.subr.mxu0 0.0
    %4768 = vmatpush1.msra.mxu0 0.0
    %4769 = vmatprep.subr.mxu0 0.0
    %4770 = vmatpush1.msra.mxu0 0.0
    %4771 = vmatprep.subr.mxu0 0.0
    %4772 = vmatpush1.msra.mxu0 0.0
    %4773 = vmatprep.subr.mxu0 0.0
    %4774 = vmatpush1.msra.mxu0 0.0
    %4775 = vmatprep.subr.mxu0 0.0
    %4776 = vmatpush1.msra.mxu0 0.0
    %4777 = vmatprep.subr.mxu0 0.0
    %4778 = vmatpush1.msra.mxu0 0.0
    %4779 = vmatprep.subr.mxu0 0.0
    %4780 = vmatpush1.msra.mxu0 0.0
    %4781 = vmatprep.subr.mxu0 0.0
    %4782 = vmatpush1.msra.mxu0 0.0
    %4783 = vmatprep.subr.mxu0 0.0
    %4784 = vmatpush1.msra.mxu0 0.0
    %4785 = vmatprep.subr.mxu0 0.0
    %4786 = vmatpush1.msra.mxu0 0.0
    %4787 = vmatprep.subr.mxu0 0.0
    %4788 = vmatpush1.msra.mxu0 0.0
    %4789 = vmatprep.subr.mxu0 0.0
    %4790 = vmatpush1.msra.mxu0 0.0
    %4791 = vmatprep.subr.mxu0 0.0
    %4792 = vmatpush1.msra.mxu0 0.0
    %4793 = vmatprep.subr.mxu0 0.0
    %4794 = vmatpush1.msra.mxu0 0.0
    %4795 = vmatprep.subr.mxu0 0.0
    %4796 = vmatpush1.msra.mxu0 0.0
    %4797 = vmatprep.subr.mxu0 0.0
    %4798 = vmatpush1.msra.mxu0 0.0
    %4799 = vmatprep.subr.mxu0 0.0
    %4800 = vmatpush1.msra.mxu0 0.0
    %4801 = vmatprep.subr.mxu0 0.0
    %4802 = vmatpush1.msra.mxu0 0.0
    %4803 = vmatprep.subr.mxu0 0.0
    %4804 = vmatpush1.msra.mxu0 0.0
    %4805 = vmatprep.subr.mxu0 0.0
    %4806 = vmatpush1.msra.mxu0 0.0
    %4807 = vmatprep.subr.mxu0 0.0
    %4808 = vmatpush1.msra.mxu0 0.0
    %4809 = vmatprep.subr.mxu0 0.0
    %4810 = vmatpush1.msra.mxu0 0.0
    %4811 = vmatprep.subr.mxu0 0.0
    %4812 = vmatpush1.msra.mxu0 0.0
    %4813 = vmatprep.subr.mxu0 0.0
    %4814 = vmatpush1.msra.mxu0 0.0
    %4815 = vmatprep.subr.mxu0 0.0
    %4816 = vmatpush1.msra.mxu0 0.0
    %4817 = vmatprep.subr.mxu0 0.0
    %4818 = vmatpush1.msra.mxu0 0.0
    %4819 = vmatprep.subr.mxu0 0.0
    %4820 = vmatpush1.msra.mxu0 0.0
    %4821 = vmatprep.mubr.f32.mxu0 0.0
    %4822 = vmatmul.mubr.f32.gmra.mrb[0].mxu0 %v4746
    %v4823 = vpop.f32.mrb[0].mxu0
    %v4824 = vadd.f32 0.0, %v4823
    %v4825 = vpop.f32.mrb[0].mxu0
    %4826 = vmatprep.mubr.f32.mxu0 0.0
    %4827 = vmatmul.mubr.f32.gmra.mrb[0].mxu0 %v4749
    %v4828 = vpop.f32.mrb[0].mxu0
    %v4829 = vadd.f32 0.0, %v4828
    %v4830 = vpop.f32.mrb[0].mxu0
    %4831 = vmatprep.mubr.f32.mxu0 0.0
    %4832 = vmatmul.mubr.f32.gmra.mrb[0].mxu0 %v4752
    %v4833 = vpop.f32.mrb[0].mxu0
    %v4834 = vadd.f32 0.0, %v4833
    %v4835 = vpop.f32.mrb[0].mxu0
    %4836 = vmatprep.mubr.f32.mxu0 0.0
    %4837 = vmatmul.mubr.f32.gmra.mrb[0].mxu0 %v4755
    %v4838 = vpop.f32.mrb[0].mxu0
    %v4839 = vadd.f32 0.0, %v4838
    %v4840 = vpop.f32.mrb[0].mxu0
    %4841 = vdwg.mxu0
    %v4843 = vsel %vm154, %v4727, 0
    %v4846 = vsel %vm154, %v4732, 0
    %v4849 = vsel %vm154, %v4737, 0
    %v4852 = vsel %vm154, %v4742, 0
    %4854 = vmatprep.subr.mxu0 0.0
    %4855 = vmatpush1.msra.mxu0 %v4727
    %4856 = vmatprep.subr.mxu0 0.0
    %4857 = vmatpush1.msra.mxu0 %v4732
    %4858 = vmatprep.subr.mxu0 0.0
    %4859 = vmatpush1.msra.mxu0 %v4737
    %4860 = vmatprep.subr.mxu0 0.0
    %4861 = vmatpush1.msra.mxu0 %v4742
    %4862 = vmatprep.subr.mxu0 0.0
    %4863 = vmatpush1.msra.mxu0 0.0
    %4864 = vmatprep.subr.mxu0 0.0
    %4865 = vmatpush1.msra.mxu0 0.0
    %4866 = vmatprep.subr.mxu0 0.0
    %4867 = vmatpush1.msra.mxu0 0.0
    %4868 = vmatprep.subr.mxu0 0.0
    %4869 = vmatpush1.msra.mxu0 0.0
    %4870 = vmatprep.subr.mxu0 0.0
    %4871 = vmatpush1.msra.mxu0 0.0
    %4872 = vmatprep.subr.mxu0 0.0
    %4873 = vmatpush1.msra.mxu0 0.0
    %4874 = vmatprep.subr.mxu0 0.0
    %4875 = vmatpush1.msra.mxu0 0.0
    %4876 = vmatprep.subr.mxu0 0.0
    %4877 = vmatpush1.msra.mxu0 0.0
    %4878 = vmatprep.subr.mxu0 0.0
    %4879 = vmatpush1.msra.mxu0 0.0
    %4880 = vmatprep.subr.mxu0 0.0
    %4881 = vmatpush1.msra.mxu0 0.0
    %4882 = vmatprep.subr.mxu0 0.0
    %4883 = vmatpush1.msra.mxu0 0.0
    %4884 = vmatprep.subr.mxu0 0.0
    %4885 = vmatpush1.msra.mxu0 0.0
    %4886 = vmatprep.subr.mxu0 0.0
    %4887 = vmatpush1.msra.mxu0 0.0
    %4888 = vmatprep.subr.mxu0 0.0
    %4889 = vmatpush1.msra.mxu0 0.0
    %4890 = vmatprep.subr.mxu0 0.0
    %4891 = vmatpush1.msra.mxu0 0.0
    %4892 = vmatprep.subr.mxu0 0.0
    %4893 = vmatpush1.msra.mxu0 0.0
    %4894 = vmatprep.subr.mxu0 0.0
    %4895 = vmatpush1.msra.mxu0 0.0
    %4896 = vmatprep.subr.mxu0 0.0
    %4897 = vmatpush1.msra.mxu0 0.0
    %4898 = vmatprep.subr.mxu0 0.0
    %4899 = vmatpush1.msra.mxu0 0.0
    %4900 = vmatprep.subr.mxu0 0.0
    %4901 = vmatpush1.msra.mxu0 0.0
    %4902 = vmatprep.subr.mxu0 0.0
    %4903 = vmatpush1.msra.mxu0 0.0
    %4904 = vmatprep.subr.mxu0 0.0
    %4905 = vmatpush1.msra.mxu0 0.0
    %4906 = vmatprep.subr.mxu0 0.0
    %4907 = vmatpush1.msra.mxu0 0.0
    %4908 = vmatprep.subr.mxu0 0.0
    %4909 = vmatpush1.msra.mxu0 0.0
    %4910 = vmatprep.subr.mxu0 0.0
    %4911 = vmatpush1.msra.mxu0 0.0
    %4912 = vmatprep.subr.mxu0 0.0
    %4913 = vmatpush1.msra.mxu0 0.0
    %4914 = vmatprep.subr.mxu0 0.0
    %4915 = vmatpush1.msra.mxu0 0.0
    %4916 = vmatprep.subr.mxu0 0.0
    %4917 = vmatpush1.msra.mxu0 0.0
    %4918 = vmatprep.mubr.f32.mxu0 0.0
    %4919 = vmatmul.mubr.f32.gmra.mrb[0].mxu0 %v4843
    %v4920 = vpop.f32.mrb[0].mxu0
    %v4921 = vadd.f32 0.0, %v4920
    %v4922 = vpop.f32.mrb[0].mxu0
    %4923 = vmatprep.mubr.f32.mxu0 0.0
    %4924 = vmatmul.mubr.f32.gmra.mrb[0].mxu0 %v4846
    %v4925 = vpop.f32.mrb[0].mxu0
    %v4926 = vadd.f32 0.0, %v4925
    %v4927 = vpop.f32.mrb[0].mxu0
    %4928 = vmatprep.mubr.f32.mxu0 0.0
    %4929 = vmatmul.mubr.f32.gmra.mrb[0].mxu0 %v4849
    %v4930 = vpop.f32.mrb[0].mxu0
    %v4931 = vadd.f32 0.0, %v4930
    %v4932 = vpop.f32.mrb[0].mxu0
    %4933 = vmatprep.mubr.f32.mxu0 0.0
    %4934 = vmatmul.mubr.f32.gmra.mrb[0].mxu0 %v4852
    %v4935 = vpop.f32.mrb[0].mxu0
    %v4936 = vadd.f32 0.0, %v4935
    %v4937 = vpop.f32.mrb[0].mxu0
    %4938 = vdwg.mxu0
    %v4939 = vmul.f32 %v3944, %v3985
    %v4940 = vmul.f32 %v3945, %v3986
    %v4941 = vmul.f32 %v3946, %v3987
    %v4942 = vmul.f32 %v3947, %v3988
    %v4943 = vmul.f32 %v3948, %v3989
    %v4944 = vmul.f32 %v3949, %v3990
    %v4945 = vmul.f32 %v3950, %v3991
    %v4946 = vmul.f32 %v3951, %v3992
    %v4947 = vsel %vm154, %v4939, 0.0
    %4948 = vadd.xlane.f32.xlu0 %v4947
    %v4949 = vpop.xlane.xlu0 %4948
    %v4950 = vsel %vm154, %v4940, 0.0
    %4951 = vadd.xlane.f32.xlu0 %v4950
    %v4952 = vpop.xlane.xlu0 %4951
    %v4953 = vsel %vm154, %v4941, 0.0
    %4954 = vadd.xlane.f32.xlu0 %v4953
    %v4955 = vpop.xlane.xlu0 %4954
    %v4956 = vsel %vm154, %v4942, 0.0
    %4957 = vadd.xlane.f32.xlu0 %v4956
    %v4958 = vpop.xlane.xlu0 %4957
    %v4959 = vsel %vm154, %v4943, 0.0
    %4960 = vadd.xlane.f32.xlu0 %v4959
    %v4961 = vpop.xlane.xlu0 %4960
    %v4962 = vsel %vm154, %v4944, 0.0
    %4963 = vadd.xlane.f32.xlu0 %v4962
    %v4964 = vpop.xlane.xlu0 %4963
    %v4965 = vsel %vm154, %v4945, 0.0
    %4966 = vadd.xlane.f32.xlu0 %v4965
    %v4967 = vpop.xlane.xlu0 %4966
    %v4968 = vsel %vm154, %v4946, 0.0
    %4969 = vadd.xlane.f32.xlu0 %v4968
    %v4970 = vpop.xlane.xlu0 %4969
    %v4979 = vlaneseq
    %v4980 = vshrl.u32 %v4979, 7
    %v4981 = vsub.s32 %v1313, %v4980
    %v4982 = vrot.slane %v4949, %v4981
    %v4983 = vlaneseq
    %v4984 = vshrl.u32 %v4983, 7
    %v4985 = vsub.s32 %v1318, %v4984
    %v4986 = vrot.slane %v4952, %v4985
    %v4987 = vsel %vm1323, %v4986, %v4982
    %v4988 = vlaneseq
    %v4989 = vshrl.u32 %v4988, 7
    %v4990 = vsub.s32 %v1325, %v4989
    %v4991 = vrot.slane %v4955, %v4990
    %v4992 = vsel %vm1330, %v4991, %v4987
    %v4993 = vlaneseq
    %v4994 = vshrl.u32 %v4993, 7
    %v4995 = vsub.s32 %v1332, %v4994
    %v4996 = vrot.slane %v4958, %v4995
    %v4997 = vsel %vm1337, %v4996, %v4992
    %v4998 = vlaneseq
    %v4999 = vshrl.u32 %v4998, 7
    %v5000 = vsub.s32 %v1313, %v4999
    %v5001 = vrot.slane %v4961, %v5000
    %v5002 = vlaneseq
    %v5003 = vshrl.u32 %v5002, 7
    %v5004 = vsub.s32 %v1318, %v5003
    %v5005 = vrot.slane %v4964, %v5004
    %v5006 = vsel %vm1323, %v5005, %v5001
    %v5007 = vlaneseq
    %v5008 = vshrl.u32 %v5007, 7
    %v5009 = vsub.s32 %v1325, %v5008
    %v5010 = vrot.slane %v4967, %v5009
    %v5011 = vsel %vm1330, %v5010, %v5006
    %v5012 = vlaneseq
    %v5013 = vshrl.u32 %v5012, 7
    %v5014 = vsub.s32 %v1332, %v5013
    %v5015 = vrot.slane %v4970, %v5014
    %v5016 = vsel %vm1337, %v5015, %v5011
    %v5017 = vsel %vm1358, %v5016, %v4997
    %v5019 = vsel %vm235, %v5017, 0.0
    %5020 = vadd.xlane.f32.xlu0 %v5019
    %v5021 = vpop.xlane.xlu0 %5020
    %v5022 = vmul.f32 %v5021, 0.5
    %v5023 = vsub.f32 %v3905, %v5022
    %v5024 = vmul.f32 %v4072, %v3985
    %v5025 = vmul.f32 %v4077, %v3986
    %v5026 = vmul.f32 %v4082, %v3987
    %v5027 = vmul.f32 %v4087, %v3988
    %v5028 = vmul.f32 %v4169, %v3989
    %v5029 = vmul.f32 %v4174, %v3990
    %v5030 = vmul.f32 %v4179, %v3991
    %v5031 = vmul.f32 %v4184, %v3992
    %v5032 = vsel %vm154, %v5024, 0.0
    %5033 = vadd.xlane.f32.xlu0 %v5032
    %v5034 = vpop.xlane.xlu0 %5033
    %v5035 = vsel %vm154, %v5025, 0.0
    %5036 = vadd.xlane.f32.xlu0 %v5035
    %v5037 = vpop.xlane.xlu0 %5036
    %v5038 = vsel %vm154, %v5026, 0.0
    %5039 = vadd.xlane.f32.xlu0 %v5038
    %v5040 = vpop.xlane.xlu0 %5039
    %v5041 = vsel %vm154, %v5027, 0.0
    %5042 = vadd.xlane.f32.xlu0 %v5041
    %v5043 = vpop.xlane.xlu0 %5042
    %v5044 = vsel %vm154, %v5028, 0.0
    %5045 = vadd.xlane.f32.xlu0 %v5044
    %v5046 = vpop.xlane.xlu0 %5045
    %v5047 = vsel %vm154, %v5029, 0.0
    %5048 = vadd.xlane.f32.xlu0 %v5047
    %v5049 = vpop.xlane.xlu0 %5048
    %v5050 = vsel %vm154, %v5030, 0.0
    %5051 = vadd.xlane.f32.xlu0 %v5050
    %v5052 = vpop.xlane.xlu0 %5051
    %v5053 = vsel %vm154, %v5031, 0.0
    %5054 = vadd.xlane.f32.xlu0 %v5053
    %v5055 = vpop.xlane.xlu0 %5054
    %v5064 = vlaneseq
    %v5065 = vshrl.u32 %v5064, 7
    %v5066 = vsub.s32 %v1313, %v5065
    %v5067 = vrot.slane %v5034, %v5066
    %v5068 = vlaneseq
    %v5069 = vshrl.u32 %v5068, 7
    %v5070 = vsub.s32 %v1318, %v5069
    %v5071 = vrot.slane %v5037, %v5070
    %v5072 = vsel %vm1323, %v5071, %v5067
    %v5073 = vlaneseq
    %v5074 = vshrl.u32 %v5073, 7
    %v5075 = vsub.s32 %v1325, %v5074
    %v5076 = vrot.slane %v5040, %v5075
    %v5077 = vsel %vm1330, %v5076, %v5072
    %v5078 = vlaneseq
    %v5079 = vshrl.u32 %v5078, 7
    %v5080 = vsub.s32 %v1332, %v5079
    %v5081 = vrot.slane %v5043, %v5080
    %v5082 = vsel %vm1337, %v5081, %v5077
    %v5083 = vlaneseq
    %v5084 = vshrl.u32 %v5083, 7
    %v5085 = vsub.s32 %v1313, %v5084
    %v5086 = vrot.slane %v5046, %v5085
    %v5087 = vlaneseq
    %v5088 = vshrl.u32 %v5087, 7
    %v5089 = vsub.s32 %v1318, %v5088
    %v5090 = vrot.slane %v5049, %v5089
    %v5091 = vsel %vm1323, %v5090, %v5086
    %v5092 = vlaneseq
    %v5093 = vshrl.u32 %v5092, 7
    %v5094 = vsub.s32 %v1325, %v5093
    %v5095 = vrot.slane %v5052, %v5094
    %v5096 = vsel %vm1330, %v5095, %v5091
    %v5097 = vlaneseq
    %v5098 = vshrl.u32 %v5097, 7
    %v5099 = vsub.s32 %v1332, %v5098
    %v5100 = vrot.slane %v5055, %v5099
    %v5101 = vsel %vm1337, %v5100, %v5096
    %v5102 = vsel %vm1358, %v5101, %v5082
    %v5104 = vsel %vm235, %v5102, 0.0
    %5105 = vadd.xlane.f32.xlu0 %v5104
    %v5106 = vpop.xlane.xlu0 %5105
    %v5107 = vmul.f32 %v5106, 0.33333334
    %v5108 = vadd.f32 %v5023, %v5107
    %v5109 = vmul.f32 %v4266, %v3985
    %v5110 = vmul.f32 %v4271, %v3986
    %v5111 = vmul.f32 %v4276, %v3987
    %v5112 = vmul.f32 %v4281, %v3988
    %v5113 = vmul.f32 %v4363, %v3989
    %v5114 = vmul.f32 %v4368, %v3990
    %v5115 = vmul.f32 %v4373, %v3991
    %v5116 = vmul.f32 %v4378, %v3992
    %v5117 = vsel %vm154, %v5109, 0.0
    %5118 = vadd.xlane.f32.xlu0 %v5117
    %v5119 = vpop.xlane.xlu0 %5118
    %v5120 = vsel %vm154, %v5110, 0.0
    %5121 = vadd.xlane.f32.xlu0 %v5120
    %v5122 = vpop.xlane.xlu0 %5121
    %v5123 = vsel %vm154, %v5111, 0.0
    %5124 = vadd.xlane.f32.xlu0 %v5123
    %v5125 = vpop.xlane.xlu0 %5124
    %v5126 = vsel %vm154, %v5112, 0.0
    %5127 = vadd.xlane.f32.xlu0 %v5126
    %v5128 = vpop.xlane.xlu0 %5127
    %v5129 = vsel %vm154, %v5113, 0.0
    %5130 = vadd.xlane.f32.xlu0 %v5129
    %v5131 = vpop.xlane.xlu0 %5130
    %v5132 = vsel %vm154, %v5114, 0.0
    %5133 = vadd.xlane.f32.xlu0 %v5132
    %v5134 = vpop.xlane.xlu0 %5133
    %v5135 = vsel %vm154, %v5115, 0.0
    %5136 = vadd.xlane.f32.xlu0 %v5135
    %v5137 = vpop.xlane.xlu0 %5136
    %v5138 = vsel %vm154, %v5116, 0.0
    %5139 = vadd.xlane.f32.xlu0 %v5138
    %v5140 = vpop.xlane.xlu0 %5139
    %v5149 = vlaneseq
    %v5150 = vshrl.u32 %v5149, 7
    %v5151 = vsub.s32 %v1313, %v5150
    %v5152 = vrot.slane %v5119, %v5151
    %v5153 = vlaneseq
    %v5154 = vshrl.u32 %v5153, 7
    %v5155 = vsub.s32 %v1318, %v5154
    %v5156 = vrot.slane %v5122, %v5155
    %v5157 = vsel %vm1323, %v5156, %v5152
    %v5158 = vlaneseq
    %v5159 = vshrl.u32 %v5158, 7
    %v5160 = vsub.s32 %v1325, %v5159
    %v5161 = vrot.slane %v5125, %v5160
    %v5162 = vsel %vm1330, %v5161, %v5157
    %v5163 = vlaneseq
    %v5164 = vshrl.u32 %v5163, 7
    %v5165 = vsub.s32 %v1332, %v5164
    %v5166 = vrot.slane %v5128, %v5165
    %v5167 = vsel %vm1337, %v5166, %v5162
    %v5168 = vlaneseq
    %v5169 = vshrl.u32 %v5168, 7
    %v5170 = vsub.s32 %v1313, %v5169
    %v5171 = vrot.slane %v5131, %v5170
    %v5172 = vlaneseq
    %v5173 = vshrl.u32 %v5172, 7
    %v5174 = vsub.s32 %v1318, %v5173
    %v5175 = vrot.slane %v5134, %v5174
    %v5176 = vsel %vm1323, %v5175, %v5171
    %v5177 = vlaneseq
    %v5178 = vshrl.u32 %v5177, 7
    %v5179 = vsub.s32 %v1325, %v5178
    %v5180 = vrot.slane %v5137, %v5179
    %v5181 = vsel %vm1330, %v5180, %v5176
    %v5182 = vlaneseq
    %v5183 = vshrl.u32 %v5182, 7
    %v5184 = vsub.s32 %v1332, %v5183
    %v5185 = vrot.slane %v5140, %v5184
    %v5186 = vsel %vm1337, %v5185, %v5181
    %v5187 = vsel %vm1358, %v5186, %v5167
    %v5189 = vsel %vm235, %v5187, 0.0
    %5190 = vadd.xlane.f32.xlu0 %v5189
    %v5191 = vpop.xlane.xlu0 %5190
    %v5192 = vmul.f32 %v5191, 0.25
    %v5193 = vsub.f32 %v5108, %v5192
    %v5194 = vmul.f32 %v4448, %v3985
    %v5195 = vmul.f32 %v4453, %v3986
    %v5196 = vmul.f32 %v4458, %v3987
    %v5197 = vmul.f32 %v4463, %v3988
    %v5198 = vmul.f32 %v4533, %v3989
    %v5199 = vmul.f32 %v4538, %v3990
    %v5200 = vmul.f32 %v4543, %v3991
    %v5201 = vmul.f32 %v4548, %v3992
    %v5202 = vsel %vm154, %v5194, 0.0
    %5203 = vadd.xlane.f32.xlu0 %v5202
    %v5204 = vpop.xlane.xlu0 %5203
    %v5205 = vsel %vm154, %v5195, 0.0
    %5206 = vadd.xlane.f32.xlu0 %v5205
    %v5207 = vpop.xlane.xlu0 %5206
    %v5208 = vsel %vm154, %v5196, 0.0
    %5209 = vadd.xlane.f32.xlu0 %v5208
    %v5210 = vpop.xlane.xlu0 %5209
    %v5211 = vsel %vm154, %v5197, 0.0
    %5212 = vadd.xlane.f32.xlu0 %v5211
    %v5213 = vpop.xlane.xlu0 %5212
    %v5214 = vsel %vm154, %v5198, 0.0
    %5215 = vadd.xlane.f32.xlu0 %v5214
    %v5216 = vpop.xlane.xlu0 %5215
    %v5217 = vsel %vm154, %v5199, 0.0
    %5218 = vadd.xlane.f32.xlu0 %v5217
    %v5219 = vpop.xlane.xlu0 %5218
    %v5220 = vsel %vm154, %v5200, 0.0
    %5221 = vadd.xlane.f32.xlu0 %v5220
    %v5222 = vpop.xlane.xlu0 %5221
    %v5223 = vsel %vm154, %v5201, 0.0
    %5224 = vadd.xlane.f32.xlu0 %v5223
    %v5225 = vpop.xlane.xlu0 %5224
    %v5234 = vlaneseq
    %v5235 = vshrl.u32 %v5234, 7
    %v5236 = vsub.s32 %v1313, %v5235
    %v5237 = vrot.slane %v5204, %v5236
    %v5238 = vlaneseq
    %v5239 = vshrl.u32 %v5238, 7
    %v5240 = vsub.s32 %v1318, %v5239
    %v5241 = vrot.slane %v5207, %v5240
    %v5242 = vsel %vm1323, %v5241, %v5237
    %v5243 = vlaneseq
    %v5244 = vshrl.u32 %v5243, 7
    %v5245 = vsub.s32 %v1325, %v5244
    %v5246 = vrot.slane %v5210, %v5245
    %v5247 = vsel %vm1330, %v5246, %v5242
    %v5248 = vlaneseq
    %v5249 = vshrl.u32 %v5248, 7
    %v5250 = vsub.s32 %v1332, %v5249
    %v5251 = vrot.slane %v5213, %v5250
    %v5252 = vsel %vm1337, %v5251, %v5247
    %v5253 = vlaneseq
    %v5254 = vshrl.u32 %v5253, 7
    %v5255 = vsub.s32 %v1313, %v5254
    %v5256 = vrot.slane %v5216, %v5255
    %v5257 = vlaneseq
    %v5258 = vshrl.u32 %v5257, 7
    %v5259 = vsub.s32 %v1318, %v5258
    %v5260 = vrot.slane %v5219, %v5259
    %v5261 = vsel %vm1323, %v5260, %v5256
    %v5262 = vlaneseq
    %v5263 = vshrl.u32 %v5262, 7
    %v5264 = vsub.s32 %v1325, %v5263
    %v5265 = vrot.slane %v5222, %v5264
    %v5266 = vsel %vm1330, %v5265, %v5261
    %v5267 = vlaneseq
    %v5268 = vshrl.u32 %v5267, 7
    %v5269 = vsub.s32 %v1332, %v5268
    %v5270 = vrot.slane %v5225, %v5269
    %v5271 = vsel %vm1337, %v5270, %v5266
    %v5272 = vsel %vm1358, %v5271, %v5252
    %v5274 = vsel %vm235, %v5272, 0.0
    %5275 = vadd.xlane.f32.xlu0 %v5274
    %v5276 = vpop.xlane.xlu0 %5275
    %v5277 = vmul.f32 %v5276, 0.2
    %v5278 = vadd.f32 %v5193, %v5277
    %v5279 = vmul.f32 %v4448, %v4630
    %v5280 = vmul.f32 %v4453, %v4635
    %v5281 = vmul.f32 %v4458, %v4640
    %v5282 = vmul.f32 %v4463, %v4645
    %v5283 = vmul.f32 %v4533, %v4727
    %v5284 = vmul.f32 %v4538, %v4732
    %v5285 = vmul.f32 %v4543, %v4737
    %v5286 = vmul.f32 %v4548, %v4742
    %v5287 = vsel %vm154, %v5279, 0.0
    %5288 = vadd.xlane.f32.xlu0 %v5287
    %v5289 = vpop.xlane.xlu0 %5288
    %v5290 = vsel %vm154, %v5280, 0.0
    %5291 = vadd.xlane.f32.xlu0 %v5290
    %v5292 = vpop.xlane.xlu0 %5291
    %v5293 = vsel %vm154, %v5281, 0.0
    %5294 = vadd.xlane.f32.xlu0 %v5293
    %v5295 = vpop.xlane.xlu0 %5294
    %v5296 = vsel %vm154, %v5282, 0.0
    %5297 = vadd.xlane.f32.xlu0 %v5296
    %v5298 = vpop.xlane.xlu0 %5297
    %v5299 = vsel %vm154, %v5283, 0.0
    %5300 = vadd.xlane.f32.xlu0 %v5299
    %v5301 = vpop.xlane.xlu0 %5300
    %v5302 = vsel %vm154, %v5284, 0.0
    %5303 = vadd.xlane.f32.xlu0 %v5302
    %v5304 = vpop.xlane.xlu0 %5303
    %v5305 = vsel %vm154, %v5285, 0.0
    %5306 = vadd.xlane.f32.xlu0 %v5305
    %v5307 = vpop.xlane.xlu0 %5306
    %v5308 = vsel %vm154, %v5286, 0.0
    %5309 = vadd.xlane.f32.xlu0 %v5308
    %v5310 = vpop.xlane.xlu0 %5309
    %v5319 = vlaneseq
    %v5320 = vshrl.u32 %v5319, 7
    %v5321 = vsub.s32 %v1313, %v5320
    %v5322 = vrot.slane %v5289, %v5321
    %v5323 = vlaneseq
    %v5324 = vshrl.u32 %v5323, 7
    %v5325 = vsub.s32 %v1318, %v5324
    %v5326 = vrot.slane %v5292, %v5325
    %v5327 = vsel %vm1323, %v5326, %v5322
    %v5328 = vlaneseq
    %v5329 = vshrl.u32 %v5328, 7
    %v5330 = vsub.s32 %v1325, %v5329
    %v5331 = vrot.slane %v5295, %v5330
    %v5332 = vsel %vm1330, %v5331, %v5327
    %v5333 = vlaneseq
    %v5334 = vshrl.u32 %v5333, 7
    %v5335 = vsub.s32 %v1332, %v5334
    %v5336 = vrot.slane %v5298, %v5335
    %v5337 = vsel %vm1337, %v5336, %v5332
    %v5338 = vlaneseq
    %v5339 = vshrl.u32 %v5338, 7
    %v5340 = vsub.s32 %v1313, %v5339
    %v5341 = vrot.slane %v5301, %v5340
    %v5342 = vlaneseq
    %v5343 = vshrl.u32 %v5342, 7
    %v5344 = vsub.s32 %v1318, %v5343
    %v5345 = vrot.slane %v5304, %v5344
    %v5346 = vsel %vm1323, %v5345, %v5341
    %v5347 = vlaneseq
    %v5348 = vshrl.u32 %v5347, 7
    %v5349 = vsub.s32 %v1325, %v5348
    %v5350 = vrot.slane %v5307, %v5349
    %v5351 = vsel %vm1330, %v5350, %v5346
    %v5352 = vlaneseq
    %v5353 = vshrl.u32 %v5352, 7
    %v5354 = vsub.s32 %v1332, %v5353
    %v5355 = vrot.slane %v5310, %v5354
    %v5356 = vsel %vm1337, %v5355, %v5351
    %v5357 = vsel %vm1358, %v5356, %v5337
    %v5359 = vsel %vm235, %v5357, 0.0
    %5360 = vadd.xlane.f32.xlu0 %v5359
    %v5361 = vpop.xlane.xlu0 %5360
    %v5362 = vmul.f32 %v5361, 0.16666667
    %v5363 = vsub.f32 %v5278, %v5362
    %v5364 = vmul.f32 %v4266, %v4824
    %v5365 = vmul.f32 %v4271, %v4829
    %v5366 = vmul.f32 %v4276, %v4834
    %v5367 = vmul.f32 %v4281, %v4839
    %v5368 = vmul.f32 %v4363, %v4921
    %v5369 = vmul.f32 %v4368, %v4926
    %v5370 = vmul.f32 %v4373, %v4931
    %v5371 = vmul.f32 %v4378, %v4936
    %v5372 = vsel %vm154, %v5364, 0.0
    %5373 = vadd.xlane.f32.xlu0 %v5372
    %v5374 = vpop.xlane.xlu0 %5373
    %v5375 = vsel %vm154, %v5365, 0.0
    %5376 = vadd.xlane.f32.xlu0 %v5375
    %v5377 = vpop.xlane.xlu0 %5376
    %v5378 = vsel %vm154, %v5366, 0.0
    %5379 = vadd.xlane.f32.xlu0 %v5378
    %v5380 = vpop.xlane.xlu0 %5379
    %v5381 = vsel %vm154, %v5367, 0.0
    %5382 = vadd.xlane.f32.xlu0 %v5381
    %v5383 = vpop.xlane.xlu0 %5382
    %v5384 = vsel %vm154, %v5368, 0.0
    %5385 = vadd.xlane.f32.xlu0 %v5384
    %v5386 = vpop.xlane.xlu0 %5385
    %v5387 = vsel %vm154, %v5369, 0.0
    %5388 = vadd.xlane.f32.xlu0 %v5387
    %v5389 = vpop.xlane.xlu0 %5388
    %v5390 = vsel %vm154, %v5370, 0.0
    %5391 = vadd.xlane.f32.xlu0 %v5390
    %v5392 = vpop.xlane.xlu0 %5391
    %v5393 = vsel %vm154, %v5371, 0.0
    %5394 = vadd.xlane.f32.xlu0 %v5393
    %v5395 = vpop.xlane.xlu0 %5394
    %v5404 = vlaneseq
    %v5405 = vshrl.u32 %v5404, 7
    %v5406 = vsub.s32 %v1313, %v5405
    %v5407 = vrot.slane %v5374, %v5406
    %v5408 = vlaneseq
    %v5409 = vshrl.u32 %v5408, 7
    %v5410 = vsub.s32 %v1318, %v5409
    %v5411 = vrot.slane %v5377, %v5410
    %v5412 = vsel %vm1323, %v5411, %v5407
    %v5413 = vlaneseq
    %v5414 = vshrl.u32 %v5413, 7
    %v5415 = vsub.s32 %v1325, %v5414
    %v5416 = vrot.slane %v5380, %v5415
    %v5417 = vsel %vm1330, %v5416, %v5412
    %v5418 = vlaneseq
    %v5419 = vshrl.u32 %v5418, 7
    %v5420 = vsub.s32 %v1332, %v5419
    %v5421 = vrot.slane %v5383, %v5420
    %v5422 = vsel %vm1337, %v5421, %v5417
    %v5423 = vlaneseq
    %v5424 = vshrl.u32 %v5423, 7
    %v5425 = vsub.s32 %v1313, %v5424
    %v5426 = vrot.slane %v5386, %v5425
    %v5427 = vlaneseq
    %v5428 = vshrl.u32 %v5427, 7
    %v5429 = vsub.s32 %v1318, %v5428
    %v5430 = vrot.slane %v5389, %v5429
    %v5431 = vsel %vm1323, %v5430, %v5426
    %v5432 = vlaneseq
    %v5433 = vshrl.u32 %v5432, 7
    %v5434 = vsub.s32 %v1325, %v5433
    %v5435 = vrot.slane %v5392, %v5434
    %v5436 = vsel %vm1330, %v5435, %v5431
    %v5437 = vlaneseq
    %v5438 = vshrl.u32 %v5437, 7
    %v5439 = vsub.s32 %v1332, %v5438
    %v5440 = vrot.slane %v5395, %v5439
    %v5441 = vsel %vm1337, %v5440, %v5436
    %v5442 = vsel %vm1358, %v5441, %v5422
    %v5444 = vsel %vm235, %v5442, 0.0
    %5445 = vadd.xlane.f32.xlu0 %v5444
    %v5446 = vpop.xlane.xlu0 %5445
    %v5447 = vmul.f32 %v5446, 0.14285715
    %v5448 = vadd.f32 %v5363, %v5447
    %v5449 = vmul.f32 %v4448, %v4824
    %v5450 = vmul.f32 %v4453, %v4829
    %v5451 = vmul.f32 %v4458, %v4834
    %v5452 = vmul.f32 %v4463, %v4839
    %v5453 = vmul.f32 %v4533, %v4921
    %v5454 = vmul.f32 %v4538, %v4926
    %v5455 = vmul.f32 %v4543, %v4931
    %v5456 = vmul.f32 %v4548, %v4936
    %v5457 = vsel %vm154, %v5449, 0.0
    %5458 = vadd.xlane.f32.xlu0 %v5457
    %v5459 = vpop.xlane.xlu0 %5458
    %v5460 = vsel %vm154, %v5450, 0.0
    %5461 = vadd.xlane.f32.xlu0 %v5460
    %v5462 = vpop.xlane.xlu0 %5461
    %v5463 = vsel %vm154, %v5451, 0.0
    %5464 = vadd.xlane.f32.xlu0 %v5463
    %v5465 = vpop.xlane.xlu0 %5464
    %v5466 = vsel %vm154, %v5452, 0.0
    %5467 = vadd.xlane.f32.xlu0 %v5466
    %v5468 = vpop.xlane.xlu0 %5467
    %v5469 = vsel %vm154, %v5453, 0.0
    %5470 = vadd.xlane.f32.xlu0 %v5469
    %v5471 = vpop.xlane.xlu0 %5470
    %v5472 = vsel %vm154, %v5454, 0.0
    %5473 = vadd.xlane.f32.xlu0 %v5472
    %v5474 = vpop.xlane.xlu0 %5473
    %v5475 = vsel %vm154, %v5455, 0.0
    %5476 = vadd.xlane.f32.xlu0 %v5475
    %v5477 = vpop.xlane.xlu0 %5476
    %v5478 = vsel %vm154, %v5456, 0.0
    %5479 = vadd.xlane.f32.xlu0 %v5478
    %v5480 = vpop.xlane.xlu0 %5479
    %v5489 = vlaneseq
    %v5490 = vshrl.u32 %v5489, 7
    %v5491 = vsub.s32 %v1313, %v5490
    %v5492 = vrot.slane %v5459, %v5491
    %v5493 = vlaneseq
    %v5494 = vshrl.u32 %v5493, 7
    %v5495 = vsub.s32 %v1318, %v5494
    %v5496 = vrot.slane %v5462, %v5495
    %v5497 = vsel %vm1323, %v5496, %v5492
    %v5498 = vlaneseq
    %v5499 = vshrl.u32 %v5498, 7
    %v5500 = vsub.s32 %v1325, %v5499
    %v5501 = vrot.slane %v5465, %v5500
    %v5502 = vsel %vm1330, %v5501, %v5497
    %v5503 = vlaneseq
    %v5504 = vshrl.u32 %v5503, 7
    %v5505 = vsub.s32 %v1332, %v5504
    %v5506 = vrot.slane %v5468, %v5505
    %v5507 = vsel %vm1337, %v5506, %v5502
    %v5508 = vlaneseq
    %v5509 = vshrl.u32 %v5508, 7
    %v5510 = vsub.s32 %v1313, %v5509
    %v5511 = vrot.slane %v5471, %v5510
    %v5512 = vlaneseq
    %v5513 = vshrl.u32 %v5512, 7
    %v5514 = vsub.s32 %v1318, %v5513
    %v5515 = vrot.slane %v5474, %v5514
    %v5516 = vsel %vm1323, %v5515, %v5511
    %v5517 = vlaneseq
    %v5518 = vshrl.u32 %v5517, 7
    %v5519 = vsub.s32 %v1325, %v5518
    %v5520 = vrot.slane %v5477, %v5519
    %v5521 = vsel %vm1330, %v5520, %v5516
    %v5522 = vlaneseq
    %v5523 = vshrl.u32 %v5522, 7
    %v5524 = vsub.s32 %v1332, %v5523
    %v5525 = vrot.slane %v5480, %v5524
    %v5526 = vsel %vm1337, %v5525, %v5521
    %v5527 = vsel %vm1358, %v5526, %v5507
    %v5529 = vsel %vm235, %v5527, 0.0
    %5530 = vadd.xlane.f32.xlu0 %v5529
    %v5531 = vpop.xlane.xlu0 %5530
    %v5532 = vmul.f32 %v5531, 0.125
    %v5533 = vsub.f32 %v5448, %v5532
    %v5534 = vadd.f32 %v3705, %v5533
    %v5535 = vadd.f32 %v3706, %v3893
    %v5536 = vmul.f32 %v5535, %v5535
    %v5537 = vadd.f32 %v5536, 1.837877
    %vm5538 = vcmask 123904
    %v5539 = vsel %vm5538, %v5537, 0.0
    %5540 = vadd.xlane.f32.xlu0 %v5539
    %v5541 = vpop.xlane.xlu0 %5540
    %v5542 = vmul.f32 %v5541, -0.5
    %v5543 = vadd.f32 %v5534, %v5542
    %v5544 = vmul.f32 %v5543, 0.0625
    %vm5545 = vcmask 1024
    %5546 = vst.msk [vmem:[%s8] sm:$0x3] %vm5545, %v5544
    // Predicated region
    $region38: #{tpu_custom_call.1} parent=1 // pred_check
      _
    $region39: #{tpu_custom_call.1} parent=1 // pred_check_branch
      %5548 = sbr.rel (0) target = $region41
    $region40: #{tpu_custom_call.1} parent=1 // pred_region
      _
    $region41: #{tpu_custom_call.1} parent=1 // pred_fallthru
      _
    // Predicated region
    $region42: #{tpu_custom_call.1} parent=1 // pred_check
      _
    $region43: #{tpu_custom_call.1} parent=1 // pred_check_branch
      %5550 = sbr.rel (0) target = $region45
    $region44: #{tpu_custom_call.1} parent=1 // pred_region
      _
    $region45: #{tpu_custom_call.1} parent=1 // pred_fallthru
      _
    %5551 = vsyncpa [#allocation3], 1

</llo_original>
